<compile_context>
chip_gen: v7x
topology: tpu7x:2x2x1
jax: 0.10.0
libtpu: 0.0.40
codegen_flags: <defaults>
</compile_context>

<pallas_src>
import jax
import jax.numpy as jnp
from jax import lax
from jax.experimental import pallas as pl
from jax.experimental.pallas import tpu as pltpu

# ---------------- configuration (consistent with the module's shape constraints) ----
B        = 8          # batch
IN_F     = 1          # args.model['in_feature']  (torch.bmm forces 1)
OUT_F    = 1          # args.model['out_feature'] (must equal IN_F for the ODE)
LATENT   = 8          # args.model['latent_dim']
HID      = IN_F       # GalerkinDE: hidden_dim = args.model['in_feature']
NH       = 6          # n_harmonics (har_mode=4 => n_range=[0,1,1,1,1,2])
NEIG     = 2          # n_eig
COEFFS   = (IN_F + 1) * OUT_F * NH * NEIG   # CoeffDecoder output size
NT       = 8          # number of time points
RK_STEPS = 8          # fixed RK4 substeps per [t_i, t_{i+1}] interval


# ---------------- Pallas kernel: affine-composed RK4, single invocation -------------
def _galerkin_traj_kernel(s_ref, dt_ref, coef_ref, x0_ref, out_ref, a_sc, c_sc):
    """All time intervals integrated at once via per-interval affine maps.

    s_ref    : VMEM (2*RK+1, NI, B)  sample points s_{i,j} = t_i + j*dt_i/2
    dt_ref   : VMEM (NI, B)          per-interval RK step size (broadcast over batch)
    coef_ref : VMEM (10, NI, B)      harmonic-grouped CoeffDecoder output, tiled over
                                     intervals; rows 0..4 weight / 5..9 bias, each
                                     ordered [const, cos(s), cos(2s), sin(s), sin(2s)]
    x0_ref   : VMEM (1, B)           initial ODE state
    out_ref  : VMEM (NT, B)          trajectory (wrapper restores the feature dim)
    a_sc,c_sc: VMEM (NI, B)          scratch for the composed per-interval affine maps
    """
    ni = out_ref.shape[0] - 1
    rk = (s_ref.shape[0] - 1) // 2

    # grouped Fourier coefficients, loaded once (each (NI, B))
    a0w = coef_ref[0]; a1w = coef_ref[1]; a2w = coef_ref[2]
    b1w = coef_ref[3]; b2w = coef_ref[4]
    a0b = coef_ref[5]; a1b = coef_ref[6]; a2b = coef_ref[7]
    b1b = coef_ref[8]; b2b = coef_ref[9]

    def weight_bias(j):
        # w(s), b(s) at sample row j for ALL intervals & batch elements at once.
        s = s_ref[j]                         # (NI, B)
        c1 = jnp.cos(s)                      # 2 EUP transcendentals per row ...
        s1 = jnp.sin(s)
        c2 = 2.0 * c1 * c1 - 1.0             # ... double-angle terms on the VPU
        s2 = 2.0 * s1 * c1
        w = a0w + c1 * a1w + c2 * a2w + s1 * b1w + s2 * b2w
        b = a0b + c1 * a1b + c2 * a2b + s1 * b1b + s2 * b2b
        return w, b

    # dt-derived splats hoisted once (JAX does not CSE broadcast_in_dim)
    h  = dt_ref[...]                         # (NI, B)
    hh = 0.5 * h
    h6 = h * (1.0 / 6.0)

    # Compose the RK4 substeps into one affine map per interval:
    #   x_{end} = A * x_{start} + C     (alpha/beta are x-independent per substep)
    A = jnp.ones_like(h)
    C = jnp.zeros_like(h)
    w_a, b_a = weight_bias(0)
    for k in range(rk):                      # static unroll; alpha/beta independent per k
        w_m, b_m = weight_bias(2 * k + 1)
        w_e, b_e = weight_bias(2 * k + 2)
        p1 = w_a;                      q1 = b_a
        p2 = w_m + w_m * (hh * p1);    q2 = w_m * (hh * q1) + b_m
        p3 = w_m + w_m * (hh * p2);    q3 = w_m * (hh * q2) + b_m
        p4 = w_e + w_e * (h * p3);     q4 = w_e * (h * q3) + b_e
        alpha = 1.0 + h6 * (p1 + 2.0 * p2 + 2.0 * p3 + p4)
        beta  = h6 * (q1 + 2.0 * q2 + 2.0 * q3 + q4)
        A = alpha * A
        C = alpha * C + beta
        w_a, b_a = w_e, b_e                  # substep-k end point == substep-(k+1) start

    a_sc[...] = A
    c_sc[...] = C

    # Short affine scan over intervals (the only remaining serial dependence),
    # fully unrolled; rows assembled in registers and stored as ONE slab.
    x = x0_ref[...]                          # (1, B)
    rows = [x]
    for i in range(ni):
        x = a_sc[i:i + 1, :] * x + c_sc[i:i + 1, :]
        rows.append(x)
    out_ref[...] = jnp.concatenate(rows, axis=0)   # single bulk (NT, B) store


def galerkin_de_trajectory(t, x0, z, params):
    """GalerkinDE.forward(t, x, latent_v) -> (NT, B, OUT_F) trajectory."""
    w1, b1, w2, b2, nrng = params
    nt = t.shape[0]
    bsz = x0.shape[0]
    ni = nt - 1
    nsamp = 2 * RK_STEPS + 1

    # torch.bmm(input(B,1,1), weight(B,1,1)) forces a scalar state; fail loudly otherwise.
    assert IN_F == 1 and OUT_F == 1 and x0.shape[1] == 1, (IN_F, OUT_F, x0.shape)

    # ---- CoeffDecoder hoisted out of the kernel (depends only on z) --------
    h = jnp.tanh(jnp.dot(z, w1, preferred_element_type=jnp.float32) + b1)   # (B, HID)
    c = jnp.dot(h, w2, preferred_element_type=jnp.float32) + b2             # (B, COEFFS)
    c = c.reshape(bsz, (IN_F + 1) * OUT_F, NEIG * NH)        # (B, 2, NEIG*NH)

    # ---- group Fourier coefficients by distinct harmonic (har_mode=4) ------
    # per segment: sum_h c_cos[h]*cos(n[h]*s) + c_sin[h]*sin(n[h]*s)
    #            = A0 + A1*cos(s) + A2*cos(2s) + B1*sin(s) + B2*sin(2s)
    n = nrng.reshape(-1).astype(c.dtype)                     # (NH,)
    cw = c[:, :, :NH]                                        # cos-side coeffs
    sw = c[:, :, NH:]                                        # sin-side coeffs
    m0 = (n == 0.0).astype(c.dtype)
    m1 = (n == 1.0).astype(c.dtype)
    m2 = (n == 2.0).astype(c.dtype)
    a0 = (cw * m0).sum(-1)          # constant (cos(0)=1; sin(0)=0 drops out)
    a1 = (cw * m1).sum(-1)          # * cos(s)
    a2 = (cw * m2).sum(-1)          # * cos(2s)
    s1 = (sw * m1).sum(-1)          # * sin(s)
    s2 = (sw * m2).sum(-1)          # * sin(2s)
    grouped = jnp.stack([a0, a1, a2, s1, s2], axis=0)        # (5, B, 2)
    coef = jnp.concatenate([grouped[:, :, 0],                # weight segment
                            grouped[:, :, 1]], axis=0)       # bias segment -> (10, B)
    coef_t = jnp.broadcast_to(coef[:, None, :],
                              (10, ni, bsz)).astype(jnp.float32)   # (10, NI, B)

    # ---- RK4 sample grid (x-independent): s_{i,j} = t_i + j*(dt_i/2) -------
    t = t.astype(jnp.float32)
    t0 = t[:-1]                                              # (NI,)
    dt = (t[1:] - t[:-1]) / jnp.float32(RK_STEPS)            # (NI,)
    j = jnp.arange(nsamp, dtype=jnp.float32)                 # (2*RK+1,)
    s_grid = t0[None, :] + j[:, None] * (0.5 * dt)[None, :]  # (2*RK+1, NI)
    s_grid = jnp.broadcast_to(s_grid[:, :, None], (nsamp, ni, bsz))
    dt_b = jnp.broadcast_to(dt[:, None], (ni, bsz))

    x0_row = x0[:, 0][None, :].astype(jnp.float32)           # (1, B)

    out = pl.pallas_call(
        _galerkin_traj_kernel,
        out_shape=jax.ShapeDtypeStruct((nt, bsz), jnp.float32),
        grid_spec=pltpu.PrefetchScalarGridSpec(
            num_scalar_prefetch=0,
            grid=(1,),
            in_specs=[
                pl.BlockSpec((nsamp, ni, bsz), lambda i: (0, 0, 0)),  # s grid
                pl.BlockSpec((ni, bsz), lambda i: (0, 0)),            # dt per interval
                pl.BlockSpec((10, ni, bsz), lambda i: (0, 0, 0)),     # grouped coeffs
                pl.BlockSpec((1, bsz), lambda i: (0, 0)),             # x0
            ],
            out_specs=pl.BlockSpec((nt, bsz), lambda i: (0, 0)),
            scratch_shapes=[pltpu.VMEM((ni, bsz), jnp.float32),
                            pltpu.VMEM((ni, bsz), jnp.float32)],
        ),
        compiler_params=pltpu.CompilerParams(dimension_semantics=("arbitrary",)),
    )(s_grid, dt_b, coef_t, x0_row)

    return out[:, :, None]                                   # (NT, B, OUT_F)


# ---------------- pure-JAX reference (unhoisted, per-harmonic combine, plain RK4) ----
def _field(s, x, z, w1, b1, w2, b2, nrng):
    """AugmentedGalerkin vector field, written exactly as the PyTorch module does."""
    h = jnp.tanh(jnp.dot(z, w1, preferred_element_type=jnp.float32) + b1)   # (B, HID)
    c = jnp.dot(h, w2, preferred_element_type=jnp.float32) + b2             # (B, COEFFS)

    cosb = jnp.cos(s * nrng)                         # (1, NH)
    sinb = jnp.sin(s * nrng)                         # (1, NH)
    combo = jnp.concatenate([cosb, sinb], axis=-1)   # (1, NEIG*NH)

    neh = NEIG * NH
    cols = []
    for g in range((IN_F + 1) * OUT_F):
        seg = c[:, g * neh:(g + 1) * neh]            # (B, NEIG*NH)
        cols.append(jnp.sum(seg * combo, axis=-1, keepdims=True))
    w = jnp.concatenate(cols, axis=-1)               # (B, (IN+1)*OUT)

    weight = w[:, :IN_F * OUT_F]                     # (B, OUT_F)
    bias = w[:, IN_F * OUT_F:]                       # (B, OUT_F)
    return x * weight + bias                         # (B, OUT_F)


def reference_trajectory(t, x0, z, params):
    w1, b1, w2, b2, nrng = params

    def interval(x, idx):
        t0 = t[idx - 1]
        t1 = t[idx]
        dt = (t1 - t0) / jnp.float32(RK_STEPS)

        def substep(k, x):
            s = t0 + dt * k.astype(jnp.float32)
            f = lambda ss, xx: _field(ss, xx, z, w1, b1, w2, b2, nrng)
            k1 = f(s, x)
            k2 = f(s + 0.5 * dt, x + 0.5 * dt * k1)
            k3 = f(s + 0.5 * dt, x + 0.5 * dt * k2)
            k4 = f(s + dt, x + dt * k3)
            return x + (dt / 6.0) * (k1 + 2.0 * k2 + 2.0 * k3 + k4)

        x = lax.fori_loop(0, RK_STEPS, substep, x)
        return x, x

    _, traj = lax.scan(interval, x0, jnp.arange(1, t.shape[0]))
    return jnp.concatenate([x0[None], traj], axis=0)


# ---------------- driver --------------------------------------------------------------
if __name__ == "__main__":
    key = jax.random.PRNGKey(0)
    ks = jax.random.split(key, 6)

    # module inputs: t, x (initial state), latent_v
    t = jnp.linspace(0.0, 1.0, NT).astype(jnp.float32)
    x0 = jax.random.normal(ks[0], (B, IN_F), dtype=jnp.float32)
    latent_v = jax.random.normal(ks[1], (B, LATENT), dtype=jnp.float32)

    # deterministic parameter init (CoeffDecoder fc1/fc2, stored as (in, out))
    w1 = jax.random.uniform(ks[2], (LATENT, HID), jnp.float32, -0.35, 0.35)
    b1 = jax.random.uniform(ks[3], (1, HID), jnp.float32, -0.35, 0.35)
    w2 = jax.random.uniform(ks[4], (HID, COEFFS), jnp.float32, -1.0, 1.0)
    b2 = jax.random.uniform(ks[5], (1, COEFFS), jnp.float32, -1.0, 1.0)
    # har_mode == 4  =>  n_range = [0, 1, 1, 1, 1, 2]
    nrng = jnp.array([[0.0, 1.0, 1.0, 1.0, 1.0, 2.0]], dtype=jnp.float32)
    params = (w1, b1, w2, b2, nrng)

    pred = galerkin_de_trajectory(t, x0, latent_v, params)
    pred = jax.block_until_ready(pred)

    ref = reference_trajectory(t, x0, latent_v, params)
    assert pred.shape == (NT, B, OUT_F), pred.shape
    # affine composition reassociates the RK4 arithmetic -> compare with tolerance
    assert jnp.allclose(pred, ref, rtol=1e-3, atol=1e-3), (pred, ref)

    print("KERNEL_OK")
</pallas_src>

<mosaic_0001>
module attributes {stable_mosaic.version = 11 : i64} {
  func.func @_galerkin_traj_kernel(%arg0: i32, %arg1: memref<17x7x8xf32, #tpu.memory_space<vmem>>, %arg2: memref<7x8xf32, #tpu.memory_space<vmem>>, %arg3: memref<10x7x8xf32, #tpu.memory_space<vmem>>, %arg4: memref<1x8xf32, #tpu.memory_space<vmem>>, %arg5: memref<8x8xf32, #tpu.memory_space<vmem>>, %arg6: memref<7x8xf32, #tpu.memory_space<vmem>>, %arg7: memref<7x8xf32, #tpu.memory_space<vmem>>) attributes {dimension_semantics = [#tpu.dimension_semantics<arbitrary>], iteration_bounds = array<i64: 1>, scalar_prefetch = 0 : i64, scratch_operands = 2 : i64, tpu.core_type = #tpu.core_type<tc>, window_params = [{pipeline_mode = #tpu.pipeline_mode<synchronous>, transform_indices = @transform_0, window_bounds = array<i64: 17, 7, 8>}, {pipeline_mode = #tpu.pipeline_mode<synchronous>, transform_indices = @transform_1, window_bounds = array<i64: 7, 8>}, {pipeline_mode = #tpu.pipeline_mode<synchronous>, transform_indices = @transform_2, window_bounds = array<i64: 10, 7, 8>}, {pipeline_mode = #tpu.pipeline_mode<synchronous>, transform_indices = @transform_3, window_bounds = array<i64: 1, 8>}, {pipeline_mode = #tpu.pipeline_mode<synchronous>, transform_indices = @transform_4, window_bounds = array<i64: 8, 8>}]} {
    %c0 = arith.constant 0 : index
    %c0_0 = arith.constant 0 : index
    %c0_1 = arith.constant 0 : index
    %0 = vector.load %arg3[%c0, %c0_0, %c0_1] : memref<10x7x8xf32, #tpu.memory_space<vmem>>, vector<1x7x8xf32>
    %1 = vector.shape_cast %0 : vector<1x7x8xf32> to vector<7x8xf32>
    %c1 = arith.constant 1 : index
    %c0_2 = arith.constant 0 : index
    %c0_3 = arith.constant 0 : index
    %2 = vector.load %arg3[%c1, %c0_2, %c0_3] : memref<10x7x8xf32, #tpu.memory_space<vmem>>, vector<1x7x8xf32>
    %3 = vector.shape_cast %2 : vector<1x7x8xf32> to vector<7x8xf32>
    %c2 = arith.constant 2 : index
    %c0_4 = arith.constant 0 : index
    %c0_5 = arith.constant 0 : index
    %4 = vector.load %arg3[%c2, %c0_4, %c0_5] : memref<10x7x8xf32, #tpu.memory_space<vmem>>, vector<1x7x8xf32>
    %5 = vector.shape_cast %4 : vector<1x7x8xf32> to vector<7x8xf32>
    %c3 = arith.constant 3 : index
    %c0_6 = arith.constant 0 : index
    %c0_7 = arith.constant 0 : index
    %6 = vector.load %arg3[%c3, %c0_6, %c0_7] : memref<10x7x8xf32, #tpu.memory_space<vmem>>, vector<1x7x8xf32>
    %7 = vector.shape_cast %6 : vector<1x7x8xf32> to vector<7x8xf32>
    %c4 = arith.constant 4 : index
    %c0_8 = arith.constant 0 : index
    %c0_9 = arith.constant 0 : index
    %8 = vector.load %arg3[%c4, %c0_8, %c0_9] : memref<10x7x8xf32, #tpu.memory_space<vmem>>, vector<1x7x8xf32>
    %9 = vector.shape_cast %8 : vector<1x7x8xf32> to vector<7x8xf32>
    %c5 = arith.constant 5 : index
    %c0_10 = arith.constant 0 : index
    %c0_11 = arith.constant 0 : index
    %10 = vector.load %arg3[%c5, %c0_10, %c0_11] : memref<10x7x8xf32, #tpu.memory_space<vmem>>, vector<1x7x8xf32>
    %11 = vector.shape_cast %10 : vector<1x7x8xf32> to vector<7x8xf32>
    %c6 = arith.constant 6 : index
    %c0_12 = arith.constant 0 : index
    %c0_13 = arith.constant 0 : index
    %12 = vector.load %arg3[%c6, %c0_12, %c0_13] : memref<10x7x8xf32, #tpu.memory_space<vmem>>, vector<1x7x8xf32>
    %13 = vector.shape_cast %12 : vector<1x7x8xf32> to vector<7x8xf32>
    %c7 = arith.constant 7 : index
    %c0_14 = arith.constant 0 : index
    %c0_15 = arith.constant 0 : index
    %14 = vector.load %arg3[%c7, %c0_14, %c0_15] : memref<10x7x8xf32, #tpu.memory_space<vmem>>, vector<1x7x8xf32>
    %15 = vector.shape_cast %14 : vector<1x7x8xf32> to vector<7x8xf32>
    %c8 = arith.constant 8 : index
    %c0_16 = arith.constant 0 : index
    %c0_17 = arith.constant 0 : index
    %16 = vector.load %arg3[%c8, %c0_16, %c0_17] : memref<10x7x8xf32, #tpu.memory_space<vmem>>, vector<1x7x8xf32>
    %17 = vector.shape_cast %16 : vector<1x7x8xf32> to vector<7x8xf32>
    %c9 = arith.constant 9 : index
    %c0_18 = arith.constant 0 : index
    %c0_19 = arith.constant 0 : index
    %18 = vector.load %arg3[%c9, %c0_18, %c0_19] : memref<10x7x8xf32, #tpu.memory_space<vmem>>, vector<1x7x8xf32>
    %19 = vector.shape_cast %18 : vector<1x7x8xf32> to vector<7x8xf32>
    %c0_20 = arith.constant 0 : index
    %c0_21 = arith.constant 0 : index
    %20 = vector.load %arg2[%c0_20, %c0_21] : memref<7x8xf32, #tpu.memory_space<vmem>>, vector<7x8xf32>
    %cst = arith.constant 5.000000e-01 : f32
    %21 = vector.broadcast %cst : f32 to vector<7x8xf32>
    %22 = arith.mulf %21, %20 : vector<7x8xf32>
    %cst_22 = arith.constant 0.166666672 : f32
    %23 = vector.broadcast %cst_22 : f32 to vector<7x8xf32>
    %24 = arith.mulf %20, %23 : vector<7x8xf32>
    %cst_23 = arith.constant 1.000000e+00 : f32
    %25 = vector.broadcast %cst_23 : f32 to vector<7x8xf32>
    %cst_24 = arith.constant 0.000000e+00 : f32
    %26 = vector.broadcast %cst_24 : f32 to vector<7x8xf32>
    %c0_25 = arith.constant 0 : index
    %c0_26 = arith.constant 0 : index
    %c0_27 = arith.constant 0 : index
    %27 = vector.load %arg1[%c0_25, %c0_26, %c0_27] : memref<17x7x8xf32, #tpu.memory_space<vmem>>, vector<1x7x8xf32>
    %28 = vector.shape_cast %27 : vector<1x7x8xf32> to vector<7x8xf32>
    %29 = math.cos %28 : vector<7x8xf32>
    %30 = math.sin %28 : vector<7x8xf32>
    %cst_28 = arith.constant 2.000000e+00 : f32
    %31 = vector.broadcast %cst_28 : f32 to vector<7x8xf32>
    %32 = arith.mulf %31, %29 : vector<7x8xf32>
    %33 = arith.mulf %32, %29 : vector<7x8xf32>
    %cst_29 = arith.constant 1.000000e+00 : f32
    %34 = vector.broadcast %cst_29 : f32 to vector<7x8xf32>
    %35 = arith.subf %33, %34 : vector<7x8xf32>
    %cst_30 = arith.constant 2.000000e+00 : f32
    %36 = vector.broadcast %cst_30 : f32 to vector<7x8xf32>
    %37 = arith.mulf %36, %30 : vector<7x8xf32>
    %38 = arith.mulf %37, %29 : vector<7x8xf32>
    %39 = arith.mulf %29, %3 : vector<7x8xf32>
    %40 = arith.addf %1, %39 : vector<7x8xf32>
    %41 = arith.mulf %35, %5 : vector<7x8xf32>
    %42 = arith.addf %40, %41 : vector<7x8xf32>
    %43 = arith.mulf %30, %7 : vector<7x8xf32>
    %44 = arith.addf %42, %43 : vector<7x8xf32>
    %45 = arith.mulf %38, %9 : vector<7x8xf32>
    %46 = arith.addf %44, %45 : vector<7x8xf32>
    %47 = arith.mulf %29, %13 : vector<7x8xf32>
    %48 = arith.addf %11, %47 : vector<7x8xf32>
    %49 = arith.mulf %35, %15 : vector<7x8xf32>
    %50 = arith.addf %48, %49 : vector<7x8xf32>
    %51 = arith.mulf %30, %17 : vector<7x8xf32>
    %52 = arith.addf %50, %51 : vector<7x8xf32>
    %53 = arith.mulf %38, %19 : vector<7x8xf32>
    %54 = arith.addf %52, %53 : vector<7x8xf32>
    %c1_31 = arith.constant 1 : index
    %c0_32 = arith.constant 0 : index
    %c0_33 = arith.constant 0 : index
    %55 = vector.load %arg1[%c1_31, %c0_32, %c0_33] : memref<17x7x8xf32, #tpu.memory_space<vmem>>, vector<1x7x8xf32>
    %56 = vector.shape_cast %55 : vector<1x7x8xf32> to vector<7x8xf32>
    %57 = math.cos %56 : vector<7x8xf32>
    %58 = math.sin %56 : vector<7x8xf32>
    %cst_34 = arith.constant 2.000000e+00 : f32
    %59 = vector.broadcast %cst_34 : f32 to vector<7x8xf32>
    %60 = arith.mulf %59, %57 : vector<7x8xf32>
    %61 = arith.mulf %60, %57 : vector<7x8xf32>
    %cst_35 = arith.constant 1.000000e+00 : f32
    %62 = vector.broadcast %cst_35 : f32 to vector<7x8xf32>
    %63 = arith.subf %61, %62 : vector<7x8xf32>
    %cst_36 = arith.constant 2.000000e+00 : f32
    %64 = vector.broadcast %cst_36 : f32 to vector<7x8xf32>
    %65 = arith.mulf %64, %58 : vector<7x8xf32>
    %66 = arith.mulf %65, %57 : vector<7x8xf32>
    %67 = arith.mulf %57, %3 : vector<7x8xf32>
    %68 = arith.addf %1, %67 : vector<7x8xf32>
    %69 = arith.mulf %63, %5 : vector<7x8xf32>
    %70 = arith.addf %68, %69 : vector<7x8xf32>
    %71 = arith.mulf %58, %7 : vector<7x8xf32>
    %72 = arith.addf %70, %71 : vector<7x8xf32>
    %73 = arith.mulf %66, %9 : vector<7x8xf32>
    %74 = arith.addf %72, %73 : vector<7x8xf32>
    %75 = arith.mulf %57, %13 : vector<7x8xf32>
    %76 = arith.addf %11, %75 : vector<7x8xf32>
    %77 = arith.mulf %63, %15 : vector<7x8xf32>
    %78 = arith.addf %76, %77 : vector<7x8xf32>
    %79 = arith.mulf %58, %17 : vector<7x8xf32>
    %80 = arith.addf %78, %79 : vector<7x8xf32>
    %81 = arith.mulf %66, %19 : vector<7x8xf32>
    %82 = arith.addf %80, %81 : vector<7x8xf32>
    %c2_37 = arith.constant 2 : index
    %c0_38 = arith.constant 0 : index
    %c0_39 = arith.constant 0 : index
    %83 = vector.load %arg1[%c2_37, %c0_38, %c0_39] : memref<17x7x8xf32, #tpu.memory_space<vmem>>, vector<1x7x8xf32>
    %84 = vector.shape_cast %83 : vector<1x7x8xf32> to vector<7x8xf32>
    %85 = math.cos %84 : vector<7x8xf32>
    %86 = math.sin %84 : vector<7x8xf32>
    %cst_40 = arith.constant 2.000000e+00 : f32
    %87 = vector.broadcast %cst_40 : f32 to vector<7x8xf32>
    %88 = arith.mulf %87, %85 : vector<7x8xf32>
    %89 = arith.mulf %88, %85 : vector<7x8xf32>
    %cst_41 = arith.constant 1.000000e+00 : f32
    %90 = vector.broadcast %cst_41 : f32 to vector<7x8xf32>
    %91 = arith.subf %89, %90 : vector<7x8xf32>
    %cst_42 = arith.constant 2.000000e+00 : f32
    %92 = vector.broadcast %cst_42 : f32 to vector<7x8xf32>
    %93 = arith.mulf %92, %86 : vector<7x8xf32>
    %94 = arith.mulf %93, %85 : vector<7x8xf32>
    %95 = arith.mulf %85, %3 : vector<7x8xf32>
    %96 = arith.addf %1, %95 : vector<7x8xf32>
    %97 = arith.mulf %91, %5 : vector<7x8xf32>
    %98 = arith.addf %96, %97 : vector<7x8xf32>
    %99 = arith.mulf %86, %7 : vector<7x8xf32>
    %100 = arith.addf %98, %99 : vector<7x8xf32>
    %101 = arith.mulf %94, %9 : vector<7x8xf32>
    %102 = arith.addf %100, %101 : vector<7x8xf32>
    %103 = arith.mulf %85, %13 : vector<7x8xf32>
    %104 = arith.addf %11, %103 : vector<7x8xf32>
    %105 = arith.mulf %91, %15 : vector<7x8xf32>
    %106 = arith.addf %104, %105 : vector<7x8xf32>
    %107 = arith.mulf %86, %17 : vector<7x8xf32>
    %108 = arith.addf %106, %107 : vector<7x8xf32>
    %109 = arith.mulf %94, %19 : vector<7x8xf32>
    %110 = arith.addf %108, %109 : vector<7x8xf32>
    %111 = arith.mulf %22, %46 : vector<7x8xf32>
    %112 = arith.mulf %74, %111 : vector<7x8xf32>
    %113 = arith.addf %74, %112 : vector<7x8xf32>
    %114 = arith.mulf %22, %54 : vector<7x8xf32>
    %115 = arith.mulf %74, %114 : vector<7x8xf32>
    %116 = arith.addf %115, %82 : vector<7x8xf32>
    %117 = arith.mulf %22, %113 : vector<7x8xf32>
    %118 = arith.mulf %74, %117 : vector<7x8xf32>
    %119 = arith.addf %74, %118 : vector<7x8xf32>
    %120 = arith.mulf %22, %116 : vector<7x8xf32>
    %121 = arith.mulf %74, %120 : vector<7x8xf32>
    %122 = arith.addf %121, %82 : vector<7x8xf32>
    %123 = arith.mulf %20, %119 : vector<7x8xf32>
    %124 = arith.mulf %102, %123 : vector<7x8xf32>
    %125 = arith.addf %102, %124 : vector<7x8xf32>
    %126 = arith.mulf %20, %122 : vector<7x8xf32>
    %127 = arith.mulf %102, %126 : vector<7x8xf32>
    %128 = arith.addf %127, %110 : vector<7x8xf32>
    %cst_43 = arith.constant 2.000000e+00 : f32
    %129 = vector.broadcast %cst_43 : f32 to vector<7x8xf32>
    %130 = arith.mulf %129, %113 : vector<7x8xf32>
    %131 = arith.addf %46, %130 : vector<7x8xf32>
    %cst_44 = arith.constant 2.000000e+00 : f32
    %132 = vector.broadcast %cst_44 : f32 to vector<7x8xf32>
    %133 = arith.mulf %132, %119 : vector<7x8xf32>
    %134 = arith.addf %131, %133 : vector<7x8xf32>
    %135 = arith.addf %134, %125 : vector<7x8xf32>
    %136 = arith.mulf %24, %135 : vector<7x8xf32>
    %cst_45 = arith.constant 1.000000e+00 : f32
    %137 = vector.broadcast %cst_45 : f32 to vector<7x8xf32>
    %138 = arith.addf %137, %136 : vector<7x8xf32>
    %cst_46 = arith.constant 2.000000e+00 : f32
    %139 = vector.broadcast %cst_46 : f32 to vector<7x8xf32>
    %140 = arith.mulf %139, %116 : vector<7x8xf32>
    %141 = arith.addf %54, %140 : vector<7x8xf32>
    %cst_47 = arith.constant 2.000000e+00 : f32
    %142 = vector.broadcast %cst_47 : f32 to vector<7x8xf32>
    %143 = arith.mulf %142, %122 : vector<7x8xf32>
    %144 = arith.addf %141, %143 : vector<7x8xf32>
    %145 = arith.addf %144, %128 : vector<7x8xf32>
    %146 = arith.mulf %24, %145 : vector<7x8xf32>
    %147 = arith.mulf %138, %25 : vector<7x8xf32>
    %148 = arith.mulf %138, %26 : vector<7x8xf32>
    %149 = arith.addf %148, %146 : vector<7x8xf32>
    %c3_48 = arith.constant 3 : index
    %c0_49 = arith.constant 0 : index
    %c0_50 = arith.constant 0 : index
    %150 = vector.load %arg1[%c3_48, %c0_49, %c0_50] : memref<17x7x8xf32, #tpu.memory_space<vmem>>, vector<1x7x8xf32>
    %151 = vector.shape_cast %150 : vector<1x7x8xf32> to vector<7x8xf32>
    %152 = math.cos %151 : vector<7x8xf32>
    %153 = math.sin %151 : vector<7x8xf32>
    %cst_51 = arith.constant 2.000000e+00 : f32
    %154 = vector.broadcast %cst_51 : f32 to vector<7x8xf32>
    %155 = arith.mulf %154, %152 : vector<7x8xf32>
    %156 = arith.mulf %155, %152 : vector<7x8xf32>
    %cst_52 = arith.constant 1.000000e+00 : f32
    %157 = vector.broadcast %cst_52 : f32 to vector<7x8xf32>
    %158 = arith.subf %156, %157 : vector<7x8xf32>
    %cst_53 = arith.constant 2.000000e+00 : f32
    %159 = vector.broadcast %cst_53 : f32 to vector<7x8xf32>
    %160 = arith.mulf %159, %153 : vector<7x8xf32>
    %161 = arith.mulf %160, %152 : vector<7x8xf32>
    %162 = arith.mulf %152, %3 : vector<7x8xf32>
    %163 = arith.addf %1, %162 : vector<7x8xf32>
    %164 = arith.mulf %158, %5 : vector<7x8xf32>
    %165 = arith.addf %163, %164 : vector<7x8xf32>
    %166 = arith.mulf %153, %7 : vector<7x8xf32>
    %167 = arith.addf %165, %166 : vector<7x8xf32>
    %168 = arith.mulf %161, %9 : vector<7x8xf32>
    %169 = arith.addf %167, %168 : vector<7x8xf32>
    %170 = arith.mulf %152, %13 : vector<7x8xf32>
    %171 = arith.addf %11, %170 : vector<7x8xf32>
    %172 = arith.mulf %158, %15 : vector<7x8xf32>
    %173 = arith.addf %171, %172 : vector<7x8xf32>
    %174 = arith.mulf %153, %17 : vector<7x8xf32>
    %175 = arith.addf %173, %174 : vector<7x8xf32>
    %176 = arith.mulf %161, %19 : vector<7x8xf32>
    %177 = arith.addf %175, %176 : vector<7x8xf32>
    %c4_54 = arith.constant 4 : index
    %c0_55 = arith.constant 0 : index
    %c0_56 = arith.constant 0 : index
    %178 = vector.load %arg1[%c4_54, %c0_55, %c0_56] : memref<17x7x8xf32, #tpu.memory_space<vmem>>, vector<1x7x8xf32>
    %179 = vector.shape_cast %178 : vector<1x7x8xf32> to vector<7x8xf32>
    %180 = math.cos %179 : vector<7x8xf32>
    %181 = math.sin %179 : vector<7x8xf32>
    %cst_57 = arith.constant 2.000000e+00 : f32
    %182 = vector.broadcast %cst_57 : f32 to vector<7x8xf32>
    %183 = arith.mulf %182, %180 : vector<7x8xf32>
    %184 = arith.mulf %183, %180 : vector<7x8xf32>
    %cst_58 = arith.constant 1.000000e+00 : f32
    %185 = vector.broadcast %cst_58 : f32 to vector<7x8xf32>
    %186 = arith.subf %184, %185 : vector<7x8xf32>
    %cst_59 = arith.constant 2.000000e+00 : f32
    %187 = vector.broadcast %cst_59 : f32 to vector<7x8xf32>
    %188 = arith.mulf %187, %181 : vector<7x8xf32>
    %189 = arith.mulf %188, %180 : vector<7x8xf32>
    %190 = arith.mulf %180, %3 : vector<7x8xf32>
    %191 = arith.addf %1, %190 : vector<7x8xf32>
    %192 = arith.mulf %186, %5 : vector<7x8xf32>
    %193 = arith.addf %191, %192 : vector<7x8xf32>
    %194 = arith.mulf %181, %7 : vector<7x8xf32>
    %195 = arith.addf %193, %194 : vector<7x8xf32>
    %196 = arith.mulf %189, %9 : vector<7x8xf32>
    %197 = arith.addf %195, %196 : vector<7x8xf32>
    %198 = arith.mulf %180, %13 : vector<7x8xf32>
    %199 = arith.addf %11, %198 : vector<7x8xf32>
    %200 = arith.mulf %186, %15 : vector<7x8xf32>
    %201 = arith.addf %199, %200 : vector<7x8xf32>
    %202 = arith.mulf %181, %17 : vector<7x8xf32>
    %203 = arith.addf %201, %202 : vector<7x8xf32>
    %204 = arith.mulf %189, %19 : vector<7x8xf32>
    %205 = arith.addf %203, %204 : vector<7x8xf32>
    %206 = arith.mulf %22, %102 : vector<7x8xf32>
    %207 = arith.mulf %169, %206 : vector<7x8xf32>
    %208 = arith.addf %169, %207 : vector<7x8xf32>
    %209 = arith.mulf %22, %110 : vector<7x8xf32>
    %210 = arith.mulf %169, %209 : vector<7x8xf32>
    %211 = arith.addf %210, %177 : vector<7x8xf32>
    %212 = arith.mulf %22, %208 : vector<7x8xf32>
    %213 = arith.mulf %169, %212 : vector<7x8xf32>
    %214 = arith.addf %169, %213 : vector<7x8xf32>
    %215 = arith.mulf %22, %211 : vector<7x8xf32>
    %216 = arith.mulf %169, %215 : vector<7x8xf32>
    %217 = arith.addf %216, %177 : vector<7x8xf32>
    %218 = arith.mulf %20, %214 : vector<7x8xf32>
    %219 = arith.mulf %197, %218 : vector<7x8xf32>
    %220 = arith.addf %197, %219 : vector<7x8xf32>
    %221 = arith.mulf %20, %217 : vector<7x8xf32>
    %222 = arith.mulf %197, %221 : vector<7x8xf32>
    %223 = arith.addf %222, %205 : vector<7x8xf32>
    %cst_60 = arith.constant 2.000000e+00 : f32
    %224 = vector.broadcast %cst_60 : f32 to vector<7x8xf32>
    %225 = arith.mulf %224, %208 : vector<7x8xf32>
    %226 = arith.addf %102, %225 : vector<7x8xf32>
    %cst_61 = arith.constant 2.000000e+00 : f32
    %227 = vector.broadcast %cst_61 : f32 to vector<7x8xf32>
    %228 = arith.mulf %227, %214 : vector<7x8xf32>
    %229 = arith.addf %226, %228 : vector<7x8xf32>
    %230 = arith.addf %229, %220 : vector<7x8xf32>
    %231 = arith.mulf %24, %230 : vector<7x8xf32>
    %cst_62 = arith.constant 1.000000e+00 : f32
    %232 = vector.broadcast %cst_62 : f32 to vector<7x8xf32>
    %233 = arith.addf %232, %231 : vector<7x8xf32>
    %cst_63 = arith.constant 2.000000e+00 : f32
    %234 = vector.broadcast %cst_63 : f32 to vector<7x8xf32>
    %235 = arith.mulf %234, %211 : vector<7x8xf32>
    %236 = arith.addf %110, %235 : vector<7x8xf32>
    %cst_64 = arith.constant 2.000000e+00 : f32
    %237 = vector.broadcast %cst_64 : f32 to vector<7x8xf32>
    %238 = arith.mulf %237, %217 : vector<7x8xf32>
    %239 = arith.addf %236, %238 : vector<7x8xf32>
    %240 = arith.addf %239, %223 : vector<7x8xf32>
    %241 = arith.mulf %24, %240 : vector<7x8xf32>
    %242 = arith.mulf %233, %147 : vector<7x8xf32>
    %243 = arith.mulf %233, %149 : vector<7x8xf32>
    %244 = arith.addf %243, %241 : vector<7x8xf32>
    %c5_65 = arith.constant 5 : index
    %c0_66 = arith.constant 0 : index
    %c0_67 = arith.constant 0 : index
    %245 = vector.load %arg1[%c5_65, %c0_66, %c0_67] : memref<17x7x8xf32, #tpu.memory_space<vmem>>, vector<1x7x8xf32>
    %246 = vector.shape_cast %245 : vector<1x7x8xf32> to vector<7x8xf32>
    %247 = math.cos %246 : vector<7x8xf32>
    %248 = math.sin %246 : vector<7x8xf32>
    %cst_68 = arith.constant 2.000000e+00 : f32
    %249 = vector.broadcast %cst_68 : f32 to vector<7x8xf32>
    %250 = arith.mulf %249, %247 : vector<7x8xf32>
    %251 = arith.mulf %250, %247 : vector<7x8xf32>
    %cst_69 = arith.constant 1.000000e+00 : f32
    %252 = vector.broadcast %cst_69 : f32 to vector<7x8xf32>
    %253 = arith.subf %251, %252 : vector<7x8xf32>
    %cst_70 = arith.constant 2.000000e+00 : f32
    %254 = vector.broadcast %cst_70 : f32 to vector<7x8xf32>
    %255 = arith.mulf %254, %248 : vector<7x8xf32>
    %256 = arith.mulf %255, %247 : vector<7x8xf32>
    %257 = arith.mulf %247, %3 : vector<7x8xf32>
    %258 = arith.addf %1, %257 : vector<7x8xf32>
    %259 = arith.mulf %253, %5 : vector<7x8xf32>
    %260 = arith.addf %258, %259 : vector<7x8xf32>
    %261 = arith.mulf %248, %7 : vector<7x8xf32>
    %262 = arith.addf %260, %261 : vector<7x8xf32>
    %263 = arith.mulf %256, %9 : vector<7x8xf32>
    %264 = arith.addf %262, %263 : vector<7x8xf32>
    %265 = arith.mulf %247, %13 : vector<7x8xf32>
    %266 = arith.addf %11, %265 : vector<7x8xf32>
    %267 = arith.mulf %253, %15 : vector<7x8xf32>
    %268 = arith.addf %266, %267 : vector<7x8xf32>
    %269 = arith.mulf %248, %17 : vector<7x8xf32>
    %270 = arith.addf %268, %269 : vector<7x8xf32>
    %271 = arith.mulf %256, %19 : vector<7x8xf32>
    %272 = arith.addf %270, %271 : vector<7x8xf32>
    %c6_71 = arith.constant 6 : index
    %c0_72 = arith.constant 0 : index
    %c0_73 = arith.constant 0 : index
    %273 = vector.load %arg1[%c6_71, %c0_72, %c0_73] : memref<17x7x8xf32, #tpu.memory_space<vmem>>, vector<1x7x8xf32>
    %274 = vector.shape_cast %273 : vector<1x7x8xf32> to vector<7x8xf32>
    %275 = math.cos %274 : vector<7x8xf32>
    %276 = math.sin %274 : vector<7x8xf32>
    %cst_74 = arith.constant 2.000000e+00 : f32
    %277 = vector.broadcast %cst_74 : f32 to vector<7x8xf32>
    %278 = arith.mulf %277, %275 : vector<7x8xf32>
    %279 = arith.mulf %278, %275 : vector<7x8xf32>
    %cst_75 = arith.constant 1.000000e+00 : f32
    %280 = vector.broadcast %cst_75 : f32 to vector<7x8xf32>
    %281 = arith.subf %279, %280 : vector<7x8xf32>
    %cst_76 = arith.constant 2.000000e+00 : f32
    %282 = vector.broadcast %cst_76 : f32 to vector<7x8xf32>
    %283 = arith.mulf %282, %276 : vector<7x8xf32>
    %284 = arith.mulf %283, %275 : vector<7x8xf32>
    %285 = arith.mulf %275, %3 : vector<7x8xf32>
    %286 = arith.addf %1, %285 : vector<7x8xf32>
    %287 = arith.mulf %281, %5 : vector<7x8xf32>
    %288 = arith.addf %286, %287 : vector<7x8xf32>
    %289 = arith.mulf %276, %7 : vector<7x8xf32>
    %290 = arith.addf %288, %289 : vector<7x8xf32>
    %291 = arith.mulf %284, %9 : vector<7x8xf32>
    %292 = arith.addf %290, %291 : vector<7x8xf32>
    %293 = arith.mulf %275, %13 : vector<7x8xf32>
    %294 = arith.addf %11, %293 : vector<7x8xf32>
    %295 = arith.mulf %281, %15 : vector<7x8xf32>
    %296 = arith.addf %294, %295 : vector<7x8xf32>
    %297 = arith.mulf %276, %17 : vector<7x8xf32>
    %298 = arith.addf %296, %297 : vector<7x8xf32>
    %299 = arith.mulf %284, %19 : vector<7x8xf32>
    %300 = arith.addf %298, %299 : vector<7x8xf32>
    %301 = arith.mulf %22, %197 : vector<7x8xf32>
    %302 = arith.mulf %264, %301 : vector<7x8xf32>
    %303 = arith.addf %264, %302 : vector<7x8xf32>
    %304 = arith.mulf %22, %205 : vector<7x8xf32>
    %305 = arith.mulf %264, %304 : vector<7x8xf32>
    %306 = arith.addf %305, %272 : vector<7x8xf32>
    %307 = arith.mulf %22, %303 : vector<7x8xf32>
    %308 = arith.mulf %264, %307 : vector<7x8xf32>
    %309 = arith.addf %264, %308 : vector<7x8xf32>
    %310 = arith.mulf %22, %306 : vector<7x8xf32>
    %311 = arith.mulf %264, %310 : vector<7x8xf32>
    %312 = arith.addf %311, %272 : vector<7x8xf32>
    %313 = arith.mulf %20, %309 : vector<7x8xf32>
    %314 = arith.mulf %292, %313 : vector<7x8xf32>
    %315 = arith.addf %292, %314 : vector<7x8xf32>
    %316 = arith.mulf %20, %312 : vector<7x8xf32>
    %317 = arith.mulf %292, %316 : vector<7x8xf32>
    %318 = arith.addf %317, %300 : vector<7x8xf32>
    %cst_77 = arith.constant 2.000000e+00 : f32
    %319 = vector.broadcast %cst_77 : f32 to vector<7x8xf32>
    %320 = arith.mulf %319, %303 : vector<7x8xf32>
    %321 = arith.addf %197, %320 : vector<7x8xf32>
    %cst_78 = arith.constant 2.000000e+00 : f32
    %322 = vector.broadcast %cst_78 : f32 to vector<7x8xf32>
    %323 = arith.mulf %322, %309 : vector<7x8xf32>
    %324 = arith.addf %321, %323 : vector<7x8xf32>
    %325 = arith.addf %324, %315 : vector<7x8xf32>
    %326 = arith.mulf %24, %325 : vector<7x8xf32>
    %cst_79 = arith.constant 1.000000e+00 : f32
    %327 = vector.broadcast %cst_79 : f32 to vector<7x8xf32>
    %328 = arith.addf %327, %326 : vector<7x8xf32>
    %cst_80 = arith.constant 2.000000e+00 : f32
    %329 = vector.broadcast %cst_80 : f32 to vector<7x8xf32>
    %330 = arith.mulf %329, %306 : vector<7x8xf32>
    %331 = arith.addf %205, %330 : vector<7x8xf32>
    %cst_81 = arith.constant 2.000000e+00 : f32
    %332 = vector.broadcast %cst_81 : f32 to vector<7x8xf32>
    %333 = arith.mulf %332, %312 : vector<7x8xf32>
    %334 = arith.addf %331, %333 : vector<7x8xf32>
    %335 = arith.addf %334, %318 : vector<7x8xf32>
    %336 = arith.mulf %24, %335 : vector<7x8xf32>
    %337 = arith.mulf %328, %242 : vector<7x8xf32>
    %338 = arith.mulf %328, %244 : vector<7x8xf32>
    %339 = arith.addf %338, %336 : vector<7x8xf32>
    %c7_82 = arith.constant 7 : index
    %c0_83 = arith.constant 0 : index
    %c0_84 = arith.constant 0 : index
    %340 = vector.load %arg1[%c7_82, %c0_83, %c0_84] : memref<17x7x8xf32, #tpu.memory_space<vmem>>, vector<1x7x8xf32>
    %341 = vector.shape_cast %340 : vector<1x7x8xf32> to vector<7x8xf32>
    %342 = math.cos %341 : vector<7x8xf32>
    %343 = math.sin %341 : vector<7x8xf32>
    %cst_85 = arith.constant 2.000000e+00 : f32
    %344 = vector.broadcast %cst_85 : f32 to vector<7x8xf32>
    %345 = arith.mulf %344, %342 : vector<7x8xf32>
    %346 = arith.mulf %345, %342 : vector<7x8xf32>
    %cst_86 = arith.constant 1.000000e+00 : f32
    %347 = vector.broadcast %cst_86 : f32 to vector<7x8xf32>
    %348 = arith.subf %346, %347 : vector<7x8xf32>
    %cst_87 = arith.constant 2.000000e+00 : f32
    %349 = vector.broadcast %cst_87 : f32 to vector<7x8xf32>
    %350 = arith.mulf %349, %343 : vector<7x8xf32>
    %351 = arith.mulf %350, %342 : vector<7x8xf32>
    %352 = arith.mulf %342, %3 : vector<7x8xf32>
    %353 = arith.addf %1, %352 : vector<7x8xf32>
    %354 = arith.mulf %348, %5 : vector<7x8xf32>
    %355 = arith.addf %353, %354 : vector<7x8xf32>
    %356 = arith.mulf %343, %7 : vector<7x8xf32>
    %357 = arith.addf %355, %356 : vector<7x8xf32>
    %358 = arith.mulf %351, %9 : vector<7x8xf32>
    %359 = arith.addf %357, %358 : vector<7x8xf32>
    %360 = arith.mulf %342, %13 : vector<7x8xf32>
    %361 = arith.addf %11, %360 : vector<7x8xf32>
    %362 = arith.mulf %348, %15 : vector<7x8xf32>
    %363 = arith.addf %361, %362 : vector<7x8xf32>
    %364 = arith.mulf %343, %17 : vector<7x8xf32>
    %365 = arith.addf %363, %364 : vector<7x8xf32>
    %366 = arith.mulf %351, %19 : vector<7x8xf32>
    %367 = arith.addf %365, %366 : vector<7x8xf32>
    %c8_88 = arith.constant 8 : index
    %c0_89 = arith.constant 0 : index
    %c0_90 = arith.constant 0 : index
    %368 = vector.load %arg1[%c8_88, %c0_89, %c0_90] : memref<17x7x8xf32, #tpu.memory_space<vmem>>, vector<1x7x8xf32>
    %369 = vector.shape_cast %368 : vector<1x7x8xf32> to vector<7x8xf32>
    %370 = math.cos %369 : vector<7x8xf32>
    %371 = math.sin %369 : vector<7x8xf32>
    %cst_91 = arith.constant 2.000000e+00 : f32
    %372 = vector.broadcast %cst_91 : f32 to vector<7x8xf32>
    %373 = arith.mulf %372, %370 : vector<7x8xf32>
    %374 = arith.mulf %373, %370 : vector<7x8xf32>
    %cst_92 = arith.constant 1.000000e+00 : f32
    %375 = vector.broadcast %cst_92 : f32 to vector<7x8xf32>
    %376 = arith.subf %374, %375 : vector<7x8xf32>
    %cst_93 = arith.constant 2.000000e+00 : f32
    %377 = vector.broadcast %cst_93 : f32 to vector<7x8xf32>
    %378 = arith.mulf %377, %371 : vector<7x8xf32>
    %379 = arith.mulf %378, %370 : vector<7x8xf32>
    %380 = arith.mulf %370, %3 : vector<7x8xf32>
    %381 = arith.addf %1, %380 : vector<7x8xf32>
    %382 = arith.mulf %376, %5 : vector<7x8xf32>
    %383 = arith.addf %381, %382 : vector<7x8xf32>
    %384 = arith.mulf %371, %7 : vector<7x8xf32>
    %385 = arith.addf %383, %384 : vector<7x8xf32>
    %386 = arith.mulf %379, %9 : vector<7x8xf32>
    %387 = arith.addf %385, %386 : vector<7x8xf32>
    %388 = arith.mulf %370, %13 : vector<7x8xf32>
    %389 = arith.addf %11, %388 : vector<7x8xf32>
    %390 = arith.mulf %376, %15 : vector<7x8xf32>
    %391 = arith.addf %389, %390 : vector<7x8xf32>
    %392 = arith.mulf %371, %17 : vector<7x8xf32>
    %393 = arith.addf %391, %392 : vector<7x8xf32>
    %394 = arith.mulf %379, %19 : vector<7x8xf32>
    %395 = arith.addf %393, %394 : vector<7x8xf32>
    %396 = arith.mulf %22, %292 : vector<7x8xf32>
    %397 = arith.mulf %359, %396 : vector<7x8xf32>
    %398 = arith.addf %359, %397 : vector<7x8xf32>
    %399 = arith.mulf %22, %300 : vector<7x8xf32>
    %400 = arith.mulf %359, %399 : vector<7x8xf32>
    %401 = arith.addf %400, %367 : vector<7x8xf32>
    %402 = arith.mulf %22, %398 : vector<7x8xf32>
    %403 = arith.mulf %359, %402 : vector<7x8xf32>
    %404 = arith.addf %359, %403 : vector<7x8xf32>
    %405 = arith.mulf %22, %401 : vector<7x8xf32>
    %406 = arith.mulf %359, %405 : vector<7x8xf32>
    %407 = arith.addf %406, %367 : vector<7x8xf32>
    %408 = arith.mulf %20, %404 : vector<7x8xf32>
    %409 = arith.mulf %387, %408 : vector<7x8xf32>
    %410 = arith.addf %387, %409 : vector<7x8xf32>
    %411 = arith.mulf %20, %407 : vector<7x8xf32>
    %412 = arith.mulf %387, %411 : vector<7x8xf32>
    %413 = arith.addf %412, %395 : vector<7x8xf32>
    %cst_94 = arith.constant 2.000000e+00 : f32
    %414 = vector.broadcast %cst_94 : f32 to vector<7x8xf32>
    %415 = arith.mulf %414, %398 : vector<7x8xf32>
    %416 = arith.addf %292, %415 : vector<7x8xf32>
    %cst_95 = arith.constant 2.000000e+00 : f32
    %417 = vector.broadcast %cst_95 : f32 to vector<7x8xf32>
    %418 = arith.mulf %417, %404 : vector<7x8xf32>
    %419 = arith.addf %416, %418 : vector<7x8xf32>
    %420 = arith.addf %419, %410 : vector<7x8xf32>
    %421 = arith.mulf %24, %420 : vector<7x8xf32>
    %cst_96 = arith.constant 1.000000e+00 : f32
    %422 = vector.broadcast %cst_96 : f32 to vector<7x8xf32>
    %423 = arith.addf %422, %421 : vector<7x8xf32>
    %cst_97 = arith.constant 2.000000e+00 : f32
    %424 = vector.broadcast %cst_97 : f32 to vector<7x8xf32>
    %425 = arith.mulf %424, %401 : vector<7x8xf32>
    %426 = arith.addf %300, %425 : vector<7x8xf32>
    %cst_98 = arith.constant 2.000000e+00 : f32
    %427 = vector.broadcast %cst_98 : f32 to vector<7x8xf32>
    %428 = arith.mulf %427, %407 : vector<7x8xf32>
    %429 = arith.addf %426, %428 : vector<7x8xf32>
    %430 = arith.addf %429, %413 : vector<7x8xf32>
    %431 = arith.mulf %24, %430 : vector<7x8xf32>
    %432 = arith.mulf %423, %337 : vector<7x8xf32>
    %433 = arith.mulf %423, %339 : vector<7x8xf32>
    %434 = arith.addf %433, %431 : vector<7x8xf32>
    %c9_99 = arith.constant 9 : index
    %c0_100 = arith.constant 0 : index
    %c0_101 = arith.constant 0 : index
    %435 = vector.load %arg1[%c9_99, %c0_100, %c0_101] : memref<17x7x8xf32, #tpu.memory_space<vmem>>, vector<1x7x8xf32>
    %436 = vector.shape_cast %435 : vector<1x7x8xf32> to vector<7x8xf32>
    %437 = math.cos %436 : vector<7x8xf32>
    %438 = math.sin %436 : vector<7x8xf32>
    %cst_102 = arith.constant 2.000000e+00 : f32
    %439 = vector.broadcast %cst_102 : f32 to vector<7x8xf32>
    %440 = arith.mulf %439, %437 : vector<7x8xf32>
    %441 = arith.mulf %440, %437 : vector<7x8xf32>
    %cst_103 = arith.constant 1.000000e+00 : f32
    %442 = vector.broadcast %cst_103 : f32 to vector<7x8xf32>
    %443 = arith.subf %441, %442 : vector<7x8xf32>
    %cst_104 = arith.constant 2.000000e+00 : f32
    %444 = vector.broadcast %cst_104 : f32 to vector<7x8xf32>
    %445 = arith.mulf %444, %438 : vector<7x8xf32>
    %446 = arith.mulf %445, %437 : vector<7x8xf32>
    %447 = arith.mulf %437, %3 : vector<7x8xf32>
    %448 = arith.addf %1, %447 : vector<7x8xf32>
    %449 = arith.mulf %443, %5 : vector<7x8xf32>
    %450 = arith.addf %448, %449 : vector<7x8xf32>
    %451 = arith.mulf %438, %7 : vector<7x8xf32>
    %452 = arith.addf %450, %451 : vector<7x8xf32>
    %453 = arith.mulf %446, %9 : vector<7x8xf32>
    %454 = arith.addf %452, %453 : vector<7x8xf32>
    %455 = arith.mulf %437, %13 : vector<7x8xf32>
    %456 = arith.addf %11, %455 : vector<7x8xf32>
    %457 = arith.mulf %443, %15 : vector<7x8xf32>
    %458 = arith.addf %456, %457 : vector<7x8xf32>
    %459 = arith.mulf %438, %17 : vector<7x8xf32>
    %460 = arith.addf %458, %459 : vector<7x8xf32>
    %461 = arith.mulf %446, %19 : vector<7x8xf32>
    %462 = arith.addf %460, %461 : vector<7x8xf32>
    %c10 = arith.constant 10 : index
    %c0_105 = arith.constant 0 : index
    %c0_106 = arith.constant 0 : index
    %463 = vector.load %arg1[%c10, %c0_105, %c0_106] : memref<17x7x8xf32, #tpu.memory_space<vmem>>, vector<1x7x8xf32>
    %464 = vector.shape_cast %463 : vector<1x7x8xf32> to vector<7x8xf32>
    %465 = math.cos %464 : vector<7x8xf32>
    %466 = math.sin %464 : vector<7x8xf32>
    %cst_107 = arith.constant 2.000000e+00 : f32
    %467 = vector.broadcast %cst_107 : f32 to vector<7x8xf32>
    %468 = arith.mulf %467, %465 : vector<7x8xf32>
    %469 = arith.mulf %468, %465 : vector<7x8xf32>
    %cst_108 = arith.constant 1.000000e+00 : f32
    %470 = vector.broadcast %cst_108 : f32 to vector<7x8xf32>
    %471 = arith.subf %469, %470 : vector<7x8xf32>
    %cst_109 = arith.constant 2.000000e+00 : f32
    %472 = vector.broadcast %cst_109 : f32 to vector<7x8xf32>
    %473 = arith.mulf %472, %466 : vector<7x8xf32>
    %474 = arith.mulf %473, %465 : vector<7x8xf32>
    %475 = arith.mulf %465, %3 : vector<7x8xf32>
    %476 = arith.addf %1, %475 : vector<7x8xf32>
    %477 = arith.mulf %471, %5 : vector<7x8xf32>
    %478 = arith.addf %476, %477 : vector<7x8xf32>
    %479 = arith.mulf %466, %7 : vector<7x8xf32>
    %480 = arith.addf %478, %479 : vector<7x8xf32>
    %481 = arith.mulf %474, %9 : vector<7x8xf32>
    %482 = arith.addf %480, %481 : vector<7x8xf32>
    %483 = arith.mulf %465, %13 : vector<7x8xf32>
    %484 = arith.addf %11, %483 : vector<7x8xf32>
    %485 = arith.mulf %471, %15 : vector<7x8xf32>
    %486 = arith.addf %484, %485 : vector<7x8xf32>
    %487 = arith.mulf %466, %17 : vector<7x8xf32>
    %488 = arith.addf %486, %487 : vector<7x8xf32>
    %489 = arith.mulf %474, %19 : vector<7x8xf32>
    %490 = arith.addf %488, %489 : vector<7x8xf32>
    %491 = arith.mulf %22, %387 : vector<7x8xf32>
    %492 = arith.mulf %454, %491 : vector<7x8xf32>
    %493 = arith.addf %454, %492 : vector<7x8xf32>
    %494 = arith.mulf %22, %395 : vector<7x8xf32>
    %495 = arith.mulf %454, %494 : vector<7x8xf32>
    %496 = arith.addf %495, %462 : vector<7x8xf32>
    %497 = arith.mulf %22, %493 : vector<7x8xf32>
    %498 = arith.mulf %454, %497 : vector<7x8xf32>
    %499 = arith.addf %454, %498 : vector<7x8xf32>
    %500 = arith.mulf %22, %496 : vector<7x8xf32>
    %501 = arith.mulf %454, %500 : vector<7x8xf32>
    %502 = arith.addf %501, %462 : vector<7x8xf32>
    %503 = arith.mulf %20, %499 : vector<7x8xf32>
    %504 = arith.mulf %482, %503 : vector<7x8xf32>
    %505 = arith.addf %482, %504 : vector<7x8xf32>
    %506 = arith.mulf %20, %502 : vector<7x8xf32>
    %507 = arith.mulf %482, %506 : vector<7x8xf32>
    %508 = arith.addf %507, %490 : vector<7x8xf32>
    %cst_110 = arith.constant 2.000000e+00 : f32
    %509 = vector.broadcast %cst_110 : f32 to vector<7x8xf32>
    %510 = arith.mulf %509, %493 : vector<7x8xf32>
    %511 = arith.addf %387, %510 : vector<7x8xf32>
    %cst_111 = arith.constant 2.000000e+00 : f32
    %512 = vector.broadcast %cst_111 : f32 to vector<7x8xf32>
    %513 = arith.mulf %512, %499 : vector<7x8xf32>
    %514 = arith.addf %511, %513 : vector<7x8xf32>
    %515 = arith.addf %514, %505 : vector<7x8xf32>
    %516 = arith.mulf %24, %515 : vector<7x8xf32>
    %cst_112 = arith.constant 1.000000e+00 : f32
    %517 = vector.broadcast %cst_112 : f32 to vector<7x8xf32>
    %518 = arith.addf %517, %516 : vector<7x8xf32>
    %cst_113 = arith.constant 2.000000e+00 : f32
    %519 = vector.broadcast %cst_113 : f32 to vector<7x8xf32>
    %520 = arith.mulf %519, %496 : vector<7x8xf32>
    %521 = arith.addf %395, %520 : vector<7x8xf32>
    %cst_114 = arith.constant 2.000000e+00 : f32
    %522 = vector.broadcast %cst_114 : f32 to vector<7x8xf32>
    %523 = arith.mulf %522, %502 : vector<7x8xf32>
    %524 = arith.addf %521, %523 : vector<7x8xf32>
    %525 = arith.addf %524, %508 : vector<7x8xf32>
    %526 = arith.mulf %24, %525 : vector<7x8xf32>
    %527 = arith.mulf %518, %432 : vector<7x8xf32>
    %528 = arith.mulf %518, %434 : vector<7x8xf32>
    %529 = arith.addf %528, %526 : vector<7x8xf32>
    %c11 = arith.constant 11 : index
    %c0_115 = arith.constant 0 : index
    %c0_116 = arith.constant 0 : index
    %530 = vector.load %arg1[%c11, %c0_115, %c0_116] : memref<17x7x8xf32, #tpu.memory_space<vmem>>, vector<1x7x8xf32>
    %531 = vector.shape_cast %530 : vector<1x7x8xf32> to vector<7x8xf32>
    %532 = math.cos %531 : vector<7x8xf32>
    %533 = math.sin %531 : vector<7x8xf32>
    %cst_117 = arith.constant 2.000000e+00 : f32
    %534 = vector.broadcast %cst_117 : f32 to vector<7x8xf32>
    %535 = arith.mulf %534, %532 : vector<7x8xf32>
    %536 = arith.mulf %535, %532 : vector<7x8xf32>
    %cst_118 = arith.constant 1.000000e+00 : f32
    %537 = vector.broadcast %cst_118 : f32 to vector<7x8xf32>
    %538 = arith.subf %536, %537 : vector<7x8xf32>
    %cst_119 = arith.constant 2.000000e+00 : f32
    %539 = vector.broadcast %cst_119 : f32 to vector<7x8xf32>
    %540 = arith.mulf %539, %533 : vector<7x8xf32>
    %541 = arith.mulf %540, %532 : vector<7x8xf32>
    %542 = arith.mulf %532, %3 : vector<7x8xf32>
    %543 = arith.addf %1, %542 : vector<7x8xf32>
    %544 = arith.mulf %538, %5 : vector<7x8xf32>
    %545 = arith.addf %543, %544 : vector<7x8xf32>
    %546 = arith.mulf %533, %7 : vector<7x8xf32>
    %547 = arith.addf %545, %546 : vector<7x8xf32>
    %548 = arith.mulf %541, %9 : vector<7x8xf32>
    %549 = arith.addf %547, %548 : vector<7x8xf32>
    %550 = arith.mulf %532, %13 : vector<7x8xf32>
    %551 = arith.addf %11, %550 : vector<7x8xf32>
    %552 = arith.mulf %538, %15 : vector<7x8xf32>
    %553 = arith.addf %551, %552 : vector<7x8xf32>
    %554 = arith.mulf %533, %17 : vector<7x8xf32>
    %555 = arith.addf %553, %554 : vector<7x8xf32>
    %556 = arith.mulf %541, %19 : vector<7x8xf32>
    %557 = arith.addf %555, %556 : vector<7x8xf32>
    %c12 = arith.constant 12 : index
    %c0_120 = arith.constant 0 : index
    %c0_121 = arith.constant 0 : index
    %558 = vector.load %arg1[%c12, %c0_120, %c0_121] : memref<17x7x8xf32, #tpu.memory_space<vmem>>, vector<1x7x8xf32>
    %559 = vector.shape_cast %558 : vector<1x7x8xf32> to vector<7x8xf32>
    %560 = math.cos %559 : vector<7x8xf32>
    %561 = math.sin %559 : vector<7x8xf32>
    %cst_122 = arith.constant 2.000000e+00 : f32
    %562 = vector.broadcast %cst_122 : f32 to vector<7x8xf32>
    %563 = arith.mulf %562, %560 : vector<7x8xf32>
    %564 = arith.mulf %563, %560 : vector<7x8xf32>
    %cst_123 = arith.constant 1.000000e+00 : f32
    %565 = vector.broadcast %cst_123 : f32 to vector<7x8xf32>
    %566 = arith.subf %564, %565 : vector<7x8xf32>
    %cst_124 = arith.constant 2.000000e+00 : f32
    %567 = vector.broadcast %cst_124 : f32 to vector<7x8xf32>
    %568 = arith.mulf %567, %561 : vector<7x8xf32>
    %569 = arith.mulf %568, %560 : vector<7x8xf32>
    %570 = arith.mulf %560, %3 : vector<7x8xf32>
    %571 = arith.addf %1, %570 : vector<7x8xf32>
    %572 = arith.mulf %566, %5 : vector<7x8xf32>
    %573 = arith.addf %571, %572 : vector<7x8xf32>
    %574 = arith.mulf %561, %7 : vector<7x8xf32>
    %575 = arith.addf %573, %574 : vector<7x8xf32>
    %576 = arith.mulf %569, %9 : vector<7x8xf32>
    %577 = arith.addf %575, %576 : vector<7x8xf32>
    %578 = arith.mulf %560, %13 : vector<7x8xf32>
    %579 = arith.addf %11, %578 : vector<7x8xf32>
    %580 = arith.mulf %566, %15 : vector<7x8xf32>
    %581 = arith.addf %579, %580 : vector<7x8xf32>
    %582 = arith.mulf %561, %17 : vector<7x8xf32>
    %583 = arith.addf %581, %582 : vector<7x8xf32>
    %584 = arith.mulf %569, %19 : vector<7x8xf32>
    %585 = arith.addf %583, %584 : vector<7x8xf32>
    %586 = arith.mulf %22, %482 : vector<7x8xf32>
    %587 = arith.mulf %549, %586 : vector<7x8xf32>
    %588 = arith.addf %549, %587 : vector<7x8xf32>
    %589 = arith.mulf %22, %490 : vector<7x8xf32>
    %590 = arith.mulf %549, %589 : vector<7x8xf32>
    %591 = arith.addf %590, %557 : vector<7x8xf32>
    %592 = arith.mulf %22, %588 : vector<7x8xf32>
    %593 = arith.mulf %549, %592 : vector<7x8xf32>
    %594 = arith.addf %549, %593 : vector<7x8xf32>
    %595 = arith.mulf %22, %591 : vector<7x8xf32>
    %596 = arith.mulf %549, %595 : vector<7x8xf32>
    %597 = arith.addf %596, %557 : vector<7x8xf32>
    %598 = arith.mulf %20, %594 : vector<7x8xf32>
    %599 = arith.mulf %577, %598 : vector<7x8xf32>
    %600 = arith.addf %577, %599 : vector<7x8xf32>
    %601 = arith.mulf %20, %597 : vector<7x8xf32>
    %602 = arith.mulf %577, %601 : vector<7x8xf32>
    %603 = arith.addf %602, %585 : vector<7x8xf32>
    %cst_125 = arith.constant 2.000000e+00 : f32
    %604 = vector.broadcast %cst_125 : f32 to vector<7x8xf32>
    %605 = arith.mulf %604, %588 : vector<7x8xf32>
    %606 = arith.addf %482, %605 : vector<7x8xf32>
    %cst_126 = arith.constant 2.000000e+00 : f32
    %607 = vector.broadcast %cst_126 : f32 to vector<7x8xf32>
    %608 = arith.mulf %607, %594 : vector<7x8xf32>
    %609 = arith.addf %606, %608 : vector<7x8xf32>
    %610 = arith.addf %609, %600 : vector<7x8xf32>
    %611 = arith.mulf %24, %610 : vector<7x8xf32>
    %cst_127 = arith.constant 1.000000e+00 : f32
    %612 = vector.broadcast %cst_127 : f32 to vector<7x8xf32>
    %613 = arith.addf %612, %611 : vector<7x8xf32>
    %cst_128 = arith.constant 2.000000e+00 : f32
    %614 = vector.broadcast %cst_128 : f32 to vector<7x8xf32>
    %615 = arith.mulf %614, %591 : vector<7x8xf32>
    %616 = arith.addf %490, %615 : vector<7x8xf32>
    %cst_129 = arith.constant 2.000000e+00 : f32
    %617 = vector.broadcast %cst_129 : f32 to vector<7x8xf32>
    %618 = arith.mulf %617, %597 : vector<7x8xf32>
    %619 = arith.addf %616, %618 : vector<7x8xf32>
    %620 = arith.addf %619, %603 : vector<7x8xf32>
    %621 = arith.mulf %24, %620 : vector<7x8xf32>
    %622 = arith.mulf %613, %527 : vector<7x8xf32>
    %623 = arith.mulf %613, %529 : vector<7x8xf32>
    %624 = arith.addf %623, %621 : vector<7x8xf32>
    %c13 = arith.constant 13 : index
    %c0_130 = arith.constant 0 : index
    %c0_131 = arith.constant 0 : index
    %625 = vector.load %arg1[%c13, %c0_130, %c0_131] : memref<17x7x8xf32, #tpu.memory_space<vmem>>, vector<1x7x8xf32>
    %626 = vector.shape_cast %625 : vector<1x7x8xf32> to vector<7x8xf32>
    %627 = math.cos %626 : vector<7x8xf32>
    %628 = math.sin %626 : vector<7x8xf32>
    %cst_132 = arith.constant 2.000000e+00 : f32
    %629 = vector.broadcast %cst_132 : f32 to vector<7x8xf32>
    %630 = arith.mulf %629, %627 : vector<7x8xf32>
    %631 = arith.mulf %630, %627 : vector<7x8xf32>
    %cst_133 = arith.constant 1.000000e+00 : f32
    %632 = vector.broadcast %cst_133 : f32 to vector<7x8xf32>
    %633 = arith.subf %631, %632 : vector<7x8xf32>
    %cst_134 = arith.constant 2.000000e+00 : f32
    %634 = vector.broadcast %cst_134 : f32 to vector<7x8xf32>
    %635 = arith.mulf %634, %628 : vector<7x8xf32>
    %636 = arith.mulf %635, %627 : vector<7x8xf32>
    %637 = arith.mulf %627, %3 : vector<7x8xf32>
    %638 = arith.addf %1, %637 : vector<7x8xf32>
    %639 = arith.mulf %633, %5 : vector<7x8xf32>
    %640 = arith.addf %638, %639 : vector<7x8xf32>
    %641 = arith.mulf %628, %7 : vector<7x8xf32>
    %642 = arith.addf %640, %641 : vector<7x8xf32>
    %643 = arith.mulf %636, %9 : vector<7x8xf32>
    %644 = arith.addf %642, %643 : vector<7x8xf32>
    %645 = arith.mulf %627, %13 : vector<7x8xf32>
    %646 = arith.addf %11, %645 : vector<7x8xf32>
    %647 = arith.mulf %633, %15 : vector<7x8xf32>
    %648 = arith.addf %646, %647 : vector<7x8xf32>
    %649 = arith.mulf %628, %17 : vector<7x8xf32>
    %650 = arith.addf %648, %649 : vector<7x8xf32>
    %651 = arith.mulf %636, %19 : vector<7x8xf32>
    %652 = arith.addf %650, %651 : vector<7x8xf32>
    %c14 = arith.constant 14 : index
    %c0_135 = arith.constant 0 : index
    %c0_136 = arith.constant 0 : index
    %653 = vector.load %arg1[%c14, %c0_135, %c0_136] : memref<17x7x8xf32, #tpu.memory_space<vmem>>, vector<1x7x8xf32>
    %654 = vector.shape_cast %653 : vector<1x7x8xf32> to vector<7x8xf32>
    %655 = math.cos %654 : vector<7x8xf32>
    %656 = math.sin %654 : vector<7x8xf32>
    %cst_137 = arith.constant 2.000000e+00 : f32
    %657 = vector.broadcast %cst_137 : f32 to vector<7x8xf32>
    %658 = arith.mulf %657, %655 : vector<7x8xf32>
    %659 = arith.mulf %658, %655 : vector<7x8xf32>
    %cst_138 = arith.constant 1.000000e+00 : f32
    %660 = vector.broadcast %cst_138 : f32 to vector<7x8xf32>
    %661 = arith.subf %659, %660 : vector<7x8xf32>
    %cst_139 = arith.constant 2.000000e+00 : f32
    %662 = vector.broadcast %cst_139 : f32 to vector<7x8xf32>
    %663 = arith.mulf %662, %656 : vector<7x8xf32>
    %664 = arith.mulf %663, %655 : vector<7x8xf32>
    %665 = arith.mulf %655, %3 : vector<7x8xf32>
    %666 = arith.addf %1, %665 : vector<7x8xf32>
    %667 = arith.mulf %661, %5 : vector<7x8xf32>
    %668 = arith.addf %666, %667 : vector<7x8xf32>
    %669 = arith.mulf %656, %7 : vector<7x8xf32>
    %670 = arith.addf %668, %669 : vector<7x8xf32>
    %671 = arith.mulf %664, %9 : vector<7x8xf32>
    %672 = arith.addf %670, %671 : vector<7x8xf32>
    %673 = arith.mulf %655, %13 : vector<7x8xf32>
    %674 = arith.addf %11, %673 : vector<7x8xf32>
    %675 = arith.mulf %661, %15 : vector<7x8xf32>
    %676 = arith.addf %674, %675 : vector<7x8xf32>
    %677 = arith.mulf %656, %17 : vector<7x8xf32>
    %678 = arith.addf %676, %677 : vector<7x8xf32>
    %679 = arith.mulf %664, %19 : vector<7x8xf32>
    %680 = arith.addf %678, %679 : vector<7x8xf32>
    %681 = arith.mulf %22, %577 : vector<7x8xf32>
    %682 = arith.mulf %644, %681 : vector<7x8xf32>
    %683 = arith.addf %644, %682 : vector<7x8xf32>
    %684 = arith.mulf %22, %585 : vector<7x8xf32>
    %685 = arith.mulf %644, %684 : vector<7x8xf32>
    %686 = arith.addf %685, %652 : vector<7x8xf32>
    %687 = arith.mulf %22, %683 : vector<7x8xf32>
    %688 = arith.mulf %644, %687 : vector<7x8xf32>
    %689 = arith.addf %644, %688 : vector<7x8xf32>
    %690 = arith.mulf %22, %686 : vector<7x8xf32>
    %691 = arith.mulf %644, %690 : vector<7x8xf32>
    %692 = arith.addf %691, %652 : vector<7x8xf32>
    %693 = arith.mulf %20, %689 : vector<7x8xf32>
    %694 = arith.mulf %672, %693 : vector<7x8xf32>
    %695 = arith.addf %672, %694 : vector<7x8xf32>
    %696 = arith.mulf %20, %692 : vector<7x8xf32>
    %697 = arith.mulf %672, %696 : vector<7x8xf32>
    %698 = arith.addf %697, %680 : vector<7x8xf32>
    %cst_140 = arith.constant 2.000000e+00 : f32
    %699 = vector.broadcast %cst_140 : f32 to vector<7x8xf32>
    %700 = arith.mulf %699, %683 : vector<7x8xf32>
    %701 = arith.addf %577, %700 : vector<7x8xf32>
    %cst_141 = arith.constant 2.000000e+00 : f32
    %702 = vector.broadcast %cst_141 : f32 to vector<7x8xf32>
    %703 = arith.mulf %702, %689 : vector<7x8xf32>
    %704 = arith.addf %701, %703 : vector<7x8xf32>
    %705 = arith.addf %704, %695 : vector<7x8xf32>
    %706 = arith.mulf %24, %705 : vector<7x8xf32>
    %cst_142 = arith.constant 1.000000e+00 : f32
    %707 = vector.broadcast %cst_142 : f32 to vector<7x8xf32>
    %708 = arith.addf %707, %706 : vector<7x8xf32>
    %cst_143 = arith.constant 2.000000e+00 : f32
    %709 = vector.broadcast %cst_143 : f32 to vector<7x8xf32>
    %710 = arith.mulf %709, %686 : vector<7x8xf32>
    %711 = arith.addf %585, %710 : vector<7x8xf32>
    %cst_144 = arith.constant 2.000000e+00 : f32
    %712 = vector.broadcast %cst_144 : f32 to vector<7x8xf32>
    %713 = arith.mulf %712, %692 : vector<7x8xf32>
    %714 = arith.addf %711, %713 : vector<7x8xf32>
    %715 = arith.addf %714, %698 : vector<7x8xf32>
    %716 = arith.mulf %24, %715 : vector<7x8xf32>
    %717 = arith.mulf %708, %622 : vector<7x8xf32>
    %718 = arith.mulf %708, %624 : vector<7x8xf32>
    %719 = arith.addf %718, %716 : vector<7x8xf32>
    %c15 = arith.constant 15 : index
    %c0_145 = arith.constant 0 : index
    %c0_146 = arith.constant 0 : index
    %720 = vector.load %arg1[%c15, %c0_145, %c0_146] : memref<17x7x8xf32, #tpu.memory_space<vmem>>, vector<1x7x8xf32>
    %721 = vector.shape_cast %720 : vector<1x7x8xf32> to vector<7x8xf32>
    %722 = math.cos %721 : vector<7x8xf32>
    %723 = math.sin %721 : vector<7x8xf32>
    %cst_147 = arith.constant 2.000000e+00 : f32
    %724 = vector.broadcast %cst_147 : f32 to vector<7x8xf32>
    %725 = arith.mulf %724, %722 : vector<7x8xf32>
    %726 = arith.mulf %725, %722 : vector<7x8xf32>
    %cst_148 = arith.constant 1.000000e+00 : f32
    %727 = vector.broadcast %cst_148 : f32 to vector<7x8xf32>
    %728 = arith.subf %726, %727 : vector<7x8xf32>
    %cst_149 = arith.constant 2.000000e+00 : f32
    %729 = vector.broadcast %cst_149 : f32 to vector<7x8xf32>
    %730 = arith.mulf %729, %723 : vector<7x8xf32>
    %731 = arith.mulf %730, %722 : vector<7x8xf32>
    %732 = arith.mulf %722, %3 : vector<7x8xf32>
    %733 = arith.addf %1, %732 : vector<7x8xf32>
    %734 = arith.mulf %728, %5 : vector<7x8xf32>
    %735 = arith.addf %733, %734 : vector<7x8xf32>
    %736 = arith.mulf %723, %7 : vector<7x8xf32>
    %737 = arith.addf %735, %736 : vector<7x8xf32>
    %738 = arith.mulf %731, %9 : vector<7x8xf32>
    %739 = arith.addf %737, %738 : vector<7x8xf32>
    %740 = arith.mulf %722, %13 : vector<7x8xf32>
    %741 = arith.addf %11, %740 : vector<7x8xf32>
    %742 = arith.mulf %728, %15 : vector<7x8xf32>
    %743 = arith.addf %741, %742 : vector<7x8xf32>
    %744 = arith.mulf %723, %17 : vector<7x8xf32>
    %745 = arith.addf %743, %744 : vector<7x8xf32>
    %746 = arith.mulf %731, %19 : vector<7x8xf32>
    %747 = arith.addf %745, %746 : vector<7x8xf32>
    %c16 = arith.constant 16 : index
    %c0_150 = arith.constant 0 : index
    %c0_151 = arith.constant 0 : index
    %748 = vector.load %arg1[%c16, %c0_150, %c0_151] : memref<17x7x8xf32, #tpu.memory_space<vmem>>, vector<1x7x8xf32>
    %749 = vector.shape_cast %748 : vector<1x7x8xf32> to vector<7x8xf32>
    %750 = math.cos %749 : vector<7x8xf32>
    %751 = math.sin %749 : vector<7x8xf32>
    %cst_152 = arith.constant 2.000000e+00 : f32
    %752 = vector.broadcast %cst_152 : f32 to vector<7x8xf32>
    %753 = arith.mulf %752, %750 : vector<7x8xf32>
    %754 = arith.mulf %753, %750 : vector<7x8xf32>
    %cst_153 = arith.constant 1.000000e+00 : f32
    %755 = vector.broadcast %cst_153 : f32 to vector<7x8xf32>
    %756 = arith.subf %754, %755 : vector<7x8xf32>
    %cst_154 = arith.constant 2.000000e+00 : f32
    %757 = vector.broadcast %cst_154 : f32 to vector<7x8xf32>
    %758 = arith.mulf %757, %751 : vector<7x8xf32>
    %759 = arith.mulf %758, %750 : vector<7x8xf32>
    %760 = arith.mulf %750, %3 : vector<7x8xf32>
    %761 = arith.addf %1, %760 : vector<7x8xf32>
    %762 = arith.mulf %756, %5 : vector<7x8xf32>
    %763 = arith.addf %761, %762 : vector<7x8xf32>
    %764 = arith.mulf %751, %7 : vector<7x8xf32>
    %765 = arith.addf %763, %764 : vector<7x8xf32>
    %766 = arith.mulf %759, %9 : vector<7x8xf32>
    %767 = arith.addf %765, %766 : vector<7x8xf32>
    %768 = arith.mulf %750, %13 : vector<7x8xf32>
    %769 = arith.addf %11, %768 : vector<7x8xf32>
    %770 = arith.mulf %756, %15 : vector<7x8xf32>
    %771 = arith.addf %769, %770 : vector<7x8xf32>
    %772 = arith.mulf %751, %17 : vector<7x8xf32>
    %773 = arith.addf %771, %772 : vector<7x8xf32>
    %774 = arith.mulf %759, %19 : vector<7x8xf32>
    %775 = arith.addf %773, %774 : vector<7x8xf32>
    %776 = arith.mulf %22, %672 : vector<7x8xf32>
    %777 = arith.mulf %739, %776 : vector<7x8xf32>
    %778 = arith.addf %739, %777 : vector<7x8xf32>
    %779 = arith.mulf %22, %680 : vector<7x8xf32>
    %780 = arith.mulf %739, %779 : vector<7x8xf32>
    %781 = arith.addf %780, %747 : vector<7x8xf32>
    %782 = arith.mulf %22, %778 : vector<7x8xf32>
    %783 = arith.mulf %739, %782 : vector<7x8xf32>
    %784 = arith.addf %739, %783 : vector<7x8xf32>
    %785 = arith.mulf %22, %781 : vector<7x8xf32>
    %786 = arith.mulf %739, %785 : vector<7x8xf32>
    %787 = arith.addf %786, %747 : vector<7x8xf32>
    %788 = arith.mulf %20, %784 : vector<7x8xf32>
    %789 = arith.mulf %767, %788 : vector<7x8xf32>
    %790 = arith.addf %767, %789 : vector<7x8xf32>
    %791 = arith.mulf %20, %787 : vector<7x8xf32>
    %792 = arith.mulf %767, %791 : vector<7x8xf32>
    %793 = arith.addf %792, %775 : vector<7x8xf32>
    %cst_155 = arith.constant 2.000000e+00 : f32
    %794 = vector.broadcast %cst_155 : f32 to vector<7x8xf32>
    %795 = arith.mulf %794, %778 : vector<7x8xf32>
    %796 = arith.addf %672, %795 : vector<7x8xf32>
    %cst_156 = arith.constant 2.000000e+00 : f32
    %797 = vector.broadcast %cst_156 : f32 to vector<7x8xf32>
    %798 = arith.mulf %797, %784 : vector<7x8xf32>
    %799 = arith.addf %796, %798 : vector<7x8xf32>
    %800 = arith.addf %799, %790 : vector<7x8xf32>
    %801 = arith.mulf %24, %800 : vector<7x8xf32>
    %cst_157 = arith.constant 1.000000e+00 : f32
    %802 = vector.broadcast %cst_157 : f32 to vector<7x8xf32>
    %803 = arith.addf %802, %801 : vector<7x8xf32>
    %cst_158 = arith.constant 2.000000e+00 : f32
    %804 = vector.broadcast %cst_158 : f32 to vector<7x8xf32>
    %805 = arith.mulf %804, %781 : vector<7x8xf32>
    %806 = arith.addf %680, %805 : vector<7x8xf32>
    %cst_159 = arith.constant 2.000000e+00 : f32
    %807 = vector.broadcast %cst_159 : f32 to vector<7x8xf32>
    %808 = arith.mulf %807, %787 : vector<7x8xf32>
    %809 = arith.addf %806, %808 : vector<7x8xf32>
    %810 = arith.addf %809, %793 : vector<7x8xf32>
    %811 = arith.mulf %24, %810 : vector<7x8xf32>
    %812 = arith.mulf %803, %717 : vector<7x8xf32>
    %813 = arith.mulf %803, %719 : vector<7x8xf32>
    %814 = arith.addf %813, %811 : vector<7x8xf32>
    %c0_160 = arith.constant 0 : index
    %c0_161 = arith.constant 0 : index
    %815 = vector.load %arg6[%c0_160, %c0_161] : memref<7x8xf32, #tpu.memory_space<vmem>>, vector<7x8xf32>
    tpu.vector_store %arg6[%c0_160, %c0_161], %812 {strides = array<i32>} : memref<7x8xf32, #tpu.memory_space<vmem>>, vector<7x8xf32>,
    %c0_162 = arith.constant 0 : index
    %c0_163 = arith.constant 0 : index
    %816 = vector.load %arg7[%c0_162, %c0_163] : memref<7x8xf32, #tpu.memory_space<vmem>>, vector<7x8xf32>
    tpu.vector_store %arg7[%c0_162, %c0_163], %814 {strides = array<i32>} : memref<7x8xf32, #tpu.memory_space<vmem>>, vector<7x8xf32>,
    %c0_164 = arith.constant 0 : index
    %c0_165 = arith.constant 0 : index
    %817 = vector.load %arg4[%c0_164, %c0_165] : memref<1x8xf32, #tpu.memory_space<vmem>>, vector<1x8xf32>
    %c0_166 = arith.constant 0 : index
    %c0_167 = arith.constant 0 : index
    %818 = vector.load %arg6[%c0_166, %c0_167] : memref<7x8xf32, #tpu.memory_space<vmem>>, vector<1x8xf32>
    %819 = arith.mulf %818, %817 : vector<1x8xf32>
    %c0_168 = arith.constant 0 : index
    %c0_169 = arith.constant 0 : index
    %820 = vector.load %arg7[%c0_168, %c0_169] : memref<7x8xf32, #tpu.memory_space<vmem>>, vector<1x8xf32>
    %821 = arith.addf %819, %820 : vector<1x8xf32>
    %c1_170 = arith.constant 1 : index
    %c0_171 = arith.constant 0 : index
    %822 = vector.load %arg6[%c1_170, %c0_171] : memref<7x8xf32, #tpu.memory_space<vmem>>, vector<1x8xf32>
    %823 = arith.mulf %822, %821 : vector<1x8xf32>
    %c1_172 = arith.constant 1 : index
    %c0_173 = arith.constant 0 : index
    %824 = vector.load %arg7[%c1_172, %c0_173] : memref<7x8xf32, #tpu.memory_space<vmem>>, vector<1x8xf32>
    %825 = arith.addf %823, %824 : vector<1x8xf32>
    %c2_174 = arith.constant 2 : index
    %c0_175 = arith.constant 0 : index
    %826 = vector.load %arg6[%c2_174, %c0_175] : memref<7x8xf32, #tpu.memory_space<vmem>>, vector<1x8xf32>
    %827 = arith.mulf %826, %825 : vector<1x8xf32>
    %c2_176 = arith.constant 2 : index
    %c0_177 = arith.constant 0 : index
    %828 = vector.load %arg7[%c2_176, %c0_177] : memref<7x8xf32, #tpu.memory_space<vmem>>, vector<1x8xf32>
    %829 = arith.addf %827, %828 : vector<1x8xf32>
    %c3_178 = arith.constant 3 : index
    %c0_179 = arith.constant 0 : index
    %830 = vector.load %arg6[%c3_178, %c0_179] : memref<7x8xf32, #tpu.memory_space<vmem>>, vector<1x8xf32>
    %831 = arith.mulf %830, %829 : vector<1x8xf32>
    %c3_180 = arith.constant 3 : index
    %c0_181 = arith.constant 0 : index
    %832 = vector.load %arg7[%c3_180, %c0_181] : memref<7x8xf32, #tpu.memory_space<vmem>>, vector<1x8xf32>
    %833 = arith.addf %831, %832 : vector<1x8xf32>
    %c4_182 = arith.constant 4 : index
    %c0_183 = arith.constant 0 : index
    %834 = vector.load %arg6[%c4_182, %c0_183] : memref<7x8xf32, #tpu.memory_space<vmem>>, vector<1x8xf32>
    %835 = arith.mulf %834, %833 : vector<1x8xf32>
    %c4_184 = arith.constant 4 : index
    %c0_185 = arith.constant 0 : index
    %836 = vector.load %arg7[%c4_184, %c0_185] : memref<7x8xf32, #tpu.memory_space<vmem>>, vector<1x8xf32>
    %837 = arith.addf %835, %836 : vector<1x8xf32>
    %c5_186 = arith.constant 5 : index
    %c0_187 = arith.constant 0 : index
    %838 = vector.load %arg6[%c5_186, %c0_187] : memref<7x8xf32, #tpu.memory_space<vmem>>, vector<1x8xf32>
    %839 = arith.mulf %838, %837 : vector<1x8xf32>
    %c5_188 = arith.constant 5 : index
    %c0_189 = arith.constant 0 : index
    %840 = vector.load %arg7[%c5_188, %c0_189] : memref<7x8xf32, #tpu.memory_space<vmem>>, vector<1x8xf32>
    %841 = arith.addf %839, %840 : vector<1x8xf32>
    %c6_190 = arith.constant 6 : index
    %c0_191 = arith.constant 0 : index
    %842 = vector.load %arg6[%c6_190, %c0_191] : memref<7x8xf32, #tpu.memory_space<vmem>>, vector<1x8xf32>
    %843 = arith.mulf %842, %841 : vector<1x8xf32>
    %c6_192 = arith.constant 6 : index
    %c0_193 = arith.constant 0 : index
    %844 = vector.load %arg7[%c6_192, %c0_193] : memref<7x8xf32, #tpu.memory_space<vmem>>, vector<1x8xf32>
    %845 = arith.addf %843, %844 : vector<1x8xf32>
    %846 = tpu.concatenate %817, %821, %825, %829, %833, %837, %841, %845 in 0 : vector<1x8xf32>, vector<1x8xf32>, vector<1x8xf32>, vector<1x8xf32>, vector<1x8xf32>, vector<1x8xf32>, vector<1x8xf32>, vector<1x8xf32> -> vector<8x8xf32>
    %c0_194 = arith.constant 0 : index
    %c0_195 = arith.constant 0 : index
    %847 = vector.load %arg5[%c0_194, %c0_195] : memref<8x8xf32, #tpu.memory_space<vmem>>, vector<8x8xf32>
    tpu.vector_store %arg5[%c0_194, %c0_195], %846 {strides = array<i32>} : memref<8x8xf32, #tpu.memory_space<vmem>>, vector<8x8xf32>,
    return
  }
  func.func @transform_0(%arg0: i32) -> (i32, i32, i32) {
    %c0_i32 = arith.constant 0 : i32
    %c0_i32_0 = arith.constant 0 : i32
    %c0_i32_1 = arith.constant 0 : i32
    %c0_i32_2 = arith.constant 0 : i32
    return %c0_i32, %c0_i32_0, %c0_i32_1 : i32, i32, i32
  }
  func.func @transform_1(%arg0: i32) -> (i32, i32) {
    %c0_i32 = arith.constant 0 : i32
    %c0_i32_0 = arith.constant 0 : i32
    %c0_i32_1 = arith.constant 0 : i32
    return %c0_i32, %c0_i32_0 : i32, i32
  }
  func.func @transform_2(%arg0: i32) -> (i32, i32, i32) {
    %c0_i32 = arith.constant 0 : i32
    %c0_i32_0 = arith.constant 0 : i32
    %c0_i32_1 = arith.constant 0 : i32
    %c0_i32_2 = arith.constant 0 : i32
    return %c0_i32, %c0_i32_0, %c0_i32_1 : i32, i32, i32
  }
  func.func @transform_3(%arg0: i32) -> (i32, i32) {
    %c0_i32 = arith.constant 0 : i32
    %c0_i32_0 = arith.constant 0 : i32
    %c0_i32_1 = arith.constant 0 : i32
    return %c0_i32, %c0_i32_0 : i32, i32
  }
  func.func @transform_4(%arg0: i32) -> (i32, i32) {
    %c0_i32 = arith.constant 0 : i32
    %c0_i32_0 = arith.constant 0 : i32
    %c0_i32_1 = arith.constant 0 : i32
    return %c0_i32, %c0_i32_0 : i32, i32
  }
}

</mosaic_0001>

<llo_original>
// kernel: tpu_custom_call.1
$region0: #{tpu_custom_call.1}
  #allocation0 [shape = 'u32[]', space=smem, size = 0x4, offset = 0x4, fixed_abs, tag = 'smem constant byte address 0x4 - core index']
  #allocation1 [shape = 'u32[144,128]{1,0:T(1,128)}', space=vmem, size = 0x12000, scoped, tag = 'internal scratch']
  #allocation2 [shape = 'f32[7,8]{1,0:T(8,128)}', space=vmem, size = 0x1000, scoped, tag = 'scratch operand']
  #allocation3 [shape = 'f32[7,8]{1,0:T(8,128)}', space=vmem, size = 0x1000, scoped, tag = 'scratch operand']
  %s0 = inlined_call_operand.vmem [shape: f32[17,7,8], index: 0, kind: input, shape index: {}]
  %s1 = inlined_call_operand.vmem [shape: f32[7,8], index: 1, kind: input, shape index: {}]
  %s2 = inlined_call_operand.vmem [shape: f32[10,7,8], index: 2, kind: input, shape index: {}]
  %s3 = inlined_call_operand.vmem [shape: f32[1,8], index: 3, kind: input, shape index: {}]
  %s4 = inlined_call_operand.hbm [shape: f32[8,8], index: 4, kind: output, shape index: {}]
  %s5 = sld [smem:[#allocation0]]
  $region26: #{tpu_custom_call.1} parent=0
    _
  %s7 = ssub.s32 1, %s5
  %s8 = scalar_select 0, %s7, %s5
  $region1: #{tpu_custom_call.1} parent=0
    #allocation4 [shape = 'u8[4096]{0}', space=vmem, size = 0x1000, scoped, tag = 'output window, operand 0, single buffered']
    #allocation5 [shape = 's32[1]{0}', space=sflag, size = 0x4, scoped, tag = 'scoped memory for tpu_custom_call.1']
    %9 = vsyncpa [#allocation5], 0
    // Predicated region
    $region2: #{tpu_custom_call.1} parent=1 // pred_check
      _
    $region3: #{tpu_custom_call.1} parent=1 // pred_check_branch
      %11 = sbr.rel (0) target = $region5
    $region4: #{tpu_custom_call.1} parent=1 // pred_region
      _
    $region5: #{tpu_custom_call.1} parent=1 // pred_fallthru
      _
    // Predicated region
    $region6: #{tpu_custom_call.1} parent=1 // pred_check
      _
    $region7: #{tpu_custom_call.1} parent=1 // pred_check_branch
      %13 = sbr.rel (0) target = $region9
    $region8: #{tpu_custom_call.1} parent=1 // pred_region
      _
    $region9: #{tpu_custom_call.1} parent=1 // pred_fallthru
      _
    // Predicated region
    $region10: #{tpu_custom_call.1} parent=1 // pred_check
      _
    $region11: #{tpu_custom_call.1} parent=1 // pred_check_branch
      %15 = sbr.rel (0) target = $region13
    $region12: #{tpu_custom_call.1} parent=1 // pred_region
      _
    $region13: #{tpu_custom_call.1} parent=1 // pred_fallthru
      _
    // Predicated region
    $region14: #{tpu_custom_call.1} parent=1 // pred_check
      _
    $region15: #{tpu_custom_call.1} parent=1 // pred_check_branch
      %17 = sbr.rel (0) target = $region17
    $region16: #{tpu_custom_call.1} parent=1 // pred_region
      _
    $region17: #{tpu_custom_call.1} parent=1 // pred_fallthru
      _
    %v18 = vld [vmem:[%s2] sm:$0x7f]
    %s19 = scalar_lea.vmem %s2, 8
    %v20 = vld [vmem:[%s19] sm:$0x7f]
    %s21 = scalar_lea.vmem %s2, 16
    %v22 = vld [vmem:[%s21] sm:$0x7f]
    %s23 = scalar_lea.vmem %s2, 24
    %v24 = vld [vmem:[%s23] sm:$0x7f]
    %s25 = scalar_lea.vmem %s2, 32
    %v26 = vld [vmem:[%s25] sm:$0x7f]
    %s27 = scalar_lea.vmem %s2, 40
    %v28 = vld [vmem:[%s27] sm:$0x7f]
    %s29 = scalar_lea.vmem %s2, 48
    %v30 = vld [vmem:[%s29] sm:$0x7f]
    %s31 = scalar_lea.vmem %s2, 56
    %v32 = vld [vmem:[%s31] sm:$0x7f]
    %s33 = scalar_lea.vmem %s2, 64
    %v34 = vld [vmem:[%s33] sm:$0x7f]
    %s35 = scalar_lea.vmem %s2, 72
    %v36 = vld [vmem:[%s35] sm:$0x7f]
    %v37 = vld [vmem:[%s1] sm:$0x7f]
    %v38 = vmul.f32 %v37, 0.5
    %v39 = vmul.f32 %v37, 0.16666667
    %v40 = vld [vmem:[%s0] sm:$0x7f]
    %v41 = vand.u32 2147483647, %v40
    %vm42 = vcmp.le.f32.partialorder %v41, 0.7853982
    %vm43 = vcmp.lt.s32.totalorder %v40, 0
    %v44 = vand.u32 %v40, 2139095040
    %v45 = vshrl.u32 %v44, 23
    %v46 = vsub.s32 %v45, 127
    %v47 = vand.u32 2147483647, %v40
    %v48 = vand.u32 %v47, 8388607
    %v49 = vor.u32 %v48, 8388608
    %v50 = vsub.s32 0, %v49
    %v51 = vadd.s32 %v46, 1
    %vm52 = vcmp.gt.s32.totalorder %v51, 0
    %v53 = vsel %vm52, %v51, 0
    %v54 = vshrl.u32 %v53, 5
    %v55 = vand.u32 %v53, 31
    %v56 = vsub.s32 32, %v55
    %v57 = vshrl.u32 683565275, %v56
    %v58 = vshll.u32 683565275, %v55
    %v59 = vshrl.u32 2475754826, %v56
    %v60 = vor.u32 %v58, %v59
    %v61 = vshll.u32 2475754826, %v55
    %v62 = vshrl.u32 2131351028, %v56
    %v63 = vor.u32 %v61, %v62
    %v64 = vshll.u32 2131351028, %v55
    %v65 = vshrl.u32 2102212464, %v56
    %v66 = vor.u32 %v64, %v65
    %v67 = vshll.u32 2102212464, %v55
    %v68 = vshrl.u32 920167782, %v56
    %v69 = vor.u32 %v67, %v68
    %v70 = vshll.u32 920167782, %v55
    %v71 = vshrl.u32 1326507024, %v56
    %v72 = vor.u32 %v70, %v71
    %vm73 = vcmp.lt.s32.totalorder %v54, 1
    %vm74 = vcmp.lt.s32.totalorder %v54, 2
    %vm75 = vcmp.lt.s32.totalorder %v54, 3
    %vm76 = vcmp.lt.s32.totalorder %v54, 4
    %v77 = vsel %vm73, %v57, %v60
    %v78 = vsel %vm76, %v66, 2102212464
    %v79 = vsel %vm75, %v63, %v78
    %v80 = vsel %vm74, %v77, %v79
    %v81 = vsel %vm73, %v60, %v63
    %v82 = vsel %vm76, %v69, 920167782
    %v83 = vsel %vm75, %v66, %v82
    %v84 = vsel %vm74, %v81, %v83
    %v85 = vsel %vm73, %v63, %v66
    %v86 = vsel %vm76, %v72, 1326507024
    %v87 = vsel %vm75, %v69, %v86
    %v88 = vsel %vm74, %v85, %v87
    %v89 = vshll.u32 %v49, 8
    %v90 = vmul.u32.u64.compose %v89, %v88
    %v91 = vextract.low.u32 %v90
    %v92 = vextract.high.u32 %v90
    %v93 = vmul.u32.u64.compose %v89, %v84
    %v94 = vextract.low.u32 %v93
    %v95 = vextract.high.u32 %v93
    %v96 = vmul.u32 %v89, %v80
    %v97 = vadd.s32 %v92, %v94
    %vm98 = vc.u32 %v92, %v94
    %v99 = vadd.s32 %v95, 1
    %v100 = vsel %vm98, %v99, %v95
    %v101 = vadd.s32 %v96, %v100
    %v102 = vadd.s32 %v101, 536870912
    %v103 = vshrl.u32 %v102, 30
    %v104 = vshll.u32 %v103, 30
    %v105 = vsub.s32 %v101, %v104
    %vm106 = vcmp.lt.s32.totalorder %v105, 0
    %v107 = vsub.s32 0, %v105
    %v108 = vsel %vm106, %v107, %v105
    %v109 = vclz %v108
    %v110 = vsub.s32 %v109, 2
    %vm111 = vcmp.gt.s32.totalorder 0, %v110
    %v112 = vsel %vm111, 0, %v110
    %v113 = vsub.s32 32, %v112
    %v114 = vshll.u32 %v105, %v112
    %v115 = vshrl.u32 %v97, %v113
    %v116 = vor.u32 %v114, %v115
    %v117 = vsub.s32 4294967266, %v112
    %v118 = vadd.s32 %v117, 127
    %v119 = vshll.u32 %v118, 23
    %v120 = vor.u32 4788187, %v119
    %v121 = vand.u32 2147483647, %v120
    %v123 = vcvt.s32.f32 %v116
    %v124 = vmul.f32 %v123, %v121
    %v125 = vxor.u32 %v124, 2147483648
    %v126 = vsel %vm43, %v125, %v124
    %v127 = vsub.s32 4, %v103
    %v128 = vsel %vm43, %v127, %v103
    %v129 = vsel %vm42, %v40, %v126
    %v130 = vsel %vm42, 0, %v128
    %v131 = vcosq.f32.pop %v129
    %v132 = vsinq.f32.pop %v129
    %vm133 = vweird.f32 %v40
    %v134 = vand.u32 %v130, 3
    %vm135 = vcmp.lt.s32.totalorder %v134, 2
    %vm136 = vcmp.eq.s32.totalorder %v134, 0
    %v137 = vxor.u32 %v132, 2147483648
    %v138 = vsel %vm136, %v131, %v137
    %vm139 = vcmp.eq.s32.totalorder %v134, 2
    %v140 = vxor.u32 %v131, 2147483648
    %v141 = vsel %vm139, %v140, %v132
    %v142 = vsel %vm135, %v138, %v141
    %v143 = vsel %vm133, nan, %v142
    %v144 = vand.u32 2147483647, %v40
    %vm145 = vcmp.le.f32.partialorder %v144, 0.7853982
    %vm146 = vcmp.lt.s32.totalorder %v40, 0
    %v147 = vand.u32 %v40, 2139095040
    %v148 = vshrl.u32 %v147, 23
    %v149 = vsub.s32 %v148, 127
    %v150 = vand.u32 2147483647, %v40
    %v151 = vand.u32 %v150, 8388607
    %v152 = vor.u32 %v151, 8388608
    %v153 = vsub.s32 0, %v152
    %v154 = vadd.s32 %v149, 1
    %vm155 = vcmp.gt.s32.totalorder %v154, 0
    %v156 = vsel %vm155, %v154, 0
    %v157 = vshrl.u32 %v156, 5
    %v158 = vand.u32 %v156, 31
    %v159 = vsub.s32 32, %v158
    %v160 = vshrl.u32 683565275, %v159
    %v161 = vshll.u32 683565275, %v158
    %v162 = vshrl.u32 2475754826, %v159
    %v163 = vor.u32 %v161, %v162
    %v164 = vshll.u32 2475754826, %v158
    %v165 = vshrl.u32 2131351028, %v159
    %v166 = vor.u32 %v164, %v165
    %v167 = vshll.u32 2131351028, %v158
    %v168 = vshrl.u32 2102212464, %v159
    %v169 = vor.u32 %v167, %v168
    %v170 = vshll.u32 2102212464, %v158
    %v171 = vshrl.u32 920167782, %v159
    %v172 = vor.u32 %v170, %v171
    %v173 = vshll.u32 920167782, %v158
    %v174 = vshrl.u32 1326507024, %v159
    %v175 = vor.u32 %v173, %v174
    %vm176 = vcmp.lt.s32.totalorder %v157, 1
    %vm177 = vcmp.lt.s32.totalorder %v157, 2
    %vm178 = vcmp.lt.s32.totalorder %v157, 3
    %vm179 = vcmp.lt.s32.totalorder %v157, 4
    %v180 = vsel %vm176, %v160, %v163
    %v181 = vsel %vm179, %v169, 2102212464
    %v182 = vsel %vm178, %v166, %v181
    %v183 = vsel %vm177, %v180, %v182
    %v184 = vsel %vm176, %v163, %v166
    %v185 = vsel %vm179, %v172, 920167782
    %v186 = vsel %vm178, %v169, %v185
    %v187 = vsel %vm177, %v184, %v186
    %v188 = vsel %vm176, %v166, %v169
    %v189 = vsel %vm179, %v175, 1326507024
    %v190 = vsel %vm178, %v172, %v189
    %v191 = vsel %vm177, %v188, %v190
    %v192 = vshll.u32 %v152, 8
    %v193 = vmul.u32.u64.compose %v192, %v191
    %v194 = vextract.low.u32 %v193
    %v195 = vextract.high.u32 %v193
    %v196 = vmul.u32.u64.compose %v192, %v187
    %v197 = vextract.low.u32 %v196
    %v198 = vextract.high.u32 %v196
    %v199 = vmul.u32 %v192, %v183
    %v200 = vadd.s32 %v195, %v197
    %vm201 = vc.u32 %v195, %v197
    %v202 = vadd.s32 %v198, 1
    %v203 = vsel %vm201, %v202, %v198
    %v204 = vadd.s32 %v199, %v203
    %v205 = vadd.s32 %v204, 536870912
    %v206 = vshrl.u32 %v205, 30
    %v207 = vshll.u32 %v206, 30
    %v208 = vsub.s32 %v204, %v207
    %vm209 = vcmp.lt.s32.totalorder %v208, 0
    %v210 = vsub.s32 0, %v208
    %v211 = vsel %vm209, %v210, %v208
    %v212 = vclz %v211
    %v213 = vsub.s32 %v212, 2
    %vm214 = vcmp.gt.s32.totalorder 0, %v213
    %v215 = vsel %vm214, 0, %v213
    %v216 = vsub.s32 32, %v215
    %v217 = vshll.u32 %v208, %v215
    %v218 = vshrl.u32 %v200, %v216
    %v219 = vor.u32 %v217, %v218
    %v220 = vsub.s32 4294967266, %v215
    %v221 = vadd.s32 %v220, 127
    %v222 = vshll.u32 %v221, 23
    %v223 = vor.u32 4788187, %v222
    %v224 = vand.u32 2147483647, %v223
    %v226 = vcvt.s32.f32 %v219
    %v227 = vmul.f32 %v226, %v224
    %v228 = vxor.u32 %v227, 2147483648
    %v229 = vsel %vm146, %v228, %v227
    %v230 = vsub.s32 4, %v206
    %v231 = vsel %vm146, %v230, %v206
    %v232 = vsel %vm145, %v40, %v229
    %v233 = vsel %vm145, 0, %v231
    %v234 = vcosq.f32.pop %v232
    %v235 = vsinq.f32.pop %v232
    %vm236 = vweird.f32 %v40
    %v237 = vadd.s32 %v233, 3
    %v238 = vand.u32 %v237, 3
    %vm239 = vcmp.lt.s32.totalorder %v238, 2
    %vm240 = vcmp.eq.s32.totalorder %v238, 0
    %v241 = vxor.u32 %v235, 2147483648
    %v242 = vsel %vm240, %v234, %v241
    %vm243 = vcmp.eq.s32.totalorder %v238, 2
    %v244 = vxor.u32 %v234, 2147483648
    %v245 = vsel %vm243, %v244, %v235
    %v246 = vsel %vm239, %v242, %v245
    %v247 = vsel %vm236, nan, %v246
    %v248 = vmul.f32 %v143, 2.0
    %v249 = vmul.f32 %v248, %v143
    %v250 = vsub.f32 %v249, 1.0
    %v251 = vmul.f32 %v247, 2.0
    %v252 = vmul.f32 %v251, %v143
    %v253 = vmul.f32 %v143, %v20
    %v254 = vadd.f32 %v18, %v253
    %v255 = vmul.f32 %v250, %v22
    %v256 = vadd.f32 %v254, %v255
    %v257 = vmul.f32 %v247, %v24
    %v258 = vadd.f32 %v256, %v257
    %v259 = vmul.f32 %v252, %v26
    %v260 = vadd.f32 %v258, %v259
    %v261 = vmul.f32 %v143, %v30
    %v262 = vadd.f32 %v28, %v261
    %v263 = vmul.f32 %v250, %v32
    %v264 = vadd.f32 %v262, %v263
    %v265 = vmul.f32 %v247, %v34
    %v266 = vadd.f32 %v264, %v265
    %v267 = vmul.f32 %v252, %v36
    %v268 = vadd.f32 %v266, %v267
    %s269 = scalar_lea.vmem %s0, 8
    %v270 = vld [vmem:[%s269] sm:$0x7f]
    %v271 = vand.u32 2147483647, %v270
    %vm272 = vcmp.le.f32.partialorder %v271, 0.7853982
    %vm273 = vcmp.lt.s32.totalorder %v270, 0
    %v274 = vand.u32 %v270, 2139095040
    %v275 = vshrl.u32 %v274, 23
    %v276 = vsub.s32 %v275, 127
    %v277 = vand.u32 2147483647, %v270
    %v278 = vand.u32 %v277, 8388607
    %v279 = vor.u32 %v278, 8388608
    %v280 = vsub.s32 0, %v279
    %v281 = vadd.s32 %v276, 1
    %vm282 = vcmp.gt.s32.totalorder %v281, 0
    %v283 = vsel %vm282, %v281, 0
    %v284 = vshrl.u32 %v283, 5
    %v285 = vand.u32 %v283, 31
    %v286 = vsub.s32 32, %v285
    %v287 = vshrl.u32 683565275, %v286
    %v288 = vshll.u32 683565275, %v285
    %v289 = vshrl.u32 2475754826, %v286
    %v290 = vor.u32 %v288, %v289
    %v291 = vshll.u32 2475754826, %v285
    %v292 = vshrl.u32 2131351028, %v286
    %v293 = vor.u32 %v291, %v292
    %v294 = vshll.u32 2131351028, %v285
    %v295 = vshrl.u32 2102212464, %v286
    %v296 = vor.u32 %v294, %v295
    %v297 = vshll.u32 2102212464, %v285
    %v298 = vshrl.u32 920167782, %v286
    %v299 = vor.u32 %v297, %v298
    %v300 = vshll.u32 920167782, %v285
    %v301 = vshrl.u32 1326507024, %v286
    %v302 = vor.u32 %v300, %v301
    %vm303 = vcmp.lt.s32.totalorder %v284, 1
    %vm304 = vcmp.lt.s32.totalorder %v284, 2
    %vm305 = vcmp.lt.s32.totalorder %v284, 3
    %vm306 = vcmp.lt.s32.totalorder %v284, 4
    %v307 = vsel %vm303, %v287, %v290
    %v308 = vsel %vm306, %v296, 2102212464
    %v309 = vsel %vm305, %v293, %v308
    %v310 = vsel %vm304, %v307, %v309
    %v311 = vsel %vm303, %v290, %v293
    %v312 = vsel %vm306, %v299, 920167782
    %v313 = vsel %vm305, %v296, %v312
    %v314 = vsel %vm304, %v311, %v313
    %v315 = vsel %vm303, %v293, %v296
    %v316 = vsel %vm306, %v302, 1326507024
    %v317 = vsel %vm305, %v299, %v316
    %v318 = vsel %vm304, %v315, %v317
    %v319 = vshll.u32 %v279, 8
    %v320 = vmul.u32.u64.compose %v319, %v318
    %v321 = vextract.low.u32 %v320
    %v322 = vextract.high.u32 %v320
    %v323 = vmul.u32.u64.compose %v319, %v314
    %v324 = vextract.low.u32 %v323
    %v325 = vextract.high.u32 %v323
    %v326 = vmul.u32 %v319, %v310
    %v327 = vadd.s32 %v322, %v324
    %vm328 = vc.u32 %v322, %v324
    %v329 = vadd.s32 %v325, 1
    %v330 = vsel %vm328, %v329, %v325
    %v331 = vadd.s32 %v326, %v330
    %v332 = vadd.s32 %v331, 536870912
    %v333 = vshrl.u32 %v332, 30
    %v334 = vshll.u32 %v333, 30
    %v335 = vsub.s32 %v331, %v334
    %vm336 = vcmp.lt.s32.totalorder %v335, 0
    %v337 = vsub.s32 0, %v335
    %v338 = vsel %vm336, %v337, %v335
    %v339 = vclz %v338
    %v340 = vsub.s32 %v339, 2
    %vm341 = vcmp.gt.s32.totalorder 0, %v340
    %v342 = vsel %vm341, 0, %v340
    %v343 = vsub.s32 32, %v342
    %v344 = vshll.u32 %v335, %v342
    %v345 = vshrl.u32 %v327, %v343
    %v346 = vor.u32 %v344, %v345
    %v347 = vsub.s32 4294967266, %v342
    %v348 = vadd.s32 %v347, 127
    %v349 = vshll.u32 %v348, 23
    %v350 = vor.u32 4788187, %v349
    %v351 = vand.u32 2147483647, %v350
    %v353 = vcvt.s32.f32 %v346
    %v354 = vmul.f32 %v353, %v351
    %v355 = vxor.u32 %v354, 2147483648
    %v356 = vsel %vm273, %v355, %v354
    %v357 = vsub.s32 4, %v333
    %v358 = vsel %vm273, %v357, %v333
    %v359 = vsel %vm272, %v270, %v356
    %v360 = vsel %vm272, 0, %v358
    %v361 = vcosq.f32.pop %v359
    %v362 = vsinq.f32.pop %v359
    %vm363 = vweird.f32 %v270
    %v364 = vand.u32 %v360, 3
    %vm365 = vcmp.lt.s32.totalorder %v364, 2
    %vm366 = vcmp.eq.s32.totalorder %v364, 0
    %v367 = vxor.u32 %v362, 2147483648
    %v368 = vsel %vm366, %v361, %v367
    %vm369 = vcmp.eq.s32.totalorder %v364, 2
    %v370 = vxor.u32 %v361, 2147483648
    %v371 = vsel %vm369, %v370, %v362
    %v372 = vsel %vm365, %v368, %v371
    %v373 = vsel %vm363, nan, %v372
    %v374 = vand.u32 2147483647, %v270
    %vm375 = vcmp.le.f32.partialorder %v374, 0.7853982
    %vm376 = vcmp.lt.s32.totalorder %v270, 0
    %v377 = vand.u32 %v270, 2139095040
    %v378 = vshrl.u32 %v377, 23
    %v379 = vsub.s32 %v378, 127
    %v380 = vand.u32 2147483647, %v270
    %v381 = vand.u32 %v380, 8388607
    %v382 = vor.u32 %v381, 8388608
    %v383 = vsub.s32 0, %v382
    %v384 = vadd.s32 %v379, 1
    %vm385 = vcmp.gt.s32.totalorder %v384, 0
    %v386 = vsel %vm385, %v384, 0
    %v387 = vshrl.u32 %v386, 5
    %v388 = vand.u32 %v386, 31
    %v389 = vsub.s32 32, %v388
    %v390 = vshrl.u32 683565275, %v389
    %v391 = vshll.u32 683565275, %v388
    %v392 = vshrl.u32 2475754826, %v389
    %v393 = vor.u32 %v391, %v392
    %v394 = vshll.u32 2475754826, %v388
    %v395 = vshrl.u32 2131351028, %v389
    %v396 = vor.u32 %v394, %v395
    %v397 = vshll.u32 2131351028, %v388
    %v398 = vshrl.u32 2102212464, %v389
    %v399 = vor.u32 %v397, %v398
    %v400 = vshll.u32 2102212464, %v388
    %v401 = vshrl.u32 920167782, %v389
    %v402 = vor.u32 %v400, %v401
    %v403 = vshll.u32 920167782, %v388
    %v404 = vshrl.u32 1326507024, %v389
    %v405 = vor.u32 %v403, %v404
    %vm406 = vcmp.lt.s32.totalorder %v387, 1
    %vm407 = vcmp.lt.s32.totalorder %v387, 2
    %vm408 = vcmp.lt.s32.totalorder %v387, 3
    %vm409 = vcmp.lt.s32.totalorder %v387, 4
    %v410 = vsel %vm406, %v390, %v393
    %v411 = vsel %vm409, %v399, 2102212464
    %v412 = vsel %vm408, %v396, %v411
    %v413 = vsel %vm407, %v410, %v412
    %v414 = vsel %vm406, %v393, %v396
    %v415 = vsel %vm409, %v402, 920167782
    %v416 = vsel %vm408, %v399, %v415
    %v417 = vsel %vm407, %v414, %v416
    %v418 = vsel %vm406, %v396, %v399
    %v419 = vsel %vm409, %v405, 1326507024
    %v420 = vsel %vm408, %v402, %v419
    %v421 = vsel %vm407, %v418, %v420
    %v422 = vshll.u32 %v382, 8
    %v423 = vmul.u32.u64.compose %v422, %v421
    %v424 = vextract.low.u32 %v423
    %v425 = vextract.high.u32 %v423
    %v426 = vmul.u32.u64.compose %v422, %v417
    %v427 = vextract.low.u32 %v426
    %v428 = vextract.high.u32 %v426
    %v429 = vmul.u32 %v422, %v413
    %v430 = vadd.s32 %v425, %v427
    %vm431 = vc.u32 %v425, %v427
    %v432 = vadd.s32 %v428, 1
    %v433 = vsel %vm431, %v432, %v428
    %v434 = vadd.s32 %v429, %v433
    %v435 = vadd.s32 %v434, 536870912
    %v436 = vshrl.u32 %v435, 30
    %v437 = vshll.u32 %v436, 30
    %v438 = vsub.s32 %v434, %v437
    %vm439 = vcmp.lt.s32.totalorder %v438, 0
    %v440 = vsub.s32 0, %v438
    %v441 = vsel %vm439, %v440, %v438
    %v442 = vclz %v441
    %v443 = vsub.s32 %v442, 2
    %vm444 = vcmp.gt.s32.totalorder 0, %v443
    %v445 = vsel %vm444, 0, %v443
    %v446 = vsub.s32 32, %v445
    %v447 = vshll.u32 %v438, %v445
    %v448 = vshrl.u32 %v430, %v446
    %v449 = vor.u32 %v447, %v448
    %v450 = vsub.s32 4294967266, %v445
    %v451 = vadd.s32 %v450, 127
    %v452 = vshll.u32 %v451, 23
    %v453 = vor.u32 4788187, %v452
    %v454 = vand.u32 2147483647, %v453
    %v456 = vcvt.s32.f32 %v449
    %v457 = vmul.f32 %v456, %v454
    %v458 = vxor.u32 %v457, 2147483648
    %v459 = vsel %vm376, %v458, %v457
    %v460 = vsub.s32 4, %v436
    %v461 = vsel %vm376, %v460, %v436
    %v462 = vsel %vm375, %v270, %v459
    %v463 = vsel %vm375, 0, %v461
    %v464 = vcosq.f32.pop %v462
    %v465 = vsinq.f32.pop %v462
    %vm466 = vweird.f32 %v270
    %v467 = vadd.s32 %v463, 3
    %v468 = vand.u32 %v467, 3
    %vm469 = vcmp.lt.s32.totalorder %v468, 2
    %vm470 = vcmp.eq.s32.totalorder %v468, 0
    %v471 = vxor.u32 %v465, 2147483648
    %v472 = vsel %vm470, %v464, %v471
    %vm473 = vcmp.eq.s32.totalorder %v468, 2
    %v474 = vxor.u32 %v464, 2147483648
    %v475 = vsel %vm473, %v474, %v465
    %v476 = vsel %vm469, %v472, %v475
    %v477 = vsel %vm466, nan, %v476
    %v478 = vmul.f32 %v373, 2.0
    %v479 = vmul.f32 %v478, %v373
    %v480 = vsub.f32 %v479, 1.0
    %v481 = vmul.f32 %v477, 2.0
    %v482 = vmul.f32 %v481, %v373
    %v483 = vmul.f32 %v373, %v20
    %v484 = vadd.f32 %v18, %v483
    %v485 = vmul.f32 %v480, %v22
    %v486 = vadd.f32 %v484, %v485
    %v487 = vmul.f32 %v477, %v24
    %v488 = vadd.f32 %v486, %v487
    %v489 = vmul.f32 %v482, %v26
    %v490 = vadd.f32 %v488, %v489
    %v491 = vmul.f32 %v373, %v30
    %v492 = vadd.f32 %v28, %v491
    %v493 = vmul.f32 %v480, %v32
    %v494 = vadd.f32 %v492, %v493
    %v495 = vmul.f32 %v477, %v34
    %v496 = vadd.f32 %v494, %v495
    %v497 = vmul.f32 %v482, %v36
    %v498 = vadd.f32 %v496, %v497
    %s499 = scalar_lea.vmem %s0, 16
    %v500 = vld [vmem:[%s499] sm:$0x7f]
    %v501 = vand.u32 2147483647, %v500
    %vm502 = vcmp.le.f32.partialorder %v501, 0.7853982
    %vm503 = vcmp.lt.s32.totalorder %v500, 0
    %v504 = vand.u32 %v500, 2139095040
    %v505 = vshrl.u32 %v504, 23
    %v506 = vsub.s32 %v505, 127
    %v507 = vand.u32 2147483647, %v500
    %v508 = vand.u32 %v507, 8388607
    %v509 = vor.u32 %v508, 8388608
    %v510 = vsub.s32 0, %v509
    %v511 = vadd.s32 %v506, 1
    %vm512 = vcmp.gt.s32.totalorder %v511, 0
    %v513 = vsel %vm512, %v511, 0
    %v514 = vshrl.u32 %v513, 5
    %v515 = vand.u32 %v513, 31
    %v516 = vsub.s32 32, %v515
    %v517 = vshrl.u32 683565275, %v516
    %v518 = vshll.u32 683565275, %v515
    %v519 = vshrl.u32 2475754826, %v516
    %v520 = vor.u32 %v518, %v519
    %v521 = vshll.u32 2475754826, %v515
    %v522 = vshrl.u32 2131351028, %v516
    %v523 = vor.u32 %v521, %v522
    %v524 = vshll.u32 2131351028, %v515
    %v525 = vshrl.u32 2102212464, %v516
    %v526 = vor.u32 %v524, %v525
    %v527 = vshll.u32 2102212464, %v515
    %v528 = vshrl.u32 920167782, %v516
    %v529 = vor.u32 %v527, %v528
    %v530 = vshll.u32 920167782, %v515
    %v531 = vshrl.u32 1326507024, %v516
    %v532 = vor.u32 %v530, %v531
    %vm533 = vcmp.lt.s32.totalorder %v514, 1
    %vm534 = vcmp.lt.s32.totalorder %v514, 2
    %vm535 = vcmp.lt.s32.totalorder %v514, 3
    %vm536 = vcmp.lt.s32.totalorder %v514, 4
    %v537 = vsel %vm533, %v517, %v520
    %v538 = vsel %vm536, %v526, 2102212464
    %v539 = vsel %vm535, %v523, %v538
    %v540 = vsel %vm534, %v537, %v539
    %v541 = vsel %vm533, %v520, %v523
    %v542 = vsel %vm536, %v529, 920167782
    %v543 = vsel %vm535, %v526, %v542
    %v544 = vsel %vm534, %v541, %v543
    %v545 = vsel %vm533, %v523, %v526
    %v546 = vsel %vm536, %v532, 1326507024
    %v547 = vsel %vm535, %v529, %v546
    %v548 = vsel %vm534, %v545, %v547
    %v549 = vshll.u32 %v509, 8
    %v550 = vmul.u32.u64.compose %v549, %v548
    %v551 = vextract.low.u32 %v550
    %v552 = vextract.high.u32 %v550
    %v553 = vmul.u32.u64.compose %v549, %v544
    %v554 = vextract.low.u32 %v553
    %v555 = vextract.high.u32 %v553
    %v556 = vmul.u32 %v549, %v540
    %v557 = vadd.s32 %v552, %v554
    %vm558 = vc.u32 %v552, %v554
    %v559 = vadd.s32 %v555, 1
    %v560 = vsel %vm558, %v559, %v555
    %v561 = vadd.s32 %v556, %v560
    %v562 = vadd.s32 %v561, 536870912
    %v563 = vshrl.u32 %v562, 30
    %v564 = vshll.u32 %v563, 30
    %v565 = vsub.s32 %v561, %v564
    %vm566 = vcmp.lt.s32.totalorder %v565, 0
    %v567 = vsub.s32 0, %v565
    %v568 = vsel %vm566, %v567, %v565
    %v569 = vclz %v568
    %v570 = vsub.s32 %v569, 2
    %vm571 = vcmp.gt.s32.totalorder 0, %v570
    %v572 = vsel %vm571, 0, %v570
    %v573 = vsub.s32 32, %v572
    %v574 = vshll.u32 %v565, %v572
    %v575 = vshrl.u32 %v557, %v573
    %v576 = vor.u32 %v574, %v575
    %v577 = vsub.s32 4294967266, %v572
    %v578 = vadd.s32 %v577, 127
    %v579 = vshll.u32 %v578, 23
    %v580 = vor.u32 4788187, %v579
    %v581 = vand.u32 2147483647, %v580
    %v583 = vcvt.s32.f32 %v576
    %v584 = vmul.f32 %v583, %v581
    %v585 = vxor.u32 %v584, 2147483648
    %v586 = vsel %vm503, %v585, %v584
    %v587 = vsub.s32 4, %v563
    %v588 = vsel %vm503, %v587, %v563
    %v589 = vsel %vm502, %v500, %v586
    %v590 = vsel %vm502, 0, %v588
    %v591 = vcosq.f32.pop %v589
    %v592 = vsinq.f32.pop %v589
    %vm593 = vweird.f32 %v500
    %v594 = vand.u32 %v590, 3
    %vm595 = vcmp.lt.s32.totalorder %v594, 2
    %vm596 = vcmp.eq.s32.totalorder %v594, 0
    %v597 = vxor.u32 %v592, 2147483648
    %v598 = vsel %vm596, %v591, %v597
    %vm599 = vcmp.eq.s32.totalorder %v594, 2
    %v600 = vxor.u32 %v591, 2147483648
    %v601 = vsel %vm599, %v600, %v592
    %v602 = vsel %vm595, %v598, %v601
    %v603 = vsel %vm593, nan, %v602
    %v604 = vand.u32 2147483647, %v500
    %vm605 = vcmp.le.f32.partialorder %v604, 0.7853982
    %vm606 = vcmp.lt.s32.totalorder %v500, 0
    %v607 = vand.u32 %v500, 2139095040
    %v608 = vshrl.u32 %v607, 23
    %v609 = vsub.s32 %v608, 127
    %v610 = vand.u32 2147483647, %v500
    %v611 = vand.u32 %v610, 8388607
    %v612 = vor.u32 %v611, 8388608
    %v613 = vsub.s32 0, %v612
    %v614 = vadd.s32 %v609, 1
    %vm615 = vcmp.gt.s32.totalorder %v614, 0
    %v616 = vsel %vm615, %v614, 0
    %v617 = vshrl.u32 %v616, 5
    %v618 = vand.u32 %v616, 31
    %v619 = vsub.s32 32, %v618
    %v620 = vshrl.u32 683565275, %v619
    %v621 = vshll.u32 683565275, %v618
    %v622 = vshrl.u32 2475754826, %v619
    %v623 = vor.u32 %v621, %v622
    %v624 = vshll.u32 2475754826, %v618
    %v625 = vshrl.u32 2131351028, %v619
    %v626 = vor.u32 %v624, %v625
    %v627 = vshll.u32 2131351028, %v618
    %v628 = vshrl.u32 2102212464, %v619
    %v629 = vor.u32 %v627, %v628
    %v630 = vshll.u32 2102212464, %v618
    %v631 = vshrl.u32 920167782, %v619
    %v632 = vor.u32 %v630, %v631
    %v633 = vshll.u32 920167782, %v618
    %v634 = vshrl.u32 1326507024, %v619
    %v635 = vor.u32 %v633, %v634
    %vm636 = vcmp.lt.s32.totalorder %v617, 1
    %vm637 = vcmp.lt.s32.totalorder %v617, 2
    %vm638 = vcmp.lt.s32.totalorder %v617, 3
    %vm639 = vcmp.lt.s32.totalorder %v617, 4
    %v640 = vsel %vm636, %v620, %v623
    %v641 = vsel %vm639, %v629, 2102212464
    %v642 = vsel %vm638, %v626, %v641
    %v643 = vsel %vm637, %v640, %v642
    %v644 = vsel %vm636, %v623, %v626
    %v645 = vsel %vm639, %v632, 920167782
    %v646 = vsel %vm638, %v629, %v645
    %v647 = vsel %vm637, %v644, %v646
    %v648 = vsel %vm636, %v626, %v629
    %v649 = vsel %vm639, %v635, 1326507024
    %v650 = vsel %vm638, %v632, %v649
    %v651 = vsel %vm637, %v648, %v650
    %v652 = vshll.u32 %v612, 8
    %v653 = vmul.u32.u64.compose %v652, %v651
    %v654 = vextract.low.u32 %v653
    %v655 = vextract.high.u32 %v653
    %v656 = vmul.u32.u64.compose %v652, %v647
    %v657 = vextract.low.u32 %v656
    %v658 = vextract.high.u32 %v656
    %v659 = vmul.u32 %v652, %v643
    %v660 = vadd.s32 %v655, %v657
    %vm661 = vc.u32 %v655, %v657
    %v662 = vadd.s32 %v658, 1
    %v663 = vsel %vm661, %v662, %v658
    %v664 = vadd.s32 %v659, %v663
    %v665 = vadd.s32 %v664, 536870912
    %v666 = vshrl.u32 %v665, 30
    %v667 = vshll.u32 %v666, 30
    %v668 = vsub.s32 %v664, %v667
    %vm669 = vcmp.lt.s32.totalorder %v668, 0
    %v670 = vsub.s32 0, %v668
    %v671 = vsel %vm669, %v670, %v668
    %v672 = vclz %v671
    %v673 = vsub.s32 %v672, 2
    %vm674 = vcmp.gt.s32.totalorder 0, %v673
    %v675 = vsel %vm674, 0, %v673
    %v676 = vsub.s32 32, %v675
    %v677 = vshll.u32 %v668, %v675
    %v678 = vshrl.u32 %v660, %v676
    %v679 = vor.u32 %v677, %v678
    %v680 = vsub.s32 4294967266, %v675
    %v681 = vadd.s32 %v680, 127
    %v682 = vshll.u32 %v681, 23
    %v683 = vor.u32 4788187, %v682
    %v684 = vand.u32 2147483647, %v683
    %v686 = vcvt.s32.f32 %v679
    %v687 = vmul.f32 %v686, %v684
    %v688 = vxor.u32 %v687, 2147483648
    %v689 = vsel %vm606, %v688, %v687
    %v690 = vsub.s32 4, %v666
    %v691 = vsel %vm606, %v690, %v666
    %v692 = vsel %vm605, %v500, %v689
    %v693 = vsel %vm605, 0, %v691
    %v694 = vcosq.f32.pop %v692
    %v695 = vsinq.f32.pop %v692
    %vm696 = vweird.f32 %v500
    %v697 = vadd.s32 %v693, 3
    %v698 = vand.u32 %v697, 3
    %vm699 = vcmp.lt.s32.totalorder %v698, 2
    %vm700 = vcmp.eq.s32.totalorder %v698, 0
    %v701 = vxor.u32 %v695, 2147483648
    %v702 = vsel %vm700, %v694, %v701
    %vm703 = vcmp.eq.s32.totalorder %v698, 2
    %v704 = vxor.u32 %v694, 2147483648
    %v705 = vsel %vm703, %v704, %v695
    %v706 = vsel %vm699, %v702, %v705
    %v707 = vsel %vm696, nan, %v706
    %v708 = vmul.f32 %v603, 2.0
    %v709 = vmul.f32 %v708, %v603
    %v710 = vsub.f32 %v709, 1.0
    %v711 = vmul.f32 %v707, 2.0
    %v712 = vmul.f32 %v711, %v603
    %v713 = vmul.f32 %v603, %v20
    %v714 = vadd.f32 %v18, %v713
    %v715 = vmul.f32 %v710, %v22
    %v716 = vadd.f32 %v714, %v715
    %v717 = vmul.f32 %v707, %v24
    %v718 = vadd.f32 %v716, %v717
    %v719 = vmul.f32 %v712, %v26
    %v720 = vadd.f32 %v718, %v719
    %v721 = vmul.f32 %v603, %v30
    %v722 = vadd.f32 %v28, %v721
    %v723 = vmul.f32 %v710, %v32
    %v724 = vadd.f32 %v722, %v723
    %v725 = vmul.f32 %v707, %v34
    %v726 = vadd.f32 %v724, %v725
    %v727 = vmul.f32 %v712, %v36
    %v728 = vadd.f32 %v726, %v727
    %v729 = vmul.f32 %v38, %v260
    %v730 = vmul.f32 %v490, %v729
    %v731 = vadd.f32 %v490, %v730
    %v732 = vmul.f32 %v38, %v268
    %v733 = vmul.f32 %v490, %v732
    %v734 = vadd.f32 %v733, %v498
    %v735 = vmul.f32 %v38, %v731
    %v736 = vmul.f32 %v490, %v735
    %v737 = vadd.f32 %v490, %v736
    %v738 = vmul.f32 %v38, %v734
    %v739 = vmul.f32 %v490, %v738
    %v740 = vadd.f32 %v739, %v498
    %v741 = vmul.f32 %v37, %v737
    %v742 = vmul.f32 %v720, %v741
    %v743 = vadd.f32 %v720, %v742
    %v744 = vmul.f32 %v37, %v740
    %v745 = vmul.f32 %v720, %v744
    %v746 = vadd.f32 %v745, %v728
    %v747 = vmul.f32 %v731, 2.0
    %v748 = vadd.f32 %v260, %v747
    %v749 = vmul.f32 %v737, 2.0
    %v750 = vadd.f32 %v748, %v749
    %v751 = vadd.f32 %v750, %v743
    %v752 = vmul.f32 %v39, %v751
    %v753 = vadd.f32 %v752, 1.0
    %v754 = vmul.f32 %v734, 2.0
    %v755 = vadd.f32 %v268, %v754
    %v756 = vmul.f32 %v740, 2.0
    %v757 = vadd.f32 %v755, %v756
    %v758 = vadd.f32 %v757, %v746
    %v759 = vmul.f32 %v39, %v758
    %v760 = vmul.f32 %v753, 0.0
    %v761 = vadd.f32 %v760, %v759
    %s762 = scalar_lea.vmem %s0, 24
    %v763 = vld [vmem:[%s762] sm:$0x7f]
    %v764 = vand.u32 2147483647, %v763
    %vm765 = vcmp.le.f32.partialorder %v764, 0.7853982
    %vm766 = vcmp.lt.s32.totalorder %v763, 0
    %v767 = vand.u32 %v763, 2139095040
    %v768 = vshrl.u32 %v767, 23
    %v769 = vsub.s32 %v768, 127
    %v770 = vand.u32 2147483647, %v763
    %v771 = vand.u32 %v770, 8388607
    %v772 = vor.u32 %v771, 8388608
    %v773 = vsub.s32 0, %v772
    %v774 = vadd.s32 %v769, 1
    %vm775 = vcmp.gt.s32.totalorder %v774, 0
    %v776 = vsel %vm775, %v774, 0
    %v777 = vshrl.u32 %v776, 5
    %v778 = vand.u32 %v776, 31
    %v779 = vsub.s32 32, %v778
    %v780 = vshrl.u32 683565275, %v779
    %v781 = vshll.u32 683565275, %v778
    %v782 = vshrl.u32 2475754826, %v779
    %v783 = vor.u32 %v781, %v782
    %v784 = vshll.u32 2475754826, %v778
    %v785 = vshrl.u32 2131351028, %v779
    %v786 = vor.u32 %v784, %v785
    %v787 = vshll.u32 2131351028, %v778
    %v788 = vshrl.u32 2102212464, %v779
    %v789 = vor.u32 %v787, %v788
    %v790 = vshll.u32 2102212464, %v778
    %v791 = vshrl.u32 920167782, %v779
    %v792 = vor.u32 %v790, %v791
    %v793 = vshll.u32 920167782, %v778
    %v794 = vshrl.u32 1326507024, %v779
    %v795 = vor.u32 %v793, %v794
    %vm796 = vcmp.lt.s32.totalorder %v777, 1
    %vm797 = vcmp.lt.s32.totalorder %v777, 2
    %vm798 = vcmp.lt.s32.totalorder %v777, 3
    %vm799 = vcmp.lt.s32.totalorder %v777, 4
    %v800 = vsel %vm796, %v780, %v783
    %v801 = vsel %vm799, %v789, 2102212464
    %v802 = vsel %vm798, %v786, %v801
    %v803 = vsel %vm797, %v800, %v802
    %v804 = vsel %vm796, %v783, %v786
    %v805 = vsel %vm799, %v792, 920167782
    %v806 = vsel %vm798, %v789, %v805
    %v807 = vsel %vm797, %v804, %v806
    %v808 = vsel %vm796, %v786, %v789
    %v809 = vsel %vm799, %v795, 1326507024
    %v810 = vsel %vm798, %v792, %v809
    %v811 = vsel %vm797, %v808, %v810
    %v812 = vshll.u32 %v772, 8
    %v813 = vmul.u32.u64.compose %v812, %v811
    %v814 = vextract.low.u32 %v813
    %v815 = vextract.high.u32 %v813
    %v816 = vmul.u32.u64.compose %v812, %v807
    %v817 = vextract.low.u32 %v816
    %v818 = vextract.high.u32 %v816
    %v819 = vmul.u32 %v812, %v803
    %v820 = vadd.s32 %v815, %v817
    %vm821 = vc.u32 %v815, %v817
    %v822 = vadd.s32 %v818, 1
    %v823 = vsel %vm821, %v822, %v818
    %v824 = vadd.s32 %v819, %v823
    %v825 = vadd.s32 %v824, 536870912
    %v826 = vshrl.u32 %v825, 30
    %v827 = vshll.u32 %v826, 30
    %v828 = vsub.s32 %v824, %v827
    %vm829 = vcmp.lt.s32.totalorder %v828, 0
    %v830 = vsub.s32 0, %v828
    %v831 = vsel %vm829, %v830, %v828
    %v832 = vclz %v831
    %v833 = vsub.s32 %v832, 2
    %vm834 = vcmp.gt.s32.totalorder 0, %v833
    %v835 = vsel %vm834, 0, %v833
    %v836 = vsub.s32 32, %v835
    %v837 = vshll.u32 %v828, %v835
    %v838 = vshrl.u32 %v820, %v836
    %v839 = vor.u32 %v837, %v838
    %v840 = vsub.s32 4294967266, %v835
    %v841 = vadd.s32 %v840, 127
    %v842 = vshll.u32 %v841, 23
    %v843 = vor.u32 4788187, %v842
    %v844 = vand.u32 2147483647, %v843
    %v846 = vcvt.s32.f32 %v839
    %v847 = vmul.f32 %v846, %v844
    %v848 = vxor.u32 %v847, 2147483648
    %v849 = vsel %vm766, %v848, %v847
    %v850 = vsub.s32 4, %v826
    %v851 = vsel %vm766, %v850, %v826
    %v852 = vsel %vm765, %v763, %v849
    %v853 = vsel %vm765, 0, %v851
    %v854 = vcosq.f32.pop %v852
    %v855 = vsinq.f32.pop %v852
    %vm856 = vweird.f32 %v763
    %v857 = vand.u32 %v853, 3
    %vm858 = vcmp.lt.s32.totalorder %v857, 2
    %vm859 = vcmp.eq.s32.totalorder %v857, 0
    %v860 = vxor.u32 %v855, 2147483648
    %v861 = vsel %vm859, %v854, %v860
    %vm862 = vcmp.eq.s32.totalorder %v857, 2
    %v863 = vxor.u32 %v854, 2147483648
    %v864 = vsel %vm862, %v863, %v855
    %v865 = vsel %vm858, %v861, %v864
    %v866 = vsel %vm856, nan, %v865
    %v867 = vand.u32 2147483647, %v763
    %vm868 = vcmp.le.f32.partialorder %v867, 0.7853982
    %vm869 = vcmp.lt.s32.totalorder %v763, 0
    %v870 = vand.u32 %v763, 2139095040
    %v871 = vshrl.u32 %v870, 23
    %v872 = vsub.s32 %v871, 127
    %v873 = vand.u32 2147483647, %v763
    %v874 = vand.u32 %v873, 8388607
    %v875 = vor.u32 %v874, 8388608
    %v876 = vsub.s32 0, %v875
    %v877 = vadd.s32 %v872, 1
    %vm878 = vcmp.gt.s32.totalorder %v877, 0
    %v879 = vsel %vm878, %v877, 0
    %v880 = vshrl.u32 %v879, 5
    %v881 = vand.u32 %v879, 31
    %v882 = vsub.s32 32, %v881
    %v883 = vshrl.u32 683565275, %v882
    %v884 = vshll.u32 683565275, %v881
    %v885 = vshrl.u32 2475754826, %v882
    %v886 = vor.u32 %v884, %v885
    %v887 = vshll.u32 2475754826, %v881
    %v888 = vshrl.u32 2131351028, %v882
    %v889 = vor.u32 %v887, %v888
    %v890 = vshll.u32 2131351028, %v881
    %v891 = vshrl.u32 2102212464, %v882
    %v892 = vor.u32 %v890, %v891
    %v893 = vshll.u32 2102212464, %v881
    %v894 = vshrl.u32 920167782, %v882
    %v895 = vor.u32 %v893, %v894
    %v896 = vshll.u32 920167782, %v881
    %v897 = vshrl.u32 1326507024, %v882
    %v898 = vor.u32 %v896, %v897
    %vm899 = vcmp.lt.s32.totalorder %v880, 1
    %vm900 = vcmp.lt.s32.totalorder %v880, 2
    %vm901 = vcmp.lt.s32.totalorder %v880, 3
    %vm902 = vcmp.lt.s32.totalorder %v880, 4
    %v903 = vsel %vm899, %v883, %v886
    %v904 = vsel %vm902, %v892, 2102212464
    %v905 = vsel %vm901, %v889, %v904
    %v906 = vsel %vm900, %v903, %v905
    %v907 = vsel %vm899, %v886, %v889
    %v908 = vsel %vm902, %v895, 920167782
    %v909 = vsel %vm901, %v892, %v908
    %v910 = vsel %vm900, %v907, %v909
    %v911 = vsel %vm899, %v889, %v892
    %v912 = vsel %vm902, %v898, 1326507024
    %v913 = vsel %vm901, %v895, %v912
    %v914 = vsel %vm900, %v911, %v913
    %v915 = vshll.u32 %v875, 8
    %v916 = vmul.u32.u64.compose %v915, %v914
    %v917 = vextract.low.u32 %v916
    %v918 = vextract.high.u32 %v916
    %v919 = vmul.u32.u64.compose %v915, %v910
    %v920 = vextract.low.u32 %v919
    %v921 = vextract.high.u32 %v919
    %v922 = vmul.u32 %v915, %v906
    %v923 = vadd.s32 %v918, %v920
    %vm924 = vc.u32 %v918, %v920
    %v925 = vadd.s32 %v921, 1
    %v926 = vsel %vm924, %v925, %v921
    %v927 = vadd.s32 %v922, %v926
    %v928 = vadd.s32 %v927, 536870912
    %v929 = vshrl.u32 %v928, 30
    %v930 = vshll.u32 %v929, 30
    %v931 = vsub.s32 %v927, %v930
    %vm932 = vcmp.lt.s32.totalorder %v931, 0
    %v933 = vsub.s32 0, %v931
    %v934 = vsel %vm932, %v933, %v931
    %v935 = vclz %v934
    %v936 = vsub.s32 %v935, 2
    %vm937 = vcmp.gt.s32.totalorder 0, %v936
    %v938 = vsel %vm937, 0, %v936
    %v939 = vsub.s32 32, %v938
    %v940 = vshll.u32 %v931, %v938
    %v941 = vshrl.u32 %v923, %v939
    %v942 = vor.u32 %v940, %v941
    %v943 = vsub.s32 4294967266, %v938
    %v944 = vadd.s32 %v943, 127
    %v945 = vshll.u32 %v944, 23
    %v946 = vor.u32 4788187, %v945
    %v947 = vand.u32 2147483647, %v946
    %v949 = vcvt.s32.f32 %v942
    %v950 = vmul.f32 %v949, %v947
    %v951 = vxor.u32 %v950, 2147483648
    %v952 = vsel %vm869, %v951, %v950
    %v953 = vsub.s32 4, %v929
    %v954 = vsel %vm869, %v953, %v929
    %v955 = vsel %vm868, %v763, %v952
    %v956 = vsel %vm868, 0, %v954
    %v957 = vcosq.f32.pop %v955
    %v958 = vsinq.f32.pop %v955
    %vm959 = vweird.f32 %v763
    %v960 = vadd.s32 %v956, 3
    %v961 = vand.u32 %v960, 3
    %vm962 = vcmp.lt.s32.totalorder %v961, 2
    %vm963 = vcmp.eq.s32.totalorder %v961, 0
    %v964 = vxor.u32 %v958, 2147483648
    %v965 = vsel %vm963, %v957, %v964
    %vm966 = vcmp.eq.s32.totalorder %v961, 2
    %v967 = vxor.u32 %v957, 2147483648
    %v968 = vsel %vm966, %v967, %v958
    %v969 = vsel %vm962, %v965, %v968
    %v970 = vsel %vm959, nan, %v969
    %v971 = vmul.f32 %v866, 2.0
    %v972 = vmul.f32 %v971, %v866
    %v973 = vsub.f32 %v972, 1.0
    %v974 = vmul.f32 %v970, 2.0
    %v975 = vmul.f32 %v974, %v866
    %v976 = vmul.f32 %v866, %v20
    %v977 = vadd.f32 %v18, %v976
    %v978 = vmul.f32 %v973, %v22
    %v979 = vadd.f32 %v977, %v978
    %v980 = vmul.f32 %v970, %v24
    %v981 = vadd.f32 %v979, %v980
    %v982 = vmul.f32 %v975, %v26
    %v983 = vadd.f32 %v981, %v982
    %v984 = vmul.f32 %v866, %v30
    %v985 = vadd.f32 %v28, %v984
    %v986 = vmul.f32 %v973, %v32
    %v987 = vadd.f32 %v985, %v986
    %v988 = vmul.f32 %v970, %v34
    %v989 = vadd.f32 %v987, %v988
    %v990 = vmul.f32 %v975, %v36
    %v991 = vadd.f32 %v989, %v990
    %s992 = scalar_lea.vmem %s0, 32
    %v993 = vld [vmem:[%s992] sm:$0x7f]
    %v994 = vand.u32 2147483647, %v993
    %vm995 = vcmp.le.f32.partialorder %v994, 0.7853982
    %vm996 = vcmp.lt.s32.totalorder %v993, 0
    %v997 = vand.u32 %v993, 2139095040
    %v998 = vshrl.u32 %v997, 23
    %v999 = vsub.s32 %v998, 127
    %v1000 = vand.u32 2147483647, %v993
    %v1001 = vand.u32 %v1000, 8388607
    %v1002 = vor.u32 %v1001, 8388608
    %v1003 = vsub.s32 0, %v1002
    %v1004 = vadd.s32 %v999, 1
    %vm1005 = vcmp.gt.s32.totalorder %v1004, 0
    %v1006 = vsel %vm1005, %v1004, 0
    %v1007 = vshrl.u32 %v1006, 5
    %v1008 = vand.u32 %v1006, 31
    %v1009 = vsub.s32 32, %v1008
    %v1010 = vshrl.u32 683565275, %v1009
    %v1011 = vshll.u32 683565275, %v1008
    %v1012 = vshrl.u32 2475754826, %v1009
    %v1013 = vor.u32 %v1011, %v1012
    %v1014 = vshll.u32 2475754826, %v1008
    %v1015 = vshrl.u32 2131351028, %v1009
    %v1016 = vor.u32 %v1014, %v1015
    %v1017 = vshll.u32 2131351028, %v1008
    %v1018 = vshrl.u32 2102212464, %v1009
    %v1019 = vor.u32 %v1017, %v1018
    %v1020 = vshll.u32 2102212464, %v1008
    %v1021 = vshrl.u32 920167782, %v1009
    %v1022 = vor.u32 %v1020, %v1021
    %v1023 = vshll.u32 920167782, %v1008
    %v1024 = vshrl.u32 1326507024, %v1009
    %v1025 = vor.u32 %v1023, %v1024
    %vm1026 = vcmp.lt.s32.totalorder %v1007, 1
    %vm1027 = vcmp.lt.s32.totalorder %v1007, 2
    %vm1028 = vcmp.lt.s32.totalorder %v1007, 3
    %vm1029 = vcmp.lt.s32.totalorder %v1007, 4
    %v1030 = vsel %vm1026, %v1010, %v1013
    %v1031 = vsel %vm1029, %v1019, 2102212464
    %v1032 = vsel %vm1028, %v1016, %v1031
    %v1033 = vsel %vm1027, %v1030, %v1032
    %v1034 = vsel %vm1026, %v1013, %v1016
    %v1035 = vsel %vm1029, %v1022, 920167782
    %v1036 = vsel %vm1028, %v1019, %v1035
    %v1037 = vsel %vm1027, %v1034, %v1036
    %v1038 = vsel %vm1026, %v1016, %v1019
    %v1039 = vsel %vm1029, %v1025, 1326507024
    %v1040 = vsel %vm1028, %v1022, %v1039
    %v1041 = vsel %vm1027, %v1038, %v1040
    %v1042 = vshll.u32 %v1002, 8
    %v1043 = vmul.u32.u64.compose %v1042, %v1041
    %v1044 = vextract.low.u32 %v1043
    %v1045 = vextract.high.u32 %v1043
    %v1046 = vmul.u32.u64.compose %v1042, %v1037
    %v1047 = vextract.low.u32 %v1046
    %v1048 = vextract.high.u32 %v1046
    %v1049 = vmul.u32 %v1042, %v1033
    %v1050 = vadd.s32 %v1045, %v1047
    %vm1051 = vc.u32 %v1045, %v1047
    %v1052 = vadd.s32 %v1048, 1
    %v1053 = vsel %vm1051, %v1052, %v1048
    %v1054 = vadd.s32 %v1049, %v1053
    %v1055 = vadd.s32 %v1054, 536870912
    %v1056 = vshrl.u32 %v1055, 30
    %v1057 = vshll.u32 %v1056, 30
    %v1058 = vsub.s32 %v1054, %v1057
    %vm1059 = vcmp.lt.s32.totalorder %v1058, 0
    %v1060 = vsub.s32 0, %v1058
    %v1061 = vsel %vm1059, %v1060, %v1058
    %v1062 = vclz %v1061
    %v1063 = vsub.s32 %v1062, 2
    %vm1064 = vcmp.gt.s32.totalorder 0, %v1063
    %v1065 = vsel %vm1064, 0, %v1063
    %v1066 = vsub.s32 32, %v1065
    %v1067 = vshll.u32 %v1058, %v1065
    %v1068 = vshrl.u32 %v1050, %v1066
    %v1069 = vor.u32 %v1067, %v1068
    %v1070 = vsub.s32 4294967266, %v1065
    %v1071 = vadd.s32 %v1070, 127
    %v1072 = vshll.u32 %v1071, 23
    %v1073 = vor.u32 4788187, %v1072
    %v1074 = vand.u32 2147483647, %v1073
    %v1076 = vcvt.s32.f32 %v1069
    %v1077 = vmul.f32 %v1076, %v1074
    %v1078 = vxor.u32 %v1077, 2147483648
    %v1079 = vsel %vm996, %v1078, %v1077
    %v1080 = vsub.s32 4, %v1056
    %v1081 = vsel %vm996, %v1080, %v1056
    %v1082 = vsel %vm995, %v993, %v1079
    %v1083 = vsel %vm995, 0, %v1081
    %v1084 = vcosq.f32.pop %v1082
    %v1085 = vsinq.f32.pop %v1082
    %vm1086 = vweird.f32 %v993
    %v1087 = vand.u32 %v1083, 3
    %vm1088 = vcmp.lt.s32.totalorder %v1087, 2
    %vm1089 = vcmp.eq.s32.totalorder %v1087, 0
    %v1090 = vxor.u32 %v1085, 2147483648
    %v1091 = vsel %vm1089, %v1084, %v1090
    %vm1092 = vcmp.eq.s32.totalorder %v1087, 2
    %v1093 = vxor.u32 %v1084, 2147483648
    %v1094 = vsel %vm1092, %v1093, %v1085
    %v1095 = vsel %vm1088, %v1091, %v1094
    %v1096 = vsel %vm1086, nan, %v1095
    %v1097 = vand.u32 2147483647, %v993
    %vm1098 = vcmp.le.f32.partialorder %v1097, 0.7853982
    %vm1099 = vcmp.lt.s32.totalorder %v993, 0
    %v1100 = vand.u32 %v993, 2139095040
    %v1101 = vshrl.u32 %v1100, 23
    %v1102 = vsub.s32 %v1101, 127
    %v1103 = vand.u32 2147483647, %v993
    %v1104 = vand.u32 %v1103, 8388607
    %v1105 = vor.u32 %v1104, 8388608
    %v1106 = vsub.s32 0, %v1105
    %v1107 = vadd.s32 %v1102, 1
    %vm1108 = vcmp.gt.s32.totalorder %v1107, 0
    %v1109 = vsel %vm1108, %v1107, 0
    %v1110 = vshrl.u32 %v1109, 5
    %v1111 = vand.u32 %v1109, 31
    %v1112 = vsub.s32 32, %v1111
    %v1113 = vshrl.u32 683565275, %v1112
    %v1114 = vshll.u32 683565275, %v1111
    %v1115 = vshrl.u32 2475754826, %v1112
    %v1116 = vor.u32 %v1114, %v1115
    %v1117 = vshll.u32 2475754826, %v1111
    %v1118 = vshrl.u32 2131351028, %v1112
    %v1119 = vor.u32 %v1117, %v1118
    %v1120 = vshll.u32 2131351028, %v1111
    %v1121 = vshrl.u32 2102212464, %v1112
    %v1122 = vor.u32 %v1120, %v1121
    %v1123 = vshll.u32 2102212464, %v1111
    %v1124 = vshrl.u32 920167782, %v1112
    %v1125 = vor.u32 %v1123, %v1124
    %v1126 = vshll.u32 920167782, %v1111
    %v1127 = vshrl.u32 1326507024, %v1112
    %v1128 = vor.u32 %v1126, %v1127
    %vm1129 = vcmp.lt.s32.totalorder %v1110, 1
    %vm1130 = vcmp.lt.s32.totalorder %v1110, 2
    %vm1131 = vcmp.lt.s32.totalorder %v1110, 3
    %vm1132 = vcmp.lt.s32.totalorder %v1110, 4
    %v1133 = vsel %vm1129, %v1113, %v1116
    %v1134 = vsel %vm1132, %v1122, 2102212464
    %v1135 = vsel %vm1131, %v1119, %v1134
    %v1136 = vsel %vm1130, %v1133, %v1135
    %v1137 = vsel %vm1129, %v1116, %v1119
    %v1138 = vsel %vm1132, %v1125, 920167782
    %v1139 = vsel %vm1131, %v1122, %v1138
    %v1140 = vsel %vm1130, %v1137, %v1139
    %v1141 = vsel %vm1129, %v1119, %v1122
    %v1142 = vsel %vm1132, %v1128, 1326507024
    %v1143 = vsel %vm1131, %v1125, %v1142
    %v1144 = vsel %vm1130, %v1141, %v1143
    %v1145 = vshll.u32 %v1105, 8
    %v1146 = vmul.u32.u64.compose %v1145, %v1144
    %v1147 = vextract.low.u32 %v1146
    %v1148 = vextract.high.u32 %v1146
    %v1149 = vmul.u32.u64.compose %v1145, %v1140
    %v1150 = vextract.low.u32 %v1149
    %v1151 = vextract.high.u32 %v1149
    %v1152 = vmul.u32 %v1145, %v1136
    %v1153 = vadd.s32 %v1148, %v1150
    %vm1154 = vc.u32 %v1148, %v1150
    %v1155 = vadd.s32 %v1151, 1
    %v1156 = vsel %vm1154, %v1155, %v1151
    %v1157 = vadd.s32 %v1152, %v1156
    %v1158 = vadd.s32 %v1157, 536870912
    %v1159 = vshrl.u32 %v1158, 30
    %v1160 = vshll.u32 %v1159, 30
    %v1161 = vsub.s32 %v1157, %v1160
    %vm1162 = vcmp.lt.s32.totalorder %v1161, 0
    %v1163 = vsub.s32 0, %v1161
    %v1164 = vsel %vm1162, %v1163, %v1161
    %v1165 = vclz %v1164
    %v1166 = vsub.s32 %v1165, 2
    %vm1167 = vcmp.gt.s32.totalorder 0, %v1166
    %v1168 = vsel %vm1167, 0, %v1166
    %v1169 = vsub.s32 32, %v1168
    %v1170 = vshll.u32 %v1161, %v1168
    %v1171 = vshrl.u32 %v1153, %v1169
    %v1172 = vor.u32 %v1170, %v1171
    %v1173 = vsub.s32 4294967266, %v1168
    %v1174 = vadd.s32 %v1173, 127
    %v1175 = vshll.u32 %v1174, 23
    %v1176 = vor.u32 4788187, %v1175
    %v1177 = vand.u32 2147483647, %v1176
    %v1179 = vcvt.s32.f32 %v1172
    %v1180 = vmul.f32 %v1179, %v1177
    %v1181 = vxor.u32 %v1180, 2147483648
    %v1182 = vsel %vm1099, %v1181, %v1180
    %v1183 = vsub.s32 4, %v1159
    %v1184 = vsel %vm1099, %v1183, %v1159
    %v1185 = vsel %vm1098, %v993, %v1182
    %v1186 = vsel %vm1098, 0, %v1184
    %v1187 = vcosq.f32.pop %v1185
    %v1188 = vsinq.f32.pop %v1185
    %vm1189 = vweird.f32 %v993
    %v1190 = vadd.s32 %v1186, 3
    %v1191 = vand.u32 %v1190, 3
    %vm1192 = vcmp.lt.s32.totalorder %v1191, 2
    %vm1193 = vcmp.eq.s32.totalorder %v1191, 0
    %v1194 = vxor.u32 %v1188, 2147483648
    %v1195 = vsel %vm1193, %v1187, %v1194
    %vm1196 = vcmp.eq.s32.totalorder %v1191, 2
    %v1197 = vxor.u32 %v1187, 2147483648
    %v1198 = vsel %vm1196, %v1197, %v1188
    %v1199 = vsel %vm1192, %v1195, %v1198
    %v1200 = vsel %vm1189, nan, %v1199
    %v1201 = vmul.f32 %v1096, 2.0
    %v1202 = vmul.f32 %v1201, %v1096
    %v1203 = vsub.f32 %v1202, 1.0
    %v1204 = vmul.f32 %v1200, 2.0
    %v1205 = vmul.f32 %v1204, %v1096
    %v1206 = vmul.f32 %v1096, %v20
    %v1207 = vadd.f32 %v18, %v1206
    %v1208 = vmul.f32 %v1203, %v22
    %v1209 = vadd.f32 %v1207, %v1208
    %v1210 = vmul.f32 %v1200, %v24
    %v1211 = vadd.f32 %v1209, %v1210
    %v1212 = vmul.f32 %v1205, %v26
    %v1213 = vadd.f32 %v1211, %v1212
    %v1214 = vmul.f32 %v1096, %v30
    %v1215 = vadd.f32 %v28, %v1214
    %v1216 = vmul.f32 %v1203, %v32
    %v1217 = vadd.f32 %v1215, %v1216
    %v1218 = vmul.f32 %v1200, %v34
    %v1219 = vadd.f32 %v1217, %v1218
    %v1220 = vmul.f32 %v1205, %v36
    %v1221 = vadd.f32 %v1219, %v1220
    %v1222 = vmul.f32 %v38, %v720
    %v1223 = vmul.f32 %v983, %v1222
    %v1224 = vadd.f32 %v983, %v1223
    %v1225 = vmul.f32 %v38, %v728
    %v1226 = vmul.f32 %v983, %v1225
    %v1227 = vadd.f32 %v1226, %v991
    %v1228 = vmul.f32 %v38, %v1224
    %v1229 = vmul.f32 %v983, %v1228
    %v1230 = vadd.f32 %v983, %v1229
    %v1231 = vmul.f32 %v38, %v1227
    %v1232 = vmul.f32 %v983, %v1231
    %v1233 = vadd.f32 %v1232, %v991
    %v1234 = vmul.f32 %v37, %v1230
    %v1235 = vmul.f32 %v1213, %v1234
    %v1236 = vadd.f32 %v1213, %v1235
    %v1237 = vmul.f32 %v37, %v1233
    %v1238 = vmul.f32 %v1213, %v1237
    %v1239 = vadd.f32 %v1238, %v1221
    %v1240 = vmul.f32 %v1224, 2.0
    %v1241 = vadd.f32 %v720, %v1240
    %v1242 = vmul.f32 %v1230, 2.0
    %v1243 = vadd.f32 %v1241, %v1242
    %v1244 = vadd.f32 %v1243, %v1236
    %v1245 = vmul.f32 %v39, %v1244
    %v1246 = vadd.f32 %v1245, 1.0
    %v1247 = vmul.f32 %v1227, 2.0
    %v1248 = vadd.f32 %v728, %v1247
    %v1249 = vmul.f32 %v1233, 2.0
    %v1250 = vadd.f32 %v1248, %v1249
    %v1251 = vadd.f32 %v1250, %v1239
    %v1252 = vmul.f32 %v39, %v1251
    %v1253 = vmul.f32 %v1246, %v753
    %v1254 = vmul.f32 %v1246, %v761
    %v1255 = vadd.f32 %v1254, %v1252
    %s1256 = scalar_lea.vmem %s0, 40
    %v1257 = vld [vmem:[%s1256] sm:$0x7f]
    %v1258 = vand.u32 2147483647, %v1257
    %vm1259 = vcmp.le.f32.partialorder %v1258, 0.7853982
    %vm1260 = vcmp.lt.s32.totalorder %v1257, 0
    %v1261 = vand.u32 %v1257, 2139095040
    %v1262 = vshrl.u32 %v1261, 23
    %v1263 = vsub.s32 %v1262, 127
    %v1264 = vand.u32 2147483647, %v1257
    %v1265 = vand.u32 %v1264, 8388607
    %v1266 = vor.u32 %v1265, 8388608
    %v1267 = vsub.s32 0, %v1266
    %v1268 = vadd.s32 %v1263, 1
    %vm1269 = vcmp.gt.s32.totalorder %v1268, 0
    %v1270 = vsel %vm1269, %v1268, 0
    %v1271 = vshrl.u32 %v1270, 5
    %v1272 = vand.u32 %v1270, 31
    %v1273 = vsub.s32 32, %v1272
    %v1274 = vshrl.u32 683565275, %v1273
    %v1275 = vshll.u32 683565275, %v1272
    %v1276 = vshrl.u32 2475754826, %v1273
    %v1277 = vor.u32 %v1275, %v1276
    %v1278 = vshll.u32 2475754826, %v1272
    %v1279 = vshrl.u32 2131351028, %v1273
    %v1280 = vor.u32 %v1278, %v1279
    %v1281 = vshll.u32 2131351028, %v1272
    %v1282 = vshrl.u32 2102212464, %v1273
    %v1283 = vor.u32 %v1281, %v1282
    %v1284 = vshll.u32 2102212464, %v1272
    %v1285 = vshrl.u32 920167782, %v1273
    %v1286 = vor.u32 %v1284, %v1285
    %v1287 = vshll.u32 920167782, %v1272
    %v1288 = vshrl.u32 1326507024, %v1273
    %v1289 = vor.u32 %v1287, %v1288
    %vm1290 = vcmp.lt.s32.totalorder %v1271, 1
    %vm1291 = vcmp.lt.s32.totalorder %v1271, 2
    %vm1292 = vcmp.lt.s32.totalorder %v1271, 3
    %vm1293 = vcmp.lt.s32.totalorder %v1271, 4
    %v1294 = vsel %vm1290, %v1274, %v1277
    %v1295 = vsel %vm1293, %v1283, 2102212464
    %v1296 = vsel %vm1292, %v1280, %v1295
    %v1297 = vsel %vm1291, %v1294, %v1296
    %v1298 = vsel %vm1290, %v1277, %v1280
    %v1299 = vsel %vm1293, %v1286, 920167782
    %v1300 = vsel %vm1292, %v1283, %v1299
    %v1301 = vsel %vm1291, %v1298, %v1300
    %v1302 = vsel %vm1290, %v1280, %v1283
    %v1303 = vsel %vm1293, %v1289, 1326507024
    %v1304 = vsel %vm1292, %v1286, %v1303
    %v1305 = vsel %vm1291, %v1302, %v1304
    %v1306 = vshll.u32 %v1266, 8
    %v1307 = vmul.u32.u64.compose %v1306, %v1305
    %v1308 = vextract.low.u32 %v1307
    %v1309 = vextract.high.u32 %v1307
    %v1310 = vmul.u32.u64.compose %v1306, %v1301
    %v1311 = vextract.low.u32 %v1310
    %v1312 = vextract.high.u32 %v1310
    %v1313 = vmul.u32 %v1306, %v1297
    %v1314 = vadd.s32 %v1309, %v1311
    %vm1315 = vc.u32 %v1309, %v1311
    %v1316 = vadd.s32 %v1312, 1
    %v1317 = vsel %vm1315, %v1316, %v1312
    %v1318 = vadd.s32 %v1313, %v1317
    %v1319 = vadd.s32 %v1318, 536870912
    %v1320 = vshrl.u32 %v1319, 30
    %v1321 = vshll.u32 %v1320, 30
    %v1322 = vsub.s32 %v1318, %v1321
    %vm1323 = vcmp.lt.s32.totalorder %v1322, 0
    %v1324 = vsub.s32 0, %v1322
    %v1325 = vsel %vm1323, %v1324, %v1322
    %v1326 = vclz %v1325
    %v1327 = vsub.s32 %v1326, 2
    %vm1328 = vcmp.gt.s32.totalorder 0, %v1327
    %v1329 = vsel %vm1328, 0, %v1327
    %v1330 = vsub.s32 32, %v1329
    %v1331 = vshll.u32 %v1322, %v1329
    %v1332 = vshrl.u32 %v1314, %v1330
    %v1333 = vor.u32 %v1331, %v1332
    %v1334 = vsub.s32 4294967266, %v1329
    %v1335 = vadd.s32 %v1334, 127
    %v1336 = vshll.u32 %v1335, 23
    %v1337 = vor.u32 4788187, %v1336
    %v1338 = vand.u32 2147483647, %v1337
    %v1340 = vcvt.s32.f32 %v1333
    %v1341 = vmul.f32 %v1340, %v1338
    %v1342 = vxor.u32 %v1341, 2147483648
    %v1343 = vsel %vm1260, %v1342, %v1341
    %v1344 = vsub.s32 4, %v1320
    %v1345 = vsel %vm1260, %v1344, %v1320
    %v1346 = vsel %vm1259, %v1257, %v1343
    %v1347 = vsel %vm1259, 0, %v1345
    %v1348 = vcosq.f32.pop %v1346
    %v1349 = vsinq.f32.pop %v1346
    %vm1350 = vweird.f32 %v1257
    %v1351 = vand.u32 %v1347, 3
    %vm1352 = vcmp.lt.s32.totalorder %v1351, 2
    %vm1353 = vcmp.eq.s32.totalorder %v1351, 0
    %v1354 = vxor.u32 %v1349, 2147483648
    %v1355 = vsel %vm1353, %v1348, %v1354
    %vm1356 = vcmp.eq.s32.totalorder %v1351, 2
    %v1357 = vxor.u32 %v1348, 2147483648
    %v1358 = vsel %vm1356, %v1357, %v1349
    %v1359 = vsel %vm1352, %v1355, %v1358
    %v1360 = vsel %vm1350, nan, %v1359
    %v1361 = vand.u32 2147483647, %v1257
    %vm1362 = vcmp.le.f32.partialorder %v1361, 0.7853982
    %vm1363 = vcmp.lt.s32.totalorder %v1257, 0
    %v1364 = vand.u32 %v1257, 2139095040
    %v1365 = vshrl.u32 %v1364, 23
    %v1366 = vsub.s32 %v1365, 127
    %v1367 = vand.u32 2147483647, %v1257
    %v1368 = vand.u32 %v1367, 8388607
    %v1369 = vor.u32 %v1368, 8388608
    %v1370 = vsub.s32 0, %v1369
    %v1371 = vadd.s32 %v1366, 1
    %vm1372 = vcmp.gt.s32.totalorder %v1371, 0
    %v1373 = vsel %vm1372, %v1371, 0
    %v1374 = vshrl.u32 %v1373, 5
    %v1375 = vand.u32 %v1373, 31
    %v1376 = vsub.s32 32, %v1375
    %v1377 = vshrl.u32 683565275, %v1376
    %v1378 = vshll.u32 683565275, %v1375
    %v1379 = vshrl.u32 2475754826, %v1376
    %v1380 = vor.u32 %v1378, %v1379
    %v1381 = vshll.u32 2475754826, %v1375
    %v1382 = vshrl.u32 2131351028, %v1376
    %v1383 = vor.u32 %v1381, %v1382
    %v1384 = vshll.u32 2131351028, %v1375
    %v1385 = vshrl.u32 2102212464, %v1376
    %v1386 = vor.u32 %v1384, %v1385
    %v1387 = vshll.u32 2102212464, %v1375
    %v1388 = vshrl.u32 920167782, %v1376
    %v1389 = vor.u32 %v1387, %v1388
    %v1390 = vshll.u32 920167782, %v1375
    %v1391 = vshrl.u32 1326507024, %v1376
    %v1392 = vor.u32 %v1390, %v1391
    %vm1393 = vcmp.lt.s32.totalorder %v1374, 1
    %vm1394 = vcmp.lt.s32.totalorder %v1374, 2
    %vm1395 = vcmp.lt.s32.totalorder %v1374, 3
    %vm1396 = vcmp.lt.s32.totalorder %v1374, 4
    %v1397 = vsel %vm1393, %v1377, %v1380
    %v1398 = vsel %vm1396, %v1386, 2102212464
    %v1399 = vsel %vm1395, %v1383, %v1398
    %v1400 = vsel %vm1394, %v1397, %v1399
    %v1401 = vsel %vm1393, %v1380, %v1383
    %v1402 = vsel %vm1396, %v1389, 920167782
    %v1403 = vsel %vm1395, %v1386, %v1402
    %v1404 = vsel %vm1394, %v1401, %v1403
    %v1405 = vsel %vm1393, %v1383, %v1386
    %v1406 = vsel %vm1396, %v1392, 1326507024
    %v1407 = vsel %vm1395, %v1389, %v1406
    %v1408 = vsel %vm1394, %v1405, %v1407
    %v1409 = vshll.u32 %v1369, 8
    %v1410 = vmul.u32.u64.compose %v1409, %v1408
    %v1411 = vextract.low.u32 %v1410
    %v1412 = vextract.high.u32 %v1410
    %v1413 = vmul.u32.u64.compose %v1409, %v1404
    %v1414 = vextract.low.u32 %v1413
    %v1415 = vextract.high.u32 %v1413
    %v1416 = vmul.u32 %v1409, %v1400
    %v1417 = vadd.s32 %v1412, %v1414
    %vm1418 = vc.u32 %v1412, %v1414
    %v1419 = vadd.s32 %v1415, 1
    %v1420 = vsel %vm1418, %v1419, %v1415
    %v1421 = vadd.s32 %v1416, %v1420
    %v1422 = vadd.s32 %v1421, 536870912
    %v1423 = vshrl.u32 %v1422, 30
    %v1424 = vshll.u32 %v1423, 30
    %v1425 = vsub.s32 %v1421, %v1424
    %vm1426 = vcmp.lt.s32.totalorder %v1425, 0
    %v1427 = vsub.s32 0, %v1425
    %v1428 = vsel %vm1426, %v1427, %v1425
    %v1429 = vclz %v1428
    %v1430 = vsub.s32 %v1429, 2
    %vm1431 = vcmp.gt.s32.totalorder 0, %v1430
    %v1432 = vsel %vm1431, 0, %v1430
    %v1433 = vsub.s32 32, %v1432
    %v1434 = vshll.u32 %v1425, %v1432
    %v1435 = vshrl.u32 %v1417, %v1433
    %v1436 = vor.u32 %v1434, %v1435
    %v1437 = vsub.s32 4294967266, %v1432
    %v1438 = vadd.s32 %v1437, 127
    %v1439 = vshll.u32 %v1438, 23
    %v1440 = vor.u32 4788187, %v1439
    %v1441 = vand.u32 2147483647, %v1440
    %v1443 = vcvt.s32.f32 %v1436
    %v1444 = vmul.f32 %v1443, %v1441
    %v1445 = vxor.u32 %v1444, 2147483648
    %v1446 = vsel %vm1363, %v1445, %v1444
    %v1447 = vsub.s32 4, %v1423
    %v1448 = vsel %vm1363, %v1447, %v1423
    %v1449 = vsel %vm1362, %v1257, %v1446
    %v1450 = vsel %vm1362, 0, %v1448
    %v1451 = vcosq.f32.pop %v1449
    %v1452 = vsinq.f32.pop %v1449
    %vm1453 = vweird.f32 %v1257
    %v1454 = vadd.s32 %v1450, 3
    %v1455 = vand.u32 %v1454, 3
    %vm1456 = vcmp.lt.s32.totalorder %v1455, 2
    %vm1457 = vcmp.eq.s32.totalorder %v1455, 0
    %v1458 = vxor.u32 %v1452, 2147483648
    %v1459 = vsel %vm1457, %v1451, %v1458
    %vm1460 = vcmp.eq.s32.totalorder %v1455, 2
    %v1461 = vxor.u32 %v1451, 2147483648
    %v1462 = vsel %vm1460, %v1461, %v1452
    %v1463 = vsel %vm1456, %v1459, %v1462
    %v1464 = vsel %vm1453, nan, %v1463
    %v1465 = vmul.f32 %v1360, 2.0
    %v1466 = vmul.f32 %v1465, %v1360
    %v1467 = vsub.f32 %v1466, 1.0
    %v1468 = vmul.f32 %v1464, 2.0
    %v1469 = vmul.f32 %v1468, %v1360
    %v1470 = vmul.f32 %v1360, %v20
    %v1471 = vadd.f32 %v18, %v1470
    %v1472 = vmul.f32 %v1467, %v22
    %v1473 = vadd.f32 %v1471, %v1472
    %v1474 = vmul.f32 %v1464, %v24
    %v1475 = vadd.f32 %v1473, %v1474
    %v1476 = vmul.f32 %v1469, %v26
    %v1477 = vadd.f32 %v1475, %v1476
    %v1478 = vmul.f32 %v1360, %v30
    %v1479 = vadd.f32 %v28, %v1478
    %v1480 = vmul.f32 %v1467, %v32
    %v1481 = vadd.f32 %v1479, %v1480
    %v1482 = vmul.f32 %v1464, %v34
    %v1483 = vadd.f32 %v1481, %v1482
    %v1484 = vmul.f32 %v1469, %v36
    %v1485 = vadd.f32 %v1483, %v1484
    %s1486 = scalar_lea.vmem %s0, 48
    %v1487 = vld [vmem:[%s1486] sm:$0x7f]
    %v1488 = vand.u32 2147483647, %v1487
    %vm1489 = vcmp.le.f32.partialorder %v1488, 0.7853982
    %vm1490 = vcmp.lt.s32.totalorder %v1487, 0
    %v1491 = vand.u32 %v1487, 2139095040
    %v1492 = vshrl.u32 %v1491, 23
    %v1493 = vsub.s32 %v1492, 127
    %v1494 = vand.u32 2147483647, %v1487
    %v1495 = vand.u32 %v1494, 8388607
    %v1496 = vor.u32 %v1495, 8388608
    %v1497 = vsub.s32 0, %v1496
    %v1498 = vadd.s32 %v1493, 1
    %vm1499 = vcmp.gt.s32.totalorder %v1498, 0
    %v1500 = vsel %vm1499, %v1498, 0
    %v1501 = vshrl.u32 %v1500, 5
    %v1502 = vand.u32 %v1500, 31
    %v1503 = vsub.s32 32, %v1502
    %v1504 = vshrl.u32 683565275, %v1503
    %v1505 = vshll.u32 683565275, %v1502
    %v1506 = vshrl.u32 2475754826, %v1503
    %v1507 = vor.u32 %v1505, %v1506
    %v1508 = vshll.u32 2475754826, %v1502
    %v1509 = vshrl.u32 2131351028, %v1503
    %v1510 = vor.u32 %v1508, %v1509
    %v1511 = vshll.u32 2131351028, %v1502
    %v1512 = vshrl.u32 2102212464, %v1503
    %v1513 = vor.u32 %v1511, %v1512
    %v1514 = vshll.u32 2102212464, %v1502
    %v1515 = vshrl.u32 920167782, %v1503
    %v1516 = vor.u32 %v1514, %v1515
    %v1517 = vshll.u32 920167782, %v1502
    %v1518 = vshrl.u32 1326507024, %v1503
    %v1519 = vor.u32 %v1517, %v1518
    %vm1520 = vcmp.lt.s32.totalorder %v1501, 1
    %vm1521 = vcmp.lt.s32.totalorder %v1501, 2
    %vm1522 = vcmp.lt.s32.totalorder %v1501, 3
    %vm1523 = vcmp.lt.s32.totalorder %v1501, 4
    %v1524 = vsel %vm1520, %v1504, %v1507
    %v1525 = vsel %vm1523, %v1513, 2102212464
    %v1526 = vsel %vm1522, %v1510, %v1525
    %v1527 = vsel %vm1521, %v1524, %v1526
    %v1528 = vsel %vm1520, %v1507, %v1510
    %v1529 = vsel %vm1523, %v1516, 920167782
    %v1530 = vsel %vm1522, %v1513, %v1529
    %v1531 = vsel %vm1521, %v1528, %v1530
    %v1532 = vsel %vm1520, %v1510, %v1513
    %v1533 = vsel %vm1523, %v1519, 1326507024
    %v1534 = vsel %vm1522, %v1516, %v1533
    %v1535 = vsel %vm1521, %v1532, %v1534
    %v1536 = vshll.u32 %v1496, 8
    %v1537 = vmul.u32.u64.compose %v1536, %v1535
    %v1538 = vextract.low.u32 %v1537
    %v1539 = vextract.high.u32 %v1537
    %v1540 = vmul.u32.u64.compose %v1536, %v1531
    %v1541 = vextract.low.u32 %v1540
    %v1542 = vextract.high.u32 %v1540
    %v1543 = vmul.u32 %v1536, %v1527
    %v1544 = vadd.s32 %v1539, %v1541
    %vm1545 = vc.u32 %v1539, %v1541
    %v1546 = vadd.s32 %v1542, 1
    %v1547 = vsel %vm1545, %v1546, %v1542
    %v1548 = vadd.s32 %v1543, %v1547
    %v1549 = vadd.s32 %v1548, 536870912
    %v1550 = vshrl.u32 %v1549, 30
    %v1551 = vshll.u32 %v1550, 30
    %v1552 = vsub.s32 %v1548, %v1551
    %vm1553 = vcmp.lt.s32.totalorder %v1552, 0
    %v1554 = vsub.s32 0, %v1552
    %v1555 = vsel %vm1553, %v1554, %v1552
    %v1556 = vclz %v1555
    %v1557 = vsub.s32 %v1556, 2
    %vm1558 = vcmp.gt.s32.totalorder 0, %v1557
    %v1559 = vsel %vm1558, 0, %v1557
    %v1560 = vsub.s32 32, %v1559
    %v1561 = vshll.u32 %v1552, %v1559
    %v1562 = vshrl.u32 %v1544, %v1560
    %v1563 = vor.u32 %v1561, %v1562
    %v1564 = vsub.s32 4294967266, %v1559
    %v1565 = vadd.s32 %v1564, 127
    %v1566 = vshll.u32 %v1565, 23
    %v1567 = vor.u32 4788187, %v1566
    %v1568 = vand.u32 2147483647, %v1567
    %v1570 = vcvt.s32.f32 %v1563
    %v1571 = vmul.f32 %v1570, %v1568
    %v1572 = vxor.u32 %v1571, 2147483648
    %v1573 = vsel %vm1490, %v1572, %v1571
    %v1574 = vsub.s32 4, %v1550
    %v1575 = vsel %vm1490, %v1574, %v1550
    %v1576 = vsel %vm1489, %v1487, %v1573
    %v1577 = vsel %vm1489, 0, %v1575
    %v1578 = vcosq.f32.pop %v1576
    %v1579 = vsinq.f32.pop %v1576
    %vm1580 = vweird.f32 %v1487
    %v1581 = vand.u32 %v1577, 3
    %vm1582 = vcmp.lt.s32.totalorder %v1581, 2
    %vm1583 = vcmp.eq.s32.totalorder %v1581, 0
    %v1584 = vxor.u32 %v1579, 2147483648
    %v1585 = vsel %vm1583, %v1578, %v1584
    %vm1586 = vcmp.eq.s32.totalorder %v1581, 2
    %v1587 = vxor.u32 %v1578, 2147483648
    %v1588 = vsel %vm1586, %v1587, %v1579
    %v1589 = vsel %vm1582, %v1585, %v1588
    %v1590 = vsel %vm1580, nan, %v1589
    %v1591 = vand.u32 2147483647, %v1487
    %vm1592 = vcmp.le.f32.partialorder %v1591, 0.7853982
    %vm1593 = vcmp.lt.s32.totalorder %v1487, 0
    %v1594 = vand.u32 %v1487, 2139095040
    %v1595 = vshrl.u32 %v1594, 23
    %v1596 = vsub.s32 %v1595, 127
    %v1597 = vand.u32 2147483647, %v1487
    %v1598 = vand.u32 %v1597, 8388607
    %v1599 = vor.u32 %v1598, 8388608
    %v1600 = vsub.s32 0, %v1599
    %v1601 = vadd.s32 %v1596, 1
    %vm1602 = vcmp.gt.s32.totalorder %v1601, 0
    %v1603 = vsel %vm1602, %v1601, 0
    %v1604 = vshrl.u32 %v1603, 5
    %v1605 = vand.u32 %v1603, 31
    %v1606 = vsub.s32 32, %v1605
    %v1607 = vshrl.u32 683565275, %v1606
    %v1608 = vshll.u32 683565275, %v1605
    %v1609 = vshrl.u32 2475754826, %v1606
    %v1610 = vor.u32 %v1608, %v1609
    %v1611 = vshll.u32 2475754826, %v1605
    %v1612 = vshrl.u32 2131351028, %v1606
    %v1613 = vor.u32 %v1611, %v1612
    %v1614 = vshll.u32 2131351028, %v1605
    %v1615 = vshrl.u32 2102212464, %v1606
    %v1616 = vor.u32 %v1614, %v1615
    %v1617 = vshll.u32 2102212464, %v1605
    %v1618 = vshrl.u32 920167782, %v1606
    %v1619 = vor.u32 %v1617, %v1618
    %v1620 = vshll.u32 920167782, %v1605
    %v1621 = vshrl.u32 1326507024, %v1606
    %v1622 = vor.u32 %v1620, %v1621
    %vm1623 = vcmp.lt.s32.totalorder %v1604, 1
    %vm1624 = vcmp.lt.s32.totalorder %v1604, 2
    %vm1625 = vcmp.lt.s32.totalorder %v1604, 3
    %vm1626 = vcmp.lt.s32.totalorder %v1604, 4
    %v1627 = vsel %vm1623, %v1607, %v1610
    %v1628 = vsel %vm1626, %v1616, 2102212464
    %v1629 = vsel %vm1625, %v1613, %v1628
    %v1630 = vsel %vm1624, %v1627, %v1629
    %v1631 = vsel %vm1623, %v1610, %v1613
    %v1632 = vsel %vm1626, %v1619, 920167782
    %v1633 = vsel %vm1625, %v1616, %v1632
    %v1634 = vsel %vm1624, %v1631, %v1633
    %v1635 = vsel %vm1623, %v1613, %v1616
    %v1636 = vsel %vm1626, %v1622, 1326507024
    %v1637 = vsel %vm1625, %v1619, %v1636
    %v1638 = vsel %vm1624, %v1635, %v1637
    %v1639 = vshll.u32 %v1599, 8
    %v1640 = vmul.u32.u64.compose %v1639, %v1638
    %v1641 = vextract.low.u32 %v1640
    %v1642 = vextract.high.u32 %v1640
    %v1643 = vmul.u32.u64.compose %v1639, %v1634
    %v1644 = vextract.low.u32 %v1643
    %v1645 = vextract.high.u32 %v1643
    %v1646 = vmul.u32 %v1639, %v1630
    %v1647 = vadd.s32 %v1642, %v1644
    %vm1648 = vc.u32 %v1642, %v1644
    %v1649 = vadd.s32 %v1645, 1
    %v1650 = vsel %vm1648, %v1649, %v1645
    %v1651 = vadd.s32 %v1646, %v1650
    %v1652 = vadd.s32 %v1651, 536870912
    %v1653 = vshrl.u32 %v1652, 30
    %v1654 = vshll.u32 %v1653, 30
    %v1655 = vsub.s32 %v1651, %v1654
    %vm1656 = vcmp.lt.s32.totalorder %v1655, 0
    %v1657 = vsub.s32 0, %v1655
    %v1658 = vsel %vm1656, %v1657, %v1655
    %v1659 = vclz %v1658
    %v1660 = vsub.s32 %v1659, 2
    %vm1661 = vcmp.gt.s32.totalorder 0, %v1660
    %v1662 = vsel %vm1661, 0, %v1660
    %v1663 = vsub.s32 32, %v1662
    %v1664 = vshll.u32 %v1655, %v1662
    %v1665 = vshrl.u32 %v1647, %v1663
    %v1666 = vor.u32 %v1664, %v1665
    %v1667 = vsub.s32 4294967266, %v1662
    %v1668 = vadd.s32 %v1667, 127
    %v1669 = vshll.u32 %v1668, 23
    %v1670 = vor.u32 4788187, %v1669
    %v1671 = vand.u32 2147483647, %v1670
    %v1673 = vcvt.s32.f32 %v1666
    %v1674 = vmul.f32 %v1673, %v1671
    %v1675 = vxor.u32 %v1674, 2147483648
    %v1676 = vsel %vm1593, %v1675, %v1674
    %v1677 = vsub.s32 4, %v1653
    %v1678 = vsel %vm1593, %v1677, %v1653
    %v1679 = vsel %vm1592, %v1487, %v1676
    %v1680 = vsel %vm1592, 0, %v1678
    %v1681 = vcosq.f32.pop %v1679
    %v1682 = vsinq.f32.pop %v1679
    %vm1683 = vweird.f32 %v1487
    %v1684 = vadd.s32 %v1680, 3
    %v1685 = vand.u32 %v1684, 3
    %vm1686 = vcmp.lt.s32.totalorder %v1685, 2
    %vm1687 = vcmp.eq.s32.totalorder %v1685, 0
    %v1688 = vxor.u32 %v1682, 2147483648
    %v1689 = vsel %vm1687, %v1681, %v1688
    %vm1690 = vcmp.eq.s32.totalorder %v1685, 2
    %v1691 = vxor.u32 %v1681, 2147483648
    %v1692 = vsel %vm1690, %v1691, %v1682
    %v1693 = vsel %vm1686, %v1689, %v1692
    %v1694 = vsel %vm1683, nan, %v1693
    %v1695 = vmul.f32 %v1590, 2.0
    %v1696 = vmul.f32 %v1695, %v1590
    %v1697 = vsub.f32 %v1696, 1.0
    %v1698 = vmul.f32 %v1694, 2.0
    %v1699 = vmul.f32 %v1698, %v1590
    %v1700 = vmul.f32 %v1590, %v20
    %v1701 = vadd.f32 %v18, %v1700
    %v1702 = vmul.f32 %v1697, %v22
    %v1703 = vadd.f32 %v1701, %v1702
    %v1704 = vmul.f32 %v1694, %v24
    %v1705 = vadd.f32 %v1703, %v1704
    %v1706 = vmul.f32 %v1699, %v26
    %v1707 = vadd.f32 %v1705, %v1706
    %v1708 = vmul.f32 %v1590, %v30
    %v1709 = vadd.f32 %v28, %v1708
    %v1710 = vmul.f32 %v1697, %v32
    %v1711 = vadd.f32 %v1709, %v1710
    %v1712 = vmul.f32 %v1694, %v34
    %v1713 = vadd.f32 %v1711, %v1712
    %v1714 = vmul.f32 %v1699, %v36
    %v1715 = vadd.f32 %v1713, %v1714
    %v1716 = vmul.f32 %v38, %v1213
    %v1717 = vmul.f32 %v1477, %v1716
    %v1718 = vadd.f32 %v1477, %v1717
    %v1719 = vmul.f32 %v38, %v1221
    %v1720 = vmul.f32 %v1477, %v1719
    %v1721 = vadd.f32 %v1720, %v1485
    %v1722 = vmul.f32 %v38, %v1718
    %v1723 = vmul.f32 %v1477, %v1722
    %v1724 = vadd.f32 %v1477, %v1723
    %v1725 = vmul.f32 %v38, %v1721
    %v1726 = vmul.f32 %v1477, %v1725
    %v1727 = vadd.f32 %v1726, %v1485
    %v1728 = vmul.f32 %v37, %v1724
    %v1729 = vmul.f32 %v1707, %v1728
    %v1730 = vadd.f32 %v1707, %v1729
    %v1731 = vmul.f32 %v37, %v1727
    %v1732 = vmul.f32 %v1707, %v1731
    %v1733 = vadd.f32 %v1732, %v1715
    %v1734 = vmul.f32 %v1718, 2.0
    %v1735 = vadd.f32 %v1213, %v1734
    %v1736 = vmul.f32 %v1724, 2.0
    %v1737 = vadd.f32 %v1735, %v1736
    %v1738 = vadd.f32 %v1737, %v1730
    %v1739 = vmul.f32 %v39, %v1738
    %v1740 = vadd.f32 %v1739, 1.0
    %v1741 = vmul.f32 %v1721, 2.0
    %v1742 = vadd.f32 %v1221, %v1741
    %v1743 = vmul.f32 %v1727, 2.0
    %v1744 = vadd.f32 %v1742, %v1743
    %v1745 = vadd.f32 %v1744, %v1733
    %v1746 = vmul.f32 %v39, %v1745
    %v1747 = vmul.f32 %v1740, %v1253
    %v1748 = vmul.f32 %v1740, %v1255
    %v1749 = vadd.f32 %v1748, %v1746
    %s1750 = scalar_lea.vmem %s0, 56
    %v1751 = vld [vmem:[%s1750] sm:$0x7f]
    %v1752 = vand.u32 2147483647, %v1751
    %vm1753 = vcmp.le.f32.partialorder %v1752, 0.7853982
    %vm1754 = vcmp.lt.s32.totalorder %v1751, 0
    %v1755 = vand.u32 %v1751, 2139095040
    %v1756 = vshrl.u32 %v1755, 23
    %v1757 = vsub.s32 %v1756, 127
    %v1758 = vand.u32 2147483647, %v1751
    %v1759 = vand.u32 %v1758, 8388607
    %v1760 = vor.u32 %v1759, 8388608
    %v1761 = vsub.s32 0, %v1760
    %v1762 = vadd.s32 %v1757, 1
    %vm1763 = vcmp.gt.s32.totalorder %v1762, 0
    %v1764 = vsel %vm1763, %v1762, 0
    %v1765 = vshrl.u32 %v1764, 5
    %v1766 = vand.u32 %v1764, 31
    %v1767 = vsub.s32 32, %v1766
    %v1768 = vshrl.u32 683565275, %v1767
    %v1769 = vshll.u32 683565275, %v1766
    %v1770 = vshrl.u32 2475754826, %v1767
    %v1771 = vor.u32 %v1769, %v1770
    %v1772 = vshll.u32 2475754826, %v1766
    %v1773 = vshrl.u32 2131351028, %v1767
    %v1774 = vor.u32 %v1772, %v1773
    %v1775 = vshll.u32 2131351028, %v1766
    %v1776 = vshrl.u32 2102212464, %v1767
    %v1777 = vor.u32 %v1775, %v1776
    %v1778 = vshll.u32 2102212464, %v1766
    %v1779 = vshrl.u32 920167782, %v1767
    %v1780 = vor.u32 %v1778, %v1779
    %v1781 = vshll.u32 920167782, %v1766
    %v1782 = vshrl.u32 1326507024, %v1767
    %v1783 = vor.u32 %v1781, %v1782
    %vm1784 = vcmp.lt.s32.totalorder %v1765, 1
    %vm1785 = vcmp.lt.s32.totalorder %v1765, 2
    %vm1786 = vcmp.lt.s32.totalorder %v1765, 3
    %vm1787 = vcmp.lt.s32.totalorder %v1765, 4
    %v1788 = vsel %vm1784, %v1768, %v1771
    %v1789 = vsel %vm1787, %v1777, 2102212464
    %v1790 = vsel %vm1786, %v1774, %v1789
    %v1791 = vsel %vm1785, %v1788, %v1790
    %v1792 = vsel %vm1784, %v1771, %v1774
    %v1793 = vsel %vm1787, %v1780, 920167782
    %v1794 = vsel %vm1786, %v1777, %v1793
    %v1795 = vsel %vm1785, %v1792, %v1794
    %v1796 = vsel %vm1784, %v1774, %v1777
    %v1797 = vsel %vm1787, %v1783, 1326507024
    %v1798 = vsel %vm1786, %v1780, %v1797
    %v1799 = vsel %vm1785, %v1796, %v1798
    %v1800 = vshll.u32 %v1760, 8
    %v1801 = vmul.u32.u64.compose %v1800, %v1799
    %v1802 = vextract.low.u32 %v1801
    %v1803 = vextract.high.u32 %v1801
    %v1804 = vmul.u32.u64.compose %v1800, %v1795
    %v1805 = vextract.low.u32 %v1804
    %v1806 = vextract.high.u32 %v1804
    %v1807 = vmul.u32 %v1800, %v1791
    %v1808 = vadd.s32 %v1803, %v1805
    %vm1809 = vc.u32 %v1803, %v1805
    %v1810 = vadd.s32 %v1806, 1
    %v1811 = vsel %vm1809, %v1810, %v1806
    %v1812 = vadd.s32 %v1807, %v1811
    %v1813 = vadd.s32 %v1812, 536870912
    %v1814 = vshrl.u32 %v1813, 30
    %v1815 = vshll.u32 %v1814, 30
    %v1816 = vsub.s32 %v1812, %v1815
    %vm1817 = vcmp.lt.s32.totalorder %v1816, 0
    %v1818 = vsub.s32 0, %v1816
    %v1819 = vsel %vm1817, %v1818, %v1816
    %v1820 = vclz %v1819
    %v1821 = vsub.s32 %v1820, 2
    %vm1822 = vcmp.gt.s32.totalorder 0, %v1821
    %v1823 = vsel %vm1822, 0, %v1821
    %v1824 = vsub.s32 32, %v1823
    %v1825 = vshll.u32 %v1816, %v1823
    %v1826 = vshrl.u32 %v1808, %v1824
    %v1827 = vor.u32 %v1825, %v1826
    %v1828 = vsub.s32 4294967266, %v1823
    %v1829 = vadd.s32 %v1828, 127
    %v1830 = vshll.u32 %v1829, 23
    %v1831 = vor.u32 4788187, %v1830
    %v1832 = vand.u32 2147483647, %v1831
    %v1834 = vcvt.s32.f32 %v1827
    %v1835 = vmul.f32 %v1834, %v1832
    %v1836 = vxor.u32 %v1835, 2147483648
    %v1837 = vsel %vm1754, %v1836, %v1835
    %v1838 = vsub.s32 4, %v1814
    %v1839 = vsel %vm1754, %v1838, %v1814
    %v1840 = vsel %vm1753, %v1751, %v1837
    %v1841 = vsel %vm1753, 0, %v1839
    %v1842 = vcosq.f32.pop %v1840
    %v1843 = vsinq.f32.pop %v1840
    %vm1844 = vweird.f32 %v1751
    %v1845 = vand.u32 %v1841, 3
    %vm1846 = vcmp.lt.s32.totalorder %v1845, 2
    %vm1847 = vcmp.eq.s32.totalorder %v1845, 0
    %v1848 = vxor.u32 %v1843, 2147483648
    %v1849 = vsel %vm1847, %v1842, %v1848
    %vm1850 = vcmp.eq.s32.totalorder %v1845, 2
    %v1851 = vxor.u32 %v1842, 2147483648
    %v1852 = vsel %vm1850, %v1851, %v1843
    %v1853 = vsel %vm1846, %v1849, %v1852
    %v1854 = vsel %vm1844, nan, %v1853
    %v1855 = vand.u32 2147483647, %v1751
    %vm1856 = vcmp.le.f32.partialorder %v1855, 0.7853982
    %vm1857 = vcmp.lt.s32.totalorder %v1751, 0
    %v1858 = vand.u32 %v1751, 2139095040
    %v1859 = vshrl.u32 %v1858, 23
    %v1860 = vsub.s32 %v1859, 127
    %v1861 = vand.u32 2147483647, %v1751
    %v1862 = vand.u32 %v1861, 8388607
    %v1863 = vor.u32 %v1862, 8388608
    %v1864 = vsub.s32 0, %v1863
    %v1865 = vadd.s32 %v1860, 1
    %vm1866 = vcmp.gt.s32.totalorder %v1865, 0
    %v1867 = vsel %vm1866, %v1865, 0
    %v1868 = vshrl.u32 %v1867, 5
    %v1869 = vand.u32 %v1867, 31
    %v1870 = vsub.s32 32, %v1869
    %v1871 = vshrl.u32 683565275, %v1870
    %v1872 = vshll.u32 683565275, %v1869
    %v1873 = vshrl.u32 2475754826, %v1870
    %v1874 = vor.u32 %v1872, %v1873
    %v1875 = vshll.u32 2475754826, %v1869
    %v1876 = vshrl.u32 2131351028, %v1870
    %v1877 = vor.u32 %v1875, %v1876
    %v1878 = vshll.u32 2131351028, %v1869
    %v1879 = vshrl.u32 2102212464, %v1870
    %v1880 = vor.u32 %v1878, %v1879
    %v1881 = vshll.u32 2102212464, %v1869
    %v1882 = vshrl.u32 920167782, %v1870
    %v1883 = vor.u32 %v1881, %v1882
    %v1884 = vshll.u32 920167782, %v1869
    %v1885 = vshrl.u32 1326507024, %v1870
    %v1886 = vor.u32 %v1884, %v1885
    %vm1887 = vcmp.lt.s32.totalorder %v1868, 1
    %vm1888 = vcmp.lt.s32.totalorder %v1868, 2
    %vm1889 = vcmp.lt.s32.totalorder %v1868, 3
    %vm1890 = vcmp.lt.s32.totalorder %v1868, 4
    %v1891 = vsel %vm1887, %v1871, %v1874
    %v1892 = vsel %vm1890, %v1880, 2102212464
    %v1893 = vsel %vm1889, %v1877, %v1892
    %v1894 = vsel %vm1888, %v1891, %v1893
    %v1895 = vsel %vm1887, %v1874, %v1877
    %v1896 = vsel %vm1890, %v1883, 920167782
    %v1897 = vsel %vm1889, %v1880, %v1896
    %v1898 = vsel %vm1888, %v1895, %v1897
    %v1899 = vsel %vm1887, %v1877, %v1880
    %v1900 = vsel %vm1890, %v1886, 1326507024
    %v1901 = vsel %vm1889, %v1883, %v1900
    %v1902 = vsel %vm1888, %v1899, %v1901
    %v1903 = vshll.u32 %v1863, 8
    %v1904 = vmul.u32.u64.compose %v1903, %v1902
    %v1905 = vextract.low.u32 %v1904
    %v1906 = vextract.high.u32 %v1904
    %v1907 = vmul.u32.u64.compose %v1903, %v1898
    %v1908 = vextract.low.u32 %v1907
    %v1909 = vextract.high.u32 %v1907
    %v1910 = vmul.u32 %v1903, %v1894
    %v1911 = vadd.s32 %v1906, %v1908
    %vm1912 = vc.u32 %v1906, %v1908
    %v1913 = vadd.s32 %v1909, 1
    %v1914 = vsel %vm1912, %v1913, %v1909
    %v1915 = vadd.s32 %v1910, %v1914
    %v1916 = vadd.s32 %v1915, 536870912
    %v1917 = vshrl.u32 %v1916, 30
    %v1918 = vshll.u32 %v1917, 30
    %v1919 = vsub.s32 %v1915, %v1918
    %vm1920 = vcmp.lt.s32.totalorder %v1919, 0
    %v1921 = vsub.s32 0, %v1919
    %v1922 = vsel %vm1920, %v1921, %v1919
    %v1923 = vclz %v1922
    %v1924 = vsub.s32 %v1923, 2
    %vm1925 = vcmp.gt.s32.totalorder 0, %v1924
    %v1926 = vsel %vm1925, 0, %v1924
    %v1927 = vsub.s32 32, %v1926
    %v1928 = vshll.u32 %v1919, %v1926
    %v1929 = vshrl.u32 %v1911, %v1927
    %v1930 = vor.u32 %v1928, %v1929
    %v1931 = vsub.s32 4294967266, %v1926
    %v1932 = vadd.s32 %v1931, 127
    %v1933 = vshll.u32 %v1932, 23
    %v1934 = vor.u32 4788187, %v1933
    %v1935 = vand.u32 2147483647, %v1934
    %v1937 = vcvt.s32.f32 %v1930
    %v1938 = vmul.f32 %v1937, %v1935
    %v1939 = vxor.u32 %v1938, 2147483648
    %v1940 = vsel %vm1857, %v1939, %v1938
    %v1941 = vsub.s32 4, %v1917
    %v1942 = vsel %vm1857, %v1941, %v1917
    %v1943 = vsel %vm1856, %v1751, %v1940
    %v1944 = vsel %vm1856, 0, %v1942
    %v1945 = vcosq.f32.pop %v1943
    %v1946 = vsinq.f32.pop %v1943
    %vm1947 = vweird.f32 %v1751
    %v1948 = vadd.s32 %v1944, 3
    %v1949 = vand.u32 %v1948, 3
    %vm1950 = vcmp.lt.s32.totalorder %v1949, 2
    %vm1951 = vcmp.eq.s32.totalorder %v1949, 0
    %v1952 = vxor.u32 %v1946, 2147483648
    %v1953 = vsel %vm1951, %v1945, %v1952
    %vm1954 = vcmp.eq.s32.totalorder %v1949, 2
    %v1955 = vxor.u32 %v1945, 2147483648
    %v1956 = vsel %vm1954, %v1955, %v1946
    %v1957 = vsel %vm1950, %v1953, %v1956
    %v1958 = vsel %vm1947, nan, %v1957
    %v1959 = vmul.f32 %v1854, 2.0
    %v1960 = vmul.f32 %v1959, %v1854
    %v1961 = vsub.f32 %v1960, 1.0
    %v1962 = vmul.f32 %v1958, 2.0
    %v1963 = vmul.f32 %v1962, %v1854
    %v1964 = vmul.f32 %v1854, %v20
    %v1965 = vadd.f32 %v18, %v1964
    %v1966 = vmul.f32 %v1961, %v22
    %v1967 = vadd.f32 %v1965, %v1966
    %v1968 = vmul.f32 %v1958, %v24
    %v1969 = vadd.f32 %v1967, %v1968
    %v1970 = vmul.f32 %v1963, %v26
    %v1971 = vadd.f32 %v1969, %v1970
    %v1972 = vmul.f32 %v1854, %v30
    %v1973 = vadd.f32 %v28, %v1972
    %v1974 = vmul.f32 %v1961, %v32
    %v1975 = vadd.f32 %v1973, %v1974
    %v1976 = vmul.f32 %v1958, %v34
    %v1977 = vadd.f32 %v1975, %v1976
    %v1978 = vmul.f32 %v1963, %v36
    %v1979 = vadd.f32 %v1977, %v1978
    %s1980 = scalar_lea.vmem %s0, 64
    %v1981 = vld [vmem:[%s1980] sm:$0x7f]
    %v1982 = vand.u32 2147483647, %v1981
    %vm1983 = vcmp.le.f32.partialorder %v1982, 0.7853982
    %vm1984 = vcmp.lt.s32.totalorder %v1981, 0
    %v1985 = vand.u32 %v1981, 2139095040
    %v1986 = vshrl.u32 %v1985, 23
    %v1987 = vsub.s32 %v1986, 127
    %v1988 = vand.u32 2147483647, %v1981
    %v1989 = vand.u32 %v1988, 8388607
    %v1990 = vor.u32 %v1989, 8388608
    %v1991 = vsub.s32 0, %v1990
    %v1992 = vadd.s32 %v1987, 1
    %vm1993 = vcmp.gt.s32.totalorder %v1992, 0
    %v1994 = vsel %vm1993, %v1992, 0
    %v1995 = vshrl.u32 %v1994, 5
    %v1996 = vand.u32 %v1994, 31
    %v1997 = vsub.s32 32, %v1996
    %v1998 = vshrl.u32 683565275, %v1997
    %v1999 = vshll.u32 683565275, %v1996
    %v2000 = vshrl.u32 2475754826, %v1997
    %v2001 = vor.u32 %v1999, %v2000
    %v2002 = vshll.u32 2475754826, %v1996
    %v2003 = vshrl.u32 2131351028, %v1997
    %v2004 = vor.u32 %v2002, %v2003
    %v2005 = vshll.u32 2131351028, %v1996
    %v2006 = vshrl.u32 2102212464, %v1997
    %v2007 = vor.u32 %v2005, %v2006
    %v2008 = vshll.u32 2102212464, %v1996
    %v2009 = vshrl.u32 920167782, %v1997
    %v2010 = vor.u32 %v2008, %v2009
    %v2011 = vshll.u32 920167782, %v1996
    %v2012 = vshrl.u32 1326507024, %v1997
    %v2013 = vor.u32 %v2011, %v2012
    %vm2014 = vcmp.lt.s32.totalorder %v1995, 1
    %vm2015 = vcmp.lt.s32.totalorder %v1995, 2
    %vm2016 = vcmp.lt.s32.totalorder %v1995, 3
    %vm2017 = vcmp.lt.s32.totalorder %v1995, 4
    %v2018 = vsel %vm2014, %v1998, %v2001
    %v2019 = vsel %vm2017, %v2007, 2102212464
    %v2020 = vsel %vm2016, %v2004, %v2019
    %v2021 = vsel %vm2015, %v2018, %v2020
    %v2022 = vsel %vm2014, %v2001, %v2004
    %v2023 = vsel %vm2017, %v2010, 920167782
    %v2024 = vsel %vm2016, %v2007, %v2023
    %v2025 = vsel %vm2015, %v2022, %v2024
    %v2026 = vsel %vm2014, %v2004, %v2007
    %v2027 = vsel %vm2017, %v2013, 1326507024
    %v2028 = vsel %vm2016, %v2010, %v2027
    %v2029 = vsel %vm2015, %v2026, %v2028
    %v2030 = vshll.u32 %v1990, 8
    %v2031 = vmul.u32.u64.compose %v2030, %v2029
    %v2032 = vextract.low.u32 %v2031
    %v2033 = vextract.high.u32 %v2031
    %v2034 = vmul.u32.u64.compose %v2030, %v2025
    %v2035 = vextract.low.u32 %v2034
    %v2036 = vextract.high.u32 %v2034
    %v2037 = vmul.u32 %v2030, %v2021
    %v2038 = vadd.s32 %v2033, %v2035
    %vm2039 = vc.u32 %v2033, %v2035
    %v2040 = vadd.s32 %v2036, 1
    %v2041 = vsel %vm2039, %v2040, %v2036
    %v2042 = vadd.s32 %v2037, %v2041
    %v2043 = vadd.s32 %v2042, 536870912
    %v2044 = vshrl.u32 %v2043, 30
    %v2045 = vshll.u32 %v2044, 30
    %v2046 = vsub.s32 %v2042, %v2045
    %vm2047 = vcmp.lt.s32.totalorder %v2046, 0
    %v2048 = vsub.s32 0, %v2046
    %v2049 = vsel %vm2047, %v2048, %v2046
    %v2050 = vclz %v2049
    %v2051 = vsub.s32 %v2050, 2
    %vm2052 = vcmp.gt.s32.totalorder 0, %v2051
    %v2053 = vsel %vm2052, 0, %v2051
    %v2054 = vsub.s32 32, %v2053
    %v2055 = vshll.u32 %v2046, %v2053
    %v2056 = vshrl.u32 %v2038, %v2054
    %v2057 = vor.u32 %v2055, %v2056
    %v2058 = vsub.s32 4294967266, %v2053
    %v2059 = vadd.s32 %v2058, 127
    %v2060 = vshll.u32 %v2059, 23
    %v2061 = vor.u32 4788187, %v2060
    %v2062 = vand.u32 2147483647, %v2061
    %v2064 = vcvt.s32.f32 %v2057
    %v2065 = vmul.f32 %v2064, %v2062
    %v2066 = vxor.u32 %v2065, 2147483648
    %v2067 = vsel %vm1984, %v2066, %v2065
    %v2068 = vsub.s32 4, %v2044
    %v2069 = vsel %vm1984, %v2068, %v2044
    %v2070 = vsel %vm1983, %v1981, %v2067
    %v2071 = vsel %vm1983, 0, %v2069
    %v2072 = vcosq.f32.pop %v2070
    %v2073 = vsinq.f32.pop %v2070
    %vm2074 = vweird.f32 %v1981
    %v2075 = vand.u32 %v2071, 3
    %vm2076 = vcmp.lt.s32.totalorder %v2075, 2
    %vm2077 = vcmp.eq.s32.totalorder %v2075, 0
    %v2078 = vxor.u32 %v2073, 2147483648
    %v2079 = vsel %vm2077, %v2072, %v2078
    %vm2080 = vcmp.eq.s32.totalorder %v2075, 2
    %v2081 = vxor.u32 %v2072, 2147483648
    %v2082 = vsel %vm2080, %v2081, %v2073
    %v2083 = vsel %vm2076, %v2079, %v2082
    %v2084 = vsel %vm2074, nan, %v2083
    %v2085 = vand.u32 2147483647, %v1981
    %vm2086 = vcmp.le.f32.partialorder %v2085, 0.7853982
    %vm2087 = vcmp.lt.s32.totalorder %v1981, 0
    %v2088 = vand.u32 %v1981, 2139095040
    %v2089 = vshrl.u32 %v2088, 23
    %v2090 = vsub.s32 %v2089, 127
    %v2091 = vand.u32 2147483647, %v1981
    %v2092 = vand.u32 %v2091, 8388607
    %v2093 = vor.u32 %v2092, 8388608
    %v2094 = vsub.s32 0, %v2093
    %v2095 = vadd.s32 %v2090, 1
    %vm2096 = vcmp.gt.s32.totalorder %v2095, 0
    %v2097 = vsel %vm2096, %v2095, 0
    %v2098 = vshrl.u32 %v2097, 5
    %v2099 = vand.u32 %v2097, 31
    %v2100 = vsub.s32 32, %v2099
    %v2101 = vshrl.u32 683565275, %v2100
    %v2102 = vshll.u32 683565275, %v2099
    %v2103 = vshrl.u32 2475754826, %v2100
    %v2104 = vor.u32 %v2102, %v2103
    %v2105 = vshll.u32 2475754826, %v2099
    %v2106 = vshrl.u32 2131351028, %v2100
    %v2107 = vor.u32 %v2105, %v2106
    %v2108 = vshll.u32 2131351028, %v2099
    %v2109 = vshrl.u32 2102212464, %v2100
    %v2110 = vor.u32 %v2108, %v2109
    %v2111 = vshll.u32 2102212464, %v2099
    %v2112 = vshrl.u32 920167782, %v2100
    %v2113 = vor.u32 %v2111, %v2112
    %v2114 = vshll.u32 920167782, %v2099
    %v2115 = vshrl.u32 1326507024, %v2100
    %v2116 = vor.u32 %v2114, %v2115
    %vm2117 = vcmp.lt.s32.totalorder %v2098, 1
    %vm2118 = vcmp.lt.s32.totalorder %v2098, 2
    %vm2119 = vcmp.lt.s32.totalorder %v2098, 3
    %vm2120 = vcmp.lt.s32.totalorder %v2098, 4
    %v2121 = vsel %vm2117, %v2101, %v2104
    %v2122 = vsel %vm2120, %v2110, 2102212464
    %v2123 = vsel %vm2119, %v2107, %v2122
    %v2124 = vsel %vm2118, %v2121, %v2123
    %v2125 = vsel %vm2117, %v2104, %v2107
    %v2126 = vsel %vm2120, %v2113, 920167782
    %v2127 = vsel %vm2119, %v2110, %v2126
    %v2128 = vsel %vm2118, %v2125, %v2127
    %v2129 = vsel %vm2117, %v2107, %v2110
    %v2130 = vsel %vm2120, %v2116, 1326507024
    %v2131 = vsel %vm2119, %v2113, %v2130
    %v2132 = vsel %vm2118, %v2129, %v2131
    %v2133 = vshll.u32 %v2093, 8
    %v2134 = vmul.u32.u64.compose %v2133, %v2132
    %v2135 = vextract.low.u32 %v2134
    %v2136 = vextract.high.u32 %v2134
    %v2137 = vmul.u32.u64.compose %v2133, %v2128
    %v2138 = vextract.low.u32 %v2137
    %v2139 = vextract.high.u32 %v2137
    %v2140 = vmul.u32 %v2133, %v2124
    %v2141 = vadd.s32 %v2136, %v2138
    %vm2142 = vc.u32 %v2136, %v2138
    %v2143 = vadd.s32 %v2139, 1
    %v2144 = vsel %vm2142, %v2143, %v2139
    %v2145 = vadd.s32 %v2140, %v2144
    %v2146 = vadd.s32 %v2145, 536870912
    %v2147 = vshrl.u32 %v2146, 30
    %v2148 = vshll.u32 %v2147, 30
    %v2149 = vsub.s32 %v2145, %v2148
    %vm2150 = vcmp.lt.s32.totalorder %v2149, 0
    %v2151 = vsub.s32 0, %v2149
    %v2152 = vsel %vm2150, %v2151, %v2149
    %v2153 = vclz %v2152
    %v2154 = vsub.s32 %v2153, 2
    %vm2155 = vcmp.gt.s32.totalorder 0, %v2154
    %v2156 = vsel %vm2155, 0, %v2154
    %v2157 = vsub.s32 32, %v2156
    %v2158 = vshll.u32 %v2149, %v2156
    %v2159 = vshrl.u32 %v2141, %v2157
    %v2160 = vor.u32 %v2158, %v2159
    %v2161 = vsub.s32 4294967266, %v2156
    %v2162 = vadd.s32 %v2161, 127
    %v2163 = vshll.u32 %v2162, 23
    %v2164 = vor.u32 4788187, %v2163
    %v2165 = vand.u32 2147483647, %v2164
    %v2167 = vcvt.s32.f32 %v2160
    %v2168 = vmul.f32 %v2167, %v2165
    %v2169 = vxor.u32 %v2168, 2147483648
    %v2170 = vsel %vm2087, %v2169, %v2168
    %v2171 = vsub.s32 4, %v2147
    %v2172 = vsel %vm2087, %v2171, %v2147
    %v2173 = vsel %vm2086, %v1981, %v2170
    %v2174 = vsel %vm2086, 0, %v2172
    %v2175 = vcosq.f32.pop %v2173
    %v2176 = vsinq.f32.pop %v2173
    %vm2177 = vweird.f32 %v1981
    %v2178 = vadd.s32 %v2174, 3
    %v2179 = vand.u32 %v2178, 3
    %vm2180 = vcmp.lt.s32.totalorder %v2179, 2
    %vm2181 = vcmp.eq.s32.totalorder %v2179, 0
    %v2182 = vxor.u32 %v2176, 2147483648
    %v2183 = vsel %vm2181, %v2175, %v2182
    %vm2184 = vcmp.eq.s32.totalorder %v2179, 2
    %v2185 = vxor.u32 %v2175, 2147483648
    %v2186 = vsel %vm2184, %v2185, %v2176
    %v2187 = vsel %vm2180, %v2183, %v2186
    %v2188 = vsel %vm2177, nan, %v2187
    %v2189 = vmul.f32 %v2084, 2.0
    %v2190 = vmul.f32 %v2189, %v2084
    %v2191 = vsub.f32 %v2190, 1.0
    %v2192 = vmul.f32 %v2188, 2.0
    %v2193 = vmul.f32 %v2192, %v2084
    %v2194 = vmul.f32 %v2084, %v20
    %v2195 = vadd.f32 %v18, %v2194
    %v2196 = vmul.f32 %v2191, %v22
    %v2197 = vadd.f32 %v2195, %v2196
    %v2198 = vmul.f32 %v2188, %v24
    %v2199 = vadd.f32 %v2197, %v2198
    %v2200 = vmul.f32 %v2193, %v26
    %v2201 = vadd.f32 %v2199, %v2200
    %v2202 = vmul.f32 %v2084, %v30
    %v2203 = vadd.f32 %v28, %v2202
    %v2204 = vmul.f32 %v2191, %v32
    %v2205 = vadd.f32 %v2203, %v2204
    %v2206 = vmul.f32 %v2188, %v34
    %v2207 = vadd.f32 %v2205, %v2206
    %v2208 = vmul.f32 %v2193, %v36
    %v2209 = vadd.f32 %v2207, %v2208
    %v2210 = vmul.f32 %v38, %v1707
    %v2211 = vmul.f32 %v1971, %v2210
    %v2212 = vadd.f32 %v1971, %v2211
    %v2213 = vmul.f32 %v38, %v1715
    %v2214 = vmul.f32 %v1971, %v2213
    %v2215 = vadd.f32 %v2214, %v1979
    %v2216 = vmul.f32 %v38, %v2212
    %v2217 = vmul.f32 %v1971, %v2216
    %v2218 = vadd.f32 %v1971, %v2217
    %v2219 = vmul.f32 %v38, %v2215
    %v2220 = vmul.f32 %v1971, %v2219
    %v2221 = vadd.f32 %v2220, %v1979
    %v2222 = vmul.f32 %v37, %v2218
    %v2223 = vmul.f32 %v2201, %v2222
    %v2224 = vadd.f32 %v2201, %v2223
    %v2225 = vmul.f32 %v37, %v2221
    %v2226 = vmul.f32 %v2201, %v2225
    %v2227 = vadd.f32 %v2226, %v2209
    %v2228 = vmul.f32 %v2212, 2.0
    %v2229 = vadd.f32 %v1707, %v2228
    %v2230 = vmul.f32 %v2218, 2.0
    %v2231 = vadd.f32 %v2229, %v2230
    %v2232 = vadd.f32 %v2231, %v2224
    %v2233 = vmul.f32 %v39, %v2232
    %v2234 = vadd.f32 %v2233, 1.0
    %v2235 = vmul.f32 %v2215, 2.0
    %v2236 = vadd.f32 %v1715, %v2235
    %v2237 = vmul.f32 %v2221, 2.0
    %v2238 = vadd.f32 %v2236, %v2237
    %v2239 = vadd.f32 %v2238, %v2227
    %v2240 = vmul.f32 %v39, %v2239
    %v2241 = vmul.f32 %v2234, %v1747
    %v2242 = vmul.f32 %v2234, %v1749
    %v2243 = vadd.f32 %v2242, %v2240
    %s2244 = scalar_lea.vmem %s0, 72
    %v2245 = vld [vmem:[%s2244] sm:$0x7f]
    %v2246 = vand.u32 2147483647, %v2245
    %vm2247 = vcmp.le.f32.partialorder %v2246, 0.7853982
    %vm2248 = vcmp.lt.s32.totalorder %v2245, 0
    %v2249 = vand.u32 %v2245, 2139095040
    %v2250 = vshrl.u32 %v2249, 23
    %v2251 = vsub.s32 %v2250, 127
    %v2252 = vand.u32 2147483647, %v2245
    %v2253 = vand.u32 %v2252, 8388607
    %v2254 = vor.u32 %v2253, 8388608
    %v2255 = vsub.s32 0, %v2254
    %v2256 = vadd.s32 %v2251, 1
    %vm2257 = vcmp.gt.s32.totalorder %v2256, 0
    %v2258 = vsel %vm2257, %v2256, 0
    %v2259 = vshrl.u32 %v2258, 5
    %v2260 = vand.u32 %v2258, 31
    %v2261 = vsub.s32 32, %v2260
    %v2262 = vshrl.u32 683565275, %v2261
    %v2263 = vshll.u32 683565275, %v2260
    %v2264 = vshrl.u32 2475754826, %v2261
    %v2265 = vor.u32 %v2263, %v2264
    %v2266 = vshll.u32 2475754826, %v2260
    %v2267 = vshrl.u32 2131351028, %v2261
    %v2268 = vor.u32 %v2266, %v2267
    %v2269 = vshll.u32 2131351028, %v2260
    %v2270 = vshrl.u32 2102212464, %v2261
    %v2271 = vor.u32 %v2269, %v2270
    %v2272 = vshll.u32 2102212464, %v2260
    %v2273 = vshrl.u32 920167782, %v2261
    %v2274 = vor.u32 %v2272, %v2273
    %v2275 = vshll.u32 920167782, %v2260
    %v2276 = vshrl.u32 1326507024, %v2261
    %v2277 = vor.u32 %v2275, %v2276
    %vm2278 = vcmp.lt.s32.totalorder %v2259, 1
    %vm2279 = vcmp.lt.s32.totalorder %v2259, 2
    %vm2280 = vcmp.lt.s32.totalorder %v2259, 3
    %vm2281 = vcmp.lt.s32.totalorder %v2259, 4
    %v2282 = vsel %vm2278, %v2262, %v2265
    %v2283 = vsel %vm2281, %v2271, 2102212464
    %v2284 = vsel %vm2280, %v2268, %v2283
    %v2285 = vsel %vm2279, %v2282, %v2284
    %v2286 = vsel %vm2278, %v2265, %v2268
    %v2287 = vsel %vm2281, %v2274, 920167782
    %v2288 = vsel %vm2280, %v2271, %v2287
    %v2289 = vsel %vm2279, %v2286, %v2288
    %v2290 = vsel %vm2278, %v2268, %v2271
    %v2291 = vsel %vm2281, %v2277, 1326507024
    %v2292 = vsel %vm2280, %v2274, %v2291
    %v2293 = vsel %vm2279, %v2290, %v2292
    %v2294 = vshll.u32 %v2254, 8
    %v2295 = vmul.u32.u64.compose %v2294, %v2293
    %v2296 = vextract.low.u32 %v2295
    %v2297 = vextract.high.u32 %v2295
    %v2298 = vmul.u32.u64.compose %v2294, %v2289
    %v2299 = vextract.low.u32 %v2298
    %v2300 = vextract.high.u32 %v2298
    %v2301 = vmul.u32 %v2294, %v2285
    %v2302 = vadd.s32 %v2297, %v2299
    %vm2303 = vc.u32 %v2297, %v2299
    %v2304 = vadd.s32 %v2300, 1
    %v2305 = vsel %vm2303, %v2304, %v2300
    %v2306 = vadd.s32 %v2301, %v2305
    %v2307 = vadd.s32 %v2306, 536870912
    %v2308 = vshrl.u32 %v2307, 30
    %v2309 = vshll.u32 %v2308, 30
    %v2310 = vsub.s32 %v2306, %v2309
    %vm2311 = vcmp.lt.s32.totalorder %v2310, 0
    %v2312 = vsub.s32 0, %v2310
    %v2313 = vsel %vm2311, %v2312, %v2310
    %v2314 = vclz %v2313
    %v2315 = vsub.s32 %v2314, 2
    %vm2316 = vcmp.gt.s32.totalorder 0, %v2315
    %v2317 = vsel %vm2316, 0, %v2315
    %v2318 = vsub.s32 32, %v2317
    %v2319 = vshll.u32 %v2310, %v2317
    %v2320 = vshrl.u32 %v2302, %v2318
    %v2321 = vor.u32 %v2319, %v2320
    %v2322 = vsub.s32 4294967266, %v2317
    %v2323 = vadd.s32 %v2322, 127
    %v2324 = vshll.u32 %v2323, 23
    %v2325 = vor.u32 4788187, %v2324
    %v2326 = vand.u32 2147483647, %v2325
    %v2328 = vcvt.s32.f32 %v2321
    %v2329 = vmul.f32 %v2328, %v2326
    %v2330 = vxor.u32 %v2329, 2147483648
    %v2331 = vsel %vm2248, %v2330, %v2329
    %v2332 = vsub.s32 4, %v2308
    %v2333 = vsel %vm2248, %v2332, %v2308
    %v2334 = vsel %vm2247, %v2245, %v2331
    %v2335 = vsel %vm2247, 0, %v2333
    %v2336 = vcosq.f32.pop %v2334
    %v2337 = vsinq.f32.pop %v2334
    %vm2338 = vweird.f32 %v2245
    %v2339 = vand.u32 %v2335, 3
    %vm2340 = vcmp.lt.s32.totalorder %v2339, 2
    %vm2341 = vcmp.eq.s32.totalorder %v2339, 0
    %v2342 = vxor.u32 %v2337, 2147483648
    %v2343 = vsel %vm2341, %v2336, %v2342
    %vm2344 = vcmp.eq.s32.totalorder %v2339, 2
    %v2345 = vxor.u32 %v2336, 2147483648
    %v2346 = vsel %vm2344, %v2345, %v2337
    %v2347 = vsel %vm2340, %v2343, %v2346
    %v2348 = vsel %vm2338, nan, %v2347
    %v2349 = vand.u32 2147483647, %v2245
    %vm2350 = vcmp.le.f32.partialorder %v2349, 0.7853982
    %vm2351 = vcmp.lt.s32.totalorder %v2245, 0
    %v2352 = vand.u32 %v2245, 2139095040
    %v2353 = vshrl.u32 %v2352, 23
    %v2354 = vsub.s32 %v2353, 127
    %v2355 = vand.u32 2147483647, %v2245
    %v2356 = vand.u32 %v2355, 8388607
    %v2357 = vor.u32 %v2356, 8388608
    %v2358 = vsub.s32 0, %v2357
    %v2359 = vadd.s32 %v2354, 1
    %vm2360 = vcmp.gt.s32.totalorder %v2359, 0
    %v2361 = vsel %vm2360, %v2359, 0
    %v2362 = vshrl.u32 %v2361, 5
    %v2363 = vand.u32 %v2361, 31
    %v2364 = vsub.s32 32, %v2363
    %v2365 = vshrl.u32 683565275, %v2364
    %v2366 = vshll.u32 683565275, %v2363
    %v2367 = vshrl.u32 2475754826, %v2364
    %v2368 = vor.u32 %v2366, %v2367
    %v2369 = vshll.u32 2475754826, %v2363
    %v2370 = vshrl.u32 2131351028, %v2364
    %v2371 = vor.u32 %v2369, %v2370
    %v2372 = vshll.u32 2131351028, %v2363
    %v2373 = vshrl.u32 2102212464, %v2364
    %v2374 = vor.u32 %v2372, %v2373
    %v2375 = vshll.u32 2102212464, %v2363
    %v2376 = vshrl.u32 920167782, %v2364
    %v2377 = vor.u32 %v2375, %v2376
    %v2378 = vshll.u32 920167782, %v2363
    %v2379 = vshrl.u32 1326507024, %v2364
    %v2380 = vor.u32 %v2378, %v2379
    %vm2381 = vcmp.lt.s32.totalorder %v2362, 1
    %vm2382 = vcmp.lt.s32.totalorder %v2362, 2
    %vm2383 = vcmp.lt.s32.totalorder %v2362, 3
    %vm2384 = vcmp.lt.s32.totalorder %v2362, 4
    %v2385 = vsel %vm2381, %v2365, %v2368
    %v2386 = vsel %vm2384, %v2374, 2102212464
    %v2387 = vsel %vm2383, %v2371, %v2386
    %v2388 = vsel %vm2382, %v2385, %v2387
    %v2389 = vsel %vm2381, %v2368, %v2371
    %v2390 = vsel %vm2384, %v2377, 920167782
    %v2391 = vsel %vm2383, %v2374, %v2390
    %v2392 = vsel %vm2382, %v2389, %v2391
    %v2393 = vsel %vm2381, %v2371, %v2374
    %v2394 = vsel %vm2384, %v2380, 1326507024
    %v2395 = vsel %vm2383, %v2377, %v2394
    %v2396 = vsel %vm2382, %v2393, %v2395
    %v2397 = vshll.u32 %v2357, 8
    %v2398 = vmul.u32.u64.compose %v2397, %v2396
    %v2399 = vextract.low.u32 %v2398
    %v2400 = vextract.high.u32 %v2398
    %v2401 = vmul.u32.u64.compose %v2397, %v2392
    %v2402 = vextract.low.u32 %v2401
    %v2403 = vextract.high.u32 %v2401
    %v2404 = vmul.u32 %v2397, %v2388
    %v2405 = vadd.s32 %v2400, %v2402
    %vm2406 = vc.u32 %v2400, %v2402
    %v2407 = vadd.s32 %v2403, 1
    %v2408 = vsel %vm2406, %v2407, %v2403
    %v2409 = vadd.s32 %v2404, %v2408
    %v2410 = vadd.s32 %v2409, 536870912
    %v2411 = vshrl.u32 %v2410, 30
    %v2412 = vshll.u32 %v2411, 30
    %v2413 = vsub.s32 %v2409, %v2412
    %vm2414 = vcmp.lt.s32.totalorder %v2413, 0
    %v2415 = vsub.s32 0, %v2413
    %v2416 = vsel %vm2414, %v2415, %v2413
    %v2417 = vclz %v2416
    %v2418 = vsub.s32 %v2417, 2
    %vm2419 = vcmp.gt.s32.totalorder 0, %v2418
    %v2420 = vsel %vm2419, 0, %v2418
    %v2421 = vsub.s32 32, %v2420
    %v2422 = vshll.u32 %v2413, %v2420
    %v2423 = vshrl.u32 %v2405, %v2421
    %v2424 = vor.u32 %v2422, %v2423
    %v2425 = vsub.s32 4294967266, %v2420
    %v2426 = vadd.s32 %v2425, 127
    %v2427 = vshll.u32 %v2426, 23
    %v2428 = vor.u32 4788187, %v2427
    %v2429 = vand.u32 2147483647, %v2428
    %v2431 = vcvt.s32.f32 %v2424
    %v2432 = vmul.f32 %v2431, %v2429
    %v2433 = vxor.u32 %v2432, 2147483648
    %v2434 = vsel %vm2351, %v2433, %v2432
    %v2435 = vsub.s32 4, %v2411
    %v2436 = vsel %vm2351, %v2435, %v2411
    %v2437 = vsel %vm2350, %v2245, %v2434
    %v2438 = vsel %vm2350, 0, %v2436
    %v2439 = vcosq.f32.pop %v2437
    %v2440 = vsinq.f32.pop %v2437
    %vm2441 = vweird.f32 %v2245
    %v2442 = vadd.s32 %v2438, 3
    %v2443 = vand.u32 %v2442, 3
    %vm2444 = vcmp.lt.s32.totalorder %v2443, 2
    %vm2445 = vcmp.eq.s32.totalorder %v2443, 0
    %v2446 = vxor.u32 %v2440, 2147483648
    %v2447 = vsel %vm2445, %v2439, %v2446
    %vm2448 = vcmp.eq.s32.totalorder %v2443, 2
    %v2449 = vxor.u32 %v2439, 2147483648
    %v2450 = vsel %vm2448, %v2449, %v2440
    %v2451 = vsel %vm2444, %v2447, %v2450
    %v2452 = vsel %vm2441, nan, %v2451
    %v2453 = vmul.f32 %v2348, 2.0
    %v2454 = vmul.f32 %v2453, %v2348
    %v2455 = vsub.f32 %v2454, 1.0
    %v2456 = vmul.f32 %v2452, 2.0
    %v2457 = vmul.f32 %v2456, %v2348
    %v2458 = vmul.f32 %v2348, %v20
    %v2459 = vadd.f32 %v18, %v2458
    %v2460 = vmul.f32 %v2455, %v22
    %v2461 = vadd.f32 %v2459, %v2460
    %v2462 = vmul.f32 %v2452, %v24
    %v2463 = vadd.f32 %v2461, %v2462
    %v2464 = vmul.f32 %v2457, %v26
    %v2465 = vadd.f32 %v2463, %v2464
    %v2466 = vmul.f32 %v2348, %v30
    %v2467 = vadd.f32 %v28, %v2466
    %v2468 = vmul.f32 %v2455, %v32
    %v2469 = vadd.f32 %v2467, %v2468
    %v2470 = vmul.f32 %v2452, %v34
    %v2471 = vadd.f32 %v2469, %v2470
    %v2472 = vmul.f32 %v2457, %v36
    %v2473 = vadd.f32 %v2471, %v2472
    %s2474 = scalar_lea.vmem %s0, 80
    %v2475 = vld [vmem:[%s2474] sm:$0x7f]
    %v2476 = vand.u32 2147483647, %v2475
    %vm2477 = vcmp.le.f32.partialorder %v2476, 0.7853982
    %vm2478 = vcmp.lt.s32.totalorder %v2475, 0
    %v2479 = vand.u32 %v2475, 2139095040
    %v2480 = vshrl.u32 %v2479, 23
    %v2481 = vsub.s32 %v2480, 127
    %v2482 = vand.u32 2147483647, %v2475
    %v2483 = vand.u32 %v2482, 8388607
    %v2484 = vor.u32 %v2483, 8388608
    %v2485 = vsub.s32 0, %v2484
    %v2486 = vadd.s32 %v2481, 1
    %vm2487 = vcmp.gt.s32.totalorder %v2486, 0
    %v2488 = vsel %vm2487, %v2486, 0
    %v2489 = vshrl.u32 %v2488, 5
    %v2490 = vand.u32 %v2488, 31
    %v2491 = vsub.s32 32, %v2490
    %v2492 = vshrl.u32 683565275, %v2491
    %v2493 = vshll.u32 683565275, %v2490
    %v2494 = vshrl.u32 2475754826, %v2491
    %v2495 = vor.u32 %v2493, %v2494
    %v2496 = vshll.u32 2475754826, %v2490
    %v2497 = vshrl.u32 2131351028, %v2491
    %v2498 = vor.u32 %v2496, %v2497
    %v2499 = vshll.u32 2131351028, %v2490
    %v2500 = vshrl.u32 2102212464, %v2491
    %v2501 = vor.u32 %v2499, %v2500
    %v2502 = vshll.u32 2102212464, %v2490
    %v2503 = vshrl.u32 920167782, %v2491
    %v2504 = vor.u32 %v2502, %v2503
    %v2505 = vshll.u32 920167782, %v2490
    %v2506 = vshrl.u32 1326507024, %v2491
    %v2507 = vor.u32 %v2505, %v2506
    %vm2508 = vcmp.lt.s32.totalorder %v2489, 1
    %vm2509 = vcmp.lt.s32.totalorder %v2489, 2
    %vm2510 = vcmp.lt.s32.totalorder %v2489, 3
    %vm2511 = vcmp.lt.s32.totalorder %v2489, 4
    %v2512 = vsel %vm2508, %v2492, %v2495
    %v2513 = vsel %vm2511, %v2501, 2102212464
    %v2514 = vsel %vm2510, %v2498, %v2513
    %v2515 = vsel %vm2509, %v2512, %v2514
    %v2516 = vsel %vm2508, %v2495, %v2498
    %v2517 = vsel %vm2511, %v2504, 920167782
    %v2518 = vsel %vm2510, %v2501, %v2517
    %v2519 = vsel %vm2509, %v2516, %v2518
    %v2520 = vsel %vm2508, %v2498, %v2501
    %v2521 = vsel %vm2511, %v2507, 1326507024
    %v2522 = vsel %vm2510, %v2504, %v2521
    %v2523 = vsel %vm2509, %v2520, %v2522
    %v2524 = vshll.u32 %v2484, 8
    %v2525 = vmul.u32.u64.compose %v2524, %v2523
    %v2526 = vextract.low.u32 %v2525
    %v2527 = vextract.high.u32 %v2525
    %v2528 = vmul.u32.u64.compose %v2524, %v2519
    %v2529 = vextract.low.u32 %v2528
    %v2530 = vextract.high.u32 %v2528
    %v2531 = vmul.u32 %v2524, %v2515
    %v2532 = vadd.s32 %v2527, %v2529
    %vm2533 = vc.u32 %v2527, %v2529
    %v2534 = vadd.s32 %v2530, 1
    %v2535 = vsel %vm2533, %v2534, %v2530
    %v2536 = vadd.s32 %v2531, %v2535
    %v2537 = vadd.s32 %v2536, 536870912
    %v2538 = vshrl.u32 %v2537, 30
    %v2539 = vshll.u32 %v2538, 30
    %v2540 = vsub.s32 %v2536, %v2539
    %vm2541 = vcmp.lt.s32.totalorder %v2540, 0
    %v2542 = vsub.s32 0, %v2540
    %v2543 = vsel %vm2541, %v2542, %v2540
    %v2544 = vclz %v2543
    %v2545 = vsub.s32 %v2544, 2
    %vm2546 = vcmp.gt.s32.totalorder 0, %v2545
    %v2547 = vsel %vm2546, 0, %v2545
    %v2548 = vsub.s32 32, %v2547
    %v2549 = vshll.u32 %v2540, %v2547
    %v2550 = vshrl.u32 %v2532, %v2548
    %v2551 = vor.u32 %v2549, %v2550
    %v2552 = vsub.s32 4294967266, %v2547
    %v2553 = vadd.s32 %v2552, 127
    %v2554 = vshll.u32 %v2553, 23
    %v2555 = vor.u32 4788187, %v2554
    %v2556 = vand.u32 2147483647, %v2555
    %v2558 = vcvt.s32.f32 %v2551
    %v2559 = vmul.f32 %v2558, %v2556
    %v2560 = vxor.u32 %v2559, 2147483648
    %v2561 = vsel %vm2478, %v2560, %v2559
    %v2562 = vsub.s32 4, %v2538
    %v2563 = vsel %vm2478, %v2562, %v2538
    %v2564 = vsel %vm2477, %v2475, %v2561
    %v2565 = vsel %vm2477, 0, %v2563
    %v2566 = vcosq.f32.pop %v2564
    %v2567 = vsinq.f32.pop %v2564
    %vm2568 = vweird.f32 %v2475
    %v2569 = vand.u32 %v2565, 3
    %vm2570 = vcmp.lt.s32.totalorder %v2569, 2
    %vm2571 = vcmp.eq.s32.totalorder %v2569, 0
    %v2572 = vxor.u32 %v2567, 2147483648
    %v2573 = vsel %vm2571, %v2566, %v2572
    %vm2574 = vcmp.eq.s32.totalorder %v2569, 2
    %v2575 = vxor.u32 %v2566, 2147483648
    %v2576 = vsel %vm2574, %v2575, %v2567
    %v2577 = vsel %vm2570, %v2573, %v2576
    %v2578 = vsel %vm2568, nan, %v2577
    %v2579 = vand.u32 2147483647, %v2475
    %vm2580 = vcmp.le.f32.partialorder %v2579, 0.7853982
    %vm2581 = vcmp.lt.s32.totalorder %v2475, 0
    %v2582 = vand.u32 %v2475, 2139095040
    %v2583 = vshrl.u32 %v2582, 23
    %v2584 = vsub.s32 %v2583, 127
    %v2585 = vand.u32 2147483647, %v2475
    %v2586 = vand.u32 %v2585, 8388607
    %v2587 = vor.u32 %v2586, 8388608
    %v2588 = vsub.s32 0, %v2587
    %v2589 = vadd.s32 %v2584, 1
    %vm2590 = vcmp.gt.s32.totalorder %v2589, 0
    %v2591 = vsel %vm2590, %v2589, 0
    %v2592 = vshrl.u32 %v2591, 5
    %v2593 = vand.u32 %v2591, 31
    %v2594 = vsub.s32 32, %v2593
    %v2595 = vshrl.u32 683565275, %v2594
    %v2596 = vshll.u32 683565275, %v2593
    %v2597 = vshrl.u32 2475754826, %v2594
    %v2598 = vor.u32 %v2596, %v2597
    %v2599 = vshll.u32 2475754826, %v2593
    %v2600 = vshrl.u32 2131351028, %v2594
    %v2601 = vor.u32 %v2599, %v2600
    %v2602 = vshll.u32 2131351028, %v2593
    %v2603 = vshrl.u32 2102212464, %v2594
    %v2604 = vor.u32 %v2602, %v2603
    %v2605 = vshll.u32 2102212464, %v2593
    %v2606 = vshrl.u32 920167782, %v2594
    %v2607 = vor.u32 %v2605, %v2606
    %v2608 = vshll.u32 920167782, %v2593
    %v2609 = vshrl.u32 1326507024, %v2594
    %v2610 = vor.u32 %v2608, %v2609
    %vm2611 = vcmp.lt.s32.totalorder %v2592, 1
    %vm2612 = vcmp.lt.s32.totalorder %v2592, 2
    %vm2613 = vcmp.lt.s32.totalorder %v2592, 3
    %vm2614 = vcmp.lt.s32.totalorder %v2592, 4
    %v2615 = vsel %vm2611, %v2595, %v2598
    %v2616 = vsel %vm2614, %v2604, 2102212464
    %v2617 = vsel %vm2613, %v2601, %v2616
    %v2618 = vsel %vm2612, %v2615, %v2617
    %v2619 = vsel %vm2611, %v2598, %v2601
    %v2620 = vsel %vm2614, %v2607, 920167782
    %v2621 = vsel %vm2613, %v2604, %v2620
    %v2622 = vsel %vm2612, %v2619, %v2621
    %v2623 = vsel %vm2611, %v2601, %v2604
    %v2624 = vsel %vm2614, %v2610, 1326507024
    %v2625 = vsel %vm2613, %v2607, %v2624
    %v2626 = vsel %vm2612, %v2623, %v2625
    %v2627 = vshll.u32 %v2587, 8
    %v2628 = vmul.u32.u64.compose %v2627, %v2626
    %v2629 = vextract.low.u32 %v2628
    %v2630 = vextract.high.u32 %v2628
    %v2631 = vmul.u32.u64.compose %v2627, %v2622
    %v2632 = vextract.low.u32 %v2631
    %v2633 = vextract.high.u32 %v2631
    %v2634 = vmul.u32 %v2627, %v2618
    %v2635 = vadd.s32 %v2630, %v2632
    %vm2636 = vc.u32 %v2630, %v2632
    %v2637 = vadd.s32 %v2633, 1
    %v2638 = vsel %vm2636, %v2637, %v2633
    %v2639 = vadd.s32 %v2634, %v2638
    %v2640 = vadd.s32 %v2639, 536870912
    %v2641 = vshrl.u32 %v2640, 30
    %v2642 = vshll.u32 %v2641, 30
    %v2643 = vsub.s32 %v2639, %v2642
    %vm2644 = vcmp.lt.s32.totalorder %v2643, 0
    %v2645 = vsub.s32 0, %v2643
    %v2646 = vsel %vm2644, %v2645, %v2643
    %v2647 = vclz %v2646
    %v2648 = vsub.s32 %v2647, 2
    %vm2649 = vcmp.gt.s32.totalorder 0, %v2648
    %v2650 = vsel %vm2649, 0, %v2648
    %v2651 = vsub.s32 32, %v2650
    %v2652 = vshll.u32 %v2643, %v2650
    %v2653 = vshrl.u32 %v2635, %v2651
    %v2654 = vor.u32 %v2652, %v2653
    %v2655 = vsub.s32 4294967266, %v2650
    %v2656 = vadd.s32 %v2655, 127
    %v2657 = vshll.u32 %v2656, 23
    %v2658 = vor.u32 4788187, %v2657
    %v2659 = vand.u32 2147483647, %v2658
    %v2661 = vcvt.s32.f32 %v2654
    %v2662 = vmul.f32 %v2661, %v2659
    %v2663 = vxor.u32 %v2662, 2147483648
    %v2664 = vsel %vm2581, %v2663, %v2662
    %v2665 = vsub.s32 4, %v2641
    %v2666 = vsel %vm2581, %v2665, %v2641
    %v2667 = vsel %vm2580, %v2475, %v2664
    %v2668 = vsel %vm2580, 0, %v2666
    %v2669 = vcosq.f32.pop %v2667
    %v2670 = vsinq.f32.pop %v2667
    %vm2671 = vweird.f32 %v2475
    %v2672 = vadd.s32 %v2668, 3
    %v2673 = vand.u32 %v2672, 3
    %vm2674 = vcmp.lt.s32.totalorder %v2673, 2
    %vm2675 = vcmp.eq.s32.totalorder %v2673, 0
    %v2676 = vxor.u32 %v2670, 2147483648
    %v2677 = vsel %vm2675, %v2669, %v2676
    %vm2678 = vcmp.eq.s32.totalorder %v2673, 2
    %v2679 = vxor.u32 %v2669, 2147483648
    %v2680 = vsel %vm2678, %v2679, %v2670
    %v2681 = vsel %vm2674, %v2677, %v2680
    %v2682 = vsel %vm2671, nan, %v2681
    %v2683 = vmul.f32 %v2578, 2.0
    %v2684 = vmul.f32 %v2683, %v2578
    %v2685 = vsub.f32 %v2684, 1.0
    %v2686 = vmul.f32 %v2682, 2.0
    %v2687 = vmul.f32 %v2686, %v2578
    %v2688 = vmul.f32 %v2578, %v20
    %v2689 = vadd.f32 %v18, %v2688
    %v2690 = vmul.f32 %v2685, %v22
    %v2691 = vadd.f32 %v2689, %v2690
    %v2692 = vmul.f32 %v2682, %v24
    %v2693 = vadd.f32 %v2691, %v2692
    %v2694 = vmul.f32 %v2687, %v26
    %v2695 = vadd.f32 %v2693, %v2694
    %v2696 = vmul.f32 %v2578, %v30
    %v2697 = vadd.f32 %v28, %v2696
    %v2698 = vmul.f32 %v2685, %v32
    %v2699 = vadd.f32 %v2697, %v2698
    %v2700 = vmul.f32 %v2682, %v34
    %v2701 = vadd.f32 %v2699, %v2700
    %v2702 = vmul.f32 %v2687, %v36
    %v2703 = vadd.f32 %v2701, %v2702
    %v2704 = vmul.f32 %v38, %v2201
    %v2705 = vmul.f32 %v2465, %v2704
    %v2706 = vadd.f32 %v2465, %v2705
    %v2707 = vmul.f32 %v38, %v2209
    %v2708 = vmul.f32 %v2465, %v2707
    %v2709 = vadd.f32 %v2708, %v2473
    %v2710 = vmul.f32 %v38, %v2706
    %v2711 = vmul.f32 %v2465, %v2710
    %v2712 = vadd.f32 %v2465, %v2711
    %v2713 = vmul.f32 %v38, %v2709
    %v2714 = vmul.f32 %v2465, %v2713
    %v2715 = vadd.f32 %v2714, %v2473
    %v2716 = vmul.f32 %v37, %v2712
    %v2717 = vmul.f32 %v2695, %v2716
    %v2718 = vadd.f32 %v2695, %v2717
    %v2719 = vmul.f32 %v37, %v2715
    %v2720 = vmul.f32 %v2695, %v2719
    %v2721 = vadd.f32 %v2720, %v2703
    %v2722 = vmul.f32 %v2706, 2.0
    %v2723 = vadd.f32 %v2201, %v2722
    %v2724 = vmul.f32 %v2712, 2.0
    %v2725 = vadd.f32 %v2723, %v2724
    %v2726 = vadd.f32 %v2725, %v2718
    %v2727 = vmul.f32 %v39, %v2726
    %v2728 = vadd.f32 %v2727, 1.0
    %v2729 = vmul.f32 %v2709, 2.0
    %v2730 = vadd.f32 %v2209, %v2729
    %v2731 = vmul.f32 %v2715, 2.0
    %v2732 = vadd.f32 %v2730, %v2731
    %v2733 = vadd.f32 %v2732, %v2721
    %v2734 = vmul.f32 %v39, %v2733
    %v2735 = vmul.f32 %v2728, %v2241
    %v2736 = vmul.f32 %v2728, %v2243
    %v2737 = vadd.f32 %v2736, %v2734
    %s2738 = scalar_lea.vmem %s0, 88
    %v2739 = vld [vmem:[%s2738] sm:$0x7f]
    %v2740 = vand.u32 2147483647, %v2739
    %vm2741 = vcmp.le.f32.partialorder %v2740, 0.7853982
    %vm2742 = vcmp.lt.s32.totalorder %v2739, 0
    %v2743 = vand.u32 %v2739, 2139095040
    %v2744 = vshrl.u32 %v2743, 23
    %v2745 = vsub.s32 %v2744, 127
    %v2746 = vand.u32 2147483647, %v2739
    %v2747 = vand.u32 %v2746, 8388607
    %v2748 = vor.u32 %v2747, 8388608
    %v2749 = vsub.s32 0, %v2748
    %v2750 = vadd.s32 %v2745, 1
    %vm2751 = vcmp.gt.s32.totalorder %v2750, 0
    %v2752 = vsel %vm2751, %v2750, 0
    %v2753 = vshrl.u32 %v2752, 5
    %v2754 = vand.u32 %v2752, 31
    %v2755 = vsub.s32 32, %v2754
    %v2756 = vshrl.u32 683565275, %v2755
    %v2757 = vshll.u32 683565275, %v2754
    %v2758 = vshrl.u32 2475754826, %v2755
    %v2759 = vor.u32 %v2757, %v2758
    %v2760 = vshll.u32 2475754826, %v2754
    %v2761 = vshrl.u32 2131351028, %v2755
    %v2762 = vor.u32 %v2760, %v2761
    %v2763 = vshll.u32 2131351028, %v2754
    %v2764 = vshrl.u32 2102212464, %v2755
    %v2765 = vor.u32 %v2763, %v2764
    %v2766 = vshll.u32 2102212464, %v2754
    %v2767 = vshrl.u32 920167782, %v2755
    %v2768 = vor.u32 %v2766, %v2767
    %v2769 = vshll.u32 920167782, %v2754
    %v2770 = vshrl.u32 1326507024, %v2755
    %v2771 = vor.u32 %v2769, %v2770
    %vm2772 = vcmp.lt.s32.totalorder %v2753, 1
    %vm2773 = vcmp.lt.s32.totalorder %v2753, 2
    %vm2774 = vcmp.lt.s32.totalorder %v2753, 3
    %vm2775 = vcmp.lt.s32.totalorder %v2753, 4
    %v2776 = vsel %vm2772, %v2756, %v2759
    %v2777 = vsel %vm2775, %v2765, 2102212464
    %v2778 = vsel %vm2774, %v2762, %v2777
    %v2779 = vsel %vm2773, %v2776, %v2778
    %v2780 = vsel %vm2772, %v2759, %v2762
    %v2781 = vsel %vm2775, %v2768, 920167782
    %v2782 = vsel %vm2774, %v2765, %v2781
    %v2783 = vsel %vm2773, %v2780, %v2782
    %v2784 = vsel %vm2772, %v2762, %v2765
    %v2785 = vsel %vm2775, %v2771, 1326507024
    %v2786 = vsel %vm2774, %v2768, %v2785
    %v2787 = vsel %vm2773, %v2784, %v2786
    %v2788 = vshll.u32 %v2748, 8
    %v2789 = vmul.u32.u64.compose %v2788, %v2787
    %v2790 = vextract.low.u32 %v2789
    %v2791 = vextract.high.u32 %v2789
    %v2792 = vmul.u32.u64.compose %v2788, %v2783
    %v2793 = vextract.low.u32 %v2792
    %v2794 = vextract.high.u32 %v2792
    %v2795 = vmul.u32 %v2788, %v2779
    %v2796 = vadd.s32 %v2791, %v2793
    %vm2797 = vc.u32 %v2791, %v2793
    %v2798 = vadd.s32 %v2794, 1
    %v2799 = vsel %vm2797, %v2798, %v2794
    %v2800 = vadd.s32 %v2795, %v2799
    %v2801 = vadd.s32 %v2800, 536870912
    %v2802 = vshrl.u32 %v2801, 30
    %v2803 = vshll.u32 %v2802, 30
    %v2804 = vsub.s32 %v2800, %v2803
    %vm2805 = vcmp.lt.s32.totalorder %v2804, 0
    %v2806 = vsub.s32 0, %v2804
    %v2807 = vsel %vm2805, %v2806, %v2804
    %v2808 = vclz %v2807
    %v2809 = vsub.s32 %v2808, 2
    %vm2810 = vcmp.gt.s32.totalorder 0, %v2809
    %v2811 = vsel %vm2810, 0, %v2809
    %v2812 = vsub.s32 32, %v2811
    %v2813 = vshll.u32 %v2804, %v2811
    %v2814 = vshrl.u32 %v2796, %v2812
    %v2815 = vor.u32 %v2813, %v2814
    %v2816 = vsub.s32 4294967266, %v2811
    %v2817 = vadd.s32 %v2816, 127
    %v2818 = vshll.u32 %v2817, 23
    %v2819 = vor.u32 4788187, %v2818
    %v2820 = vand.u32 2147483647, %v2819
    %v2822 = vcvt.s32.f32 %v2815
    %v2823 = vmul.f32 %v2822, %v2820
    %v2824 = vxor.u32 %v2823, 2147483648
    %v2825 = vsel %vm2742, %v2824, %v2823
    %v2826 = vsub.s32 4, %v2802
    %v2827 = vsel %vm2742, %v2826, %v2802
    %v2828 = vsel %vm2741, %v2739, %v2825
    %v2829 = vsel %vm2741, 0, %v2827
    %v2830 = vcosq.f32.pop %v2828
    %v2831 = vsinq.f32.pop %v2828
    %vm2832 = vweird.f32 %v2739
    %v2833 = vand.u32 %v2829, 3
    %vm2834 = vcmp.lt.s32.totalorder %v2833, 2
    %vm2835 = vcmp.eq.s32.totalorder %v2833, 0
    %v2836 = vxor.u32 %v2831, 2147483648
    %v2837 = vsel %vm2835, %v2830, %v2836
    %vm2838 = vcmp.eq.s32.totalorder %v2833, 2
    %v2839 = vxor.u32 %v2830, 2147483648
    %v2840 = vsel %vm2838, %v2839, %v2831
    %v2841 = vsel %vm2834, %v2837, %v2840
    %v2842 = vsel %vm2832, nan, %v2841
    %v2843 = vand.u32 2147483647, %v2739
    %vm2844 = vcmp.le.f32.partialorder %v2843, 0.7853982
    %vm2845 = vcmp.lt.s32.totalorder %v2739, 0
    %v2846 = vand.u32 %v2739, 2139095040
    %v2847 = vshrl.u32 %v2846, 23
    %v2848 = vsub.s32 %v2847, 127
    %v2849 = vand.u32 2147483647, %v2739
    %v2850 = vand.u32 %v2849, 8388607
    %v2851 = vor.u32 %v2850, 8388608
    %v2852 = vsub.s32 0, %v2851
    %v2853 = vadd.s32 %v2848, 1
    %vm2854 = vcmp.gt.s32.totalorder %v2853, 0
    %v2855 = vsel %vm2854, %v2853, 0
    %v2856 = vshrl.u32 %v2855, 5
    %v2857 = vand.u32 %v2855, 31
    %v2858 = vsub.s32 32, %v2857
    %v2859 = vshrl.u32 683565275, %v2858
    %v2860 = vshll.u32 683565275, %v2857
    %v2861 = vshrl.u32 2475754826, %v2858
    %v2862 = vor.u32 %v2860, %v2861
    %v2863 = vshll.u32 2475754826, %v2857
    %v2864 = vshrl.u32 2131351028, %v2858
    %v2865 = vor.u32 %v2863, %v2864
    %v2866 = vshll.u32 2131351028, %v2857
    %v2867 = vshrl.u32 2102212464, %v2858
    %v2868 = vor.u32 %v2866, %v2867
    %v2869 = vshll.u32 2102212464, %v2857
    %v2870 = vshrl.u32 920167782, %v2858
    %v2871 = vor.u32 %v2869, %v2870
    %v2872 = vshll.u32 920167782, %v2857
    %v2873 = vshrl.u32 1326507024, %v2858
    %v2874 = vor.u32 %v2872, %v2873
    %vm2875 = vcmp.lt.s32.totalorder %v2856, 1
    %vm2876 = vcmp.lt.s32.totalorder %v2856, 2
    %vm2877 = vcmp.lt.s32.totalorder %v2856, 3
    %vm2878 = vcmp.lt.s32.totalorder %v2856, 4
    %v2879 = vsel %vm2875, %v2859, %v2862
    %v2880 = vsel %vm2878, %v2868, 2102212464
    %v2881 = vsel %vm2877, %v2865, %v2880
    %v2882 = vsel %vm2876, %v2879, %v2881
    %v2883 = vsel %vm2875, %v2862, %v2865
    %v2884 = vsel %vm2878, %v2871, 920167782
    %v2885 = vsel %vm2877, %v2868, %v2884
    %v2886 = vsel %vm2876, %v2883, %v2885
    %v2887 = vsel %vm2875, %v2865, %v2868
    %v2888 = vsel %vm2878, %v2874, 1326507024
    %v2889 = vsel %vm2877, %v2871, %v2888
    %v2890 = vsel %vm2876, %v2887, %v2889
    %v2891 = vshll.u32 %v2851, 8
    %v2892 = vmul.u32.u64.compose %v2891, %v2890
    %v2893 = vextract.low.u32 %v2892
    %v2894 = vextract.high.u32 %v2892
    %v2895 = vmul.u32.u64.compose %v2891, %v2886
    %v2896 = vextract.low.u32 %v2895
    %v2897 = vextract.high.u32 %v2895
    %v2898 = vmul.u32 %v2891, %v2882
    %v2899 = vadd.s32 %v2894, %v2896
    %vm2900 = vc.u32 %v2894, %v2896
    %v2901 = vadd.s32 %v2897, 1
    %v2902 = vsel %vm2900, %v2901, %v2897
    %v2903 = vadd.s32 %v2898, %v2902
    %v2904 = vadd.s32 %v2903, 536870912
    %v2905 = vshrl.u32 %v2904, 30
    %v2906 = vshll.u32 %v2905, 30
    %v2907 = vsub.s32 %v2903, %v2906
    %vm2908 = vcmp.lt.s32.totalorder %v2907, 0
    %v2909 = vsub.s32 0, %v2907
    %v2910 = vsel %vm2908, %v2909, %v2907
    %v2911 = vclz %v2910
    %v2912 = vsub.s32 %v2911, 2
    %vm2913 = vcmp.gt.s32.totalorder 0, %v2912
    %v2914 = vsel %vm2913, 0, %v2912
    %v2915 = vsub.s32 32, %v2914
    %v2916 = vshll.u32 %v2907, %v2914
    %v2917 = vshrl.u32 %v2899, %v2915
    %v2918 = vor.u32 %v2916, %v2917
    %v2919 = vsub.s32 4294967266, %v2914
    %v2920 = vadd.s32 %v2919, 127
    %v2921 = vshll.u32 %v2920, 23
    %v2922 = vor.u32 4788187, %v2921
    %v2923 = vand.u32 2147483647, %v2922
    %v2925 = vcvt.s32.f32 %v2918
    %v2926 = vmul.f32 %v2925, %v2923
    %v2927 = vxor.u32 %v2926, 2147483648
    %v2928 = vsel %vm2845, %v2927, %v2926
    %v2929 = vsub.s32 4, %v2905
    %v2930 = vsel %vm2845, %v2929, %v2905
    %v2931 = vsel %vm2844, %v2739, %v2928
    %v2932 = vsel %vm2844, 0, %v2930
    %v2933 = vcosq.f32.pop %v2931
    %v2934 = vsinq.f32.pop %v2931
    %vm2935 = vweird.f32 %v2739
    %v2936 = vadd.s32 %v2932, 3
    %v2937 = vand.u32 %v2936, 3
    %vm2938 = vcmp.lt.s32.totalorder %v2937, 2
    %vm2939 = vcmp.eq.s32.totalorder %v2937, 0
    %v2940 = vxor.u32 %v2934, 2147483648
    %v2941 = vsel %vm2939, %v2933, %v2940
    %vm2942 = vcmp.eq.s32.totalorder %v2937, 2
    %v2943 = vxor.u32 %v2933, 2147483648
    %v2944 = vsel %vm2942, %v2943, %v2934
    %v2945 = vsel %vm2938, %v2941, %v2944
    %v2946 = vsel %vm2935, nan, %v2945
    %v2947 = vmul.f32 %v2842, 2.0
    %v2948 = vmul.f32 %v2947, %v2842
    %v2949 = vsub.f32 %v2948, 1.0
    %v2950 = vmul.f32 %v2946, 2.0
    %v2951 = vmul.f32 %v2950, %v2842
    %v2952 = vmul.f32 %v2842, %v20
    %v2953 = vadd.f32 %v18, %v2952
    %v2954 = vmul.f32 %v2949, %v22
    %v2955 = vadd.f32 %v2953, %v2954
    %v2956 = vmul.f32 %v2946, %v24
    %v2957 = vadd.f32 %v2955, %v2956
    %v2958 = vmul.f32 %v2951, %v26
    %v2959 = vadd.f32 %v2957, %v2958
    %v2960 = vmul.f32 %v2842, %v30
    %v2961 = vadd.f32 %v28, %v2960
    %v2962 = vmul.f32 %v2949, %v32
    %v2963 = vadd.f32 %v2961, %v2962
    %v2964 = vmul.f32 %v2946, %v34
    %v2965 = vadd.f32 %v2963, %v2964
    %v2966 = vmul.f32 %v2951, %v36
    %v2967 = vadd.f32 %v2965, %v2966
    %s2968 = scalar_lea.vmem %s0, 96
    %v2969 = vld [vmem:[%s2968] sm:$0x7f]
    %v2970 = vand.u32 2147483647, %v2969
    %vm2971 = vcmp.le.f32.partialorder %v2970, 0.7853982
    %vm2972 = vcmp.lt.s32.totalorder %v2969, 0
    %v2973 = vand.u32 %v2969, 2139095040
    %v2974 = vshrl.u32 %v2973, 23
    %v2975 = vsub.s32 %v2974, 127
    %v2976 = vand.u32 2147483647, %v2969
    %v2977 = vand.u32 %v2976, 8388607
    %v2978 = vor.u32 %v2977, 8388608
    %v2979 = vsub.s32 0, %v2978
    %v2980 = vadd.s32 %v2975, 1
    %vm2981 = vcmp.gt.s32.totalorder %v2980, 0
    %v2982 = vsel %vm2981, %v2980, 0
    %v2983 = vshrl.u32 %v2982, 5
    %v2984 = vand.u32 %v2982, 31
    %v2985 = vsub.s32 32, %v2984
    %v2986 = vshrl.u32 683565275, %v2985
    %v2987 = vshll.u32 683565275, %v2984
    %v2988 = vshrl.u32 2475754826, %v2985
    %v2989 = vor.u32 %v2987, %v2988
    %v2990 = vshll.u32 2475754826, %v2984
    %v2991 = vshrl.u32 2131351028, %v2985
    %v2992 = vor.u32 %v2990, %v2991
    %v2993 = vshll.u32 2131351028, %v2984
    %v2994 = vshrl.u32 2102212464, %v2985
    %v2995 = vor.u32 %v2993, %v2994
    %v2996 = vshll.u32 2102212464, %v2984
    %v2997 = vshrl.u32 920167782, %v2985
    %v2998 = vor.u32 %v2996, %v2997
    %v2999 = vshll.u32 920167782, %v2984
    %v3000 = vshrl.u32 1326507024, %v2985
    %v3001 = vor.u32 %v2999, %v3000
    %vm3002 = vcmp.lt.s32.totalorder %v2983, 1
    %vm3003 = vcmp.lt.s32.totalorder %v2983, 2
    %vm3004 = vcmp.lt.s32.totalorder %v2983, 3
    %vm3005 = vcmp.lt.s32.totalorder %v2983, 4
    %v3006 = vsel %vm3002, %v2986, %v2989
    %v3007 = vsel %vm3005, %v2995, 2102212464
    %v3008 = vsel %vm3004, %v2992, %v3007
    %v3009 = vsel %vm3003, %v3006, %v3008
    %v3010 = vsel %vm3002, %v2989, %v2992
    %v3011 = vsel %vm3005, %v2998, 920167782
    %v3012 = vsel %vm3004, %v2995, %v3011
    %v3013 = vsel %vm3003, %v3010, %v3012
    %v3014 = vsel %vm3002, %v2992, %v2995
    %v3015 = vsel %vm3005, %v3001, 1326507024
    %v3016 = vsel %vm3004, %v2998, %v3015
    %v3017 = vsel %vm3003, %v3014, %v3016
    %v3018 = vshll.u32 %v2978, 8
    %v3019 = vmul.u32.u64.compose %v3018, %v3017
    %v3020 = vextract.low.u32 %v3019
    %v3021 = vextract.high.u32 %v3019
    %v3022 = vmul.u32.u64.compose %v3018, %v3013
    %v3023 = vextract.low.u32 %v3022
    %v3024 = vextract.high.u32 %v3022
    %v3025 = vmul.u32 %v3018, %v3009
    %v3026 = vadd.s32 %v3021, %v3023
    %vm3027 = vc.u32 %v3021, %v3023
    %v3028 = vadd.s32 %v3024, 1
    %v3029 = vsel %vm3027, %v3028, %v3024
    %v3030 = vadd.s32 %v3025, %v3029
    %v3031 = vadd.s32 %v3030, 536870912
    %v3032 = vshrl.u32 %v3031, 30
    %v3033 = vshll.u32 %v3032, 30
    %v3034 = vsub.s32 %v3030, %v3033
    %vm3035 = vcmp.lt.s32.totalorder %v3034, 0
    %v3036 = vsub.s32 0, %v3034
    %v3037 = vsel %vm3035, %v3036, %v3034
    %v3038 = vclz %v3037
    %v3039 = vsub.s32 %v3038, 2
    %vm3040 = vcmp.gt.s32.totalorder 0, %v3039
    %v3041 = vsel %vm3040, 0, %v3039
    %v3042 = vsub.s32 32, %v3041
    %v3043 = vshll.u32 %v3034, %v3041
    %v3044 = vshrl.u32 %v3026, %v3042
    %v3045 = vor.u32 %v3043, %v3044
    %v3046 = vsub.s32 4294967266, %v3041
    %v3047 = vadd.s32 %v3046, 127
    %v3048 = vshll.u32 %v3047, 23
    %v3049 = vor.u32 4788187, %v3048
    %v3050 = vand.u32 2147483647, %v3049
    %v3052 = vcvt.s32.f32 %v3045
    %v3053 = vmul.f32 %v3052, %v3050
    %v3054 = vxor.u32 %v3053, 2147483648
    %v3055 = vsel %vm2972, %v3054, %v3053
    %v3056 = vsub.s32 4, %v3032
    %v3057 = vsel %vm2972, %v3056, %v3032
    %v3058 = vsel %vm2971, %v2969, %v3055
    %v3059 = vsel %vm2971, 0, %v3057
    %v3060 = vcosq.f32.pop %v3058
    %v3061 = vsinq.f32.pop %v3058
    %vm3062 = vweird.f32 %v2969
    %v3063 = vand.u32 %v3059, 3
    %vm3064 = vcmp.lt.s32.totalorder %v3063, 2
    %vm3065 = vcmp.eq.s32.totalorder %v3063, 0
    %v3066 = vxor.u32 %v3061, 2147483648
    %v3067 = vsel %vm3065, %v3060, %v3066
    %vm3068 = vcmp.eq.s32.totalorder %v3063, 2
    %v3069 = vxor.u32 %v3060, 2147483648
    %v3070 = vsel %vm3068, %v3069, %v3061
    %v3071 = vsel %vm3064, %v3067, %v3070
    %v3072 = vsel %vm3062, nan, %v3071
    %v3073 = vand.u32 2147483647, %v2969
    %vm3074 = vcmp.le.f32.partialorder %v3073, 0.7853982
    %vm3075 = vcmp.lt.s32.totalorder %v2969, 0
    %v3076 = vand.u32 %v2969, 2139095040
    %v3077 = vshrl.u32 %v3076, 23
    %v3078 = vsub.s32 %v3077, 127
    %v3079 = vand.u32 2147483647, %v2969
    %v3080 = vand.u32 %v3079, 8388607
    %v3081 = vor.u32 %v3080, 8388608
    %v3082 = vsub.s32 0, %v3081
    %v3083 = vadd.s32 %v3078, 1
    %vm3084 = vcmp.gt.s32.totalorder %v3083, 0
    %v3085 = vsel %vm3084, %v3083, 0
    %v3086 = vshrl.u32 %v3085, 5
    %v3087 = vand.u32 %v3085, 31
    %v3088 = vsub.s32 32, %v3087
    %v3089 = vshrl.u32 683565275, %v3088
    %v3090 = vshll.u32 683565275, %v3087
    %v3091 = vshrl.u32 2475754826, %v3088
    %v3092 = vor.u32 %v3090, %v3091
    %v3093 = vshll.u32 2475754826, %v3087
    %v3094 = vshrl.u32 2131351028, %v3088
    %v3095 = vor.u32 %v3093, %v3094
    %v3096 = vshll.u32 2131351028, %v3087
    %v3097 = vshrl.u32 2102212464, %v3088
    %v3098 = vor.u32 %v3096, %v3097
    %v3099 = vshll.u32 2102212464, %v3087
    %v3100 = vshrl.u32 920167782, %v3088
    %v3101 = vor.u32 %v3099, %v3100
    %v3102 = vshll.u32 920167782, %v3087
    %v3103 = vshrl.u32 1326507024, %v3088
    %v3104 = vor.u32 %v3102, %v3103
    %vm3105 = vcmp.lt.s32.totalorder %v3086, 1
    %vm3106 = vcmp.lt.s32.totalorder %v3086, 2
    %vm3107 = vcmp.lt.s32.totalorder %v3086, 3
    %vm3108 = vcmp.lt.s32.totalorder %v3086, 4
    %v3109 = vsel %vm3105, %v3089, %v3092
    %v3110 = vsel %vm3108, %v3098, 2102212464
    %v3111 = vsel %vm3107, %v3095, %v3110
    %v3112 = vsel %vm3106, %v3109, %v3111
    %v3113 = vsel %vm3105, %v3092, %v3095
    %v3114 = vsel %vm3108, %v3101, 920167782
    %v3115 = vsel %vm3107, %v3098, %v3114
    %v3116 = vsel %vm3106, %v3113, %v3115
    %v3117 = vsel %vm3105, %v3095, %v3098
    %v3118 = vsel %vm3108, %v3104, 1326507024
    %v3119 = vsel %vm3107, %v3101, %v3118
    %v3120 = vsel %vm3106, %v3117, %v3119
    %v3121 = vshll.u32 %v3081, 8
    %v3122 = vmul.u32.u64.compose %v3121, %v3120
    %v3123 = vextract.low.u32 %v3122
    %v3124 = vextract.high.u32 %v3122
    %v3125 = vmul.u32.u64.compose %v3121, %v3116
    %v3126 = vextract.low.u32 %v3125
    %v3127 = vextract.high.u32 %v3125
    %v3128 = vmul.u32 %v3121, %v3112
    %v3129 = vadd.s32 %v3124, %v3126
    %vm3130 = vc.u32 %v3124, %v3126
    %v3131 = vadd.s32 %v3127, 1
    %v3132 = vsel %vm3130, %v3131, %v3127
    %v3133 = vadd.s32 %v3128, %v3132
    %v3134 = vadd.s32 %v3133, 536870912
    %v3135 = vshrl.u32 %v3134, 30
    %v3136 = vshll.u32 %v3135, 30
    %v3137 = vsub.s32 %v3133, %v3136
    %vm3138 = vcmp.lt.s32.totalorder %v3137, 0
    %v3139 = vsub.s32 0, %v3137
    %v3140 = vsel %vm3138, %v3139, %v3137
    %v3141 = vclz %v3140
    %v3142 = vsub.s32 %v3141, 2
    %vm3143 = vcmp.gt.s32.totalorder 0, %v3142
    %v3144 = vsel %vm3143, 0, %v3142
    %v3145 = vsub.s32 32, %v3144
    %v3146 = vshll.u32 %v3137, %v3144
    %v3147 = vshrl.u32 %v3129, %v3145
    %v3148 = vor.u32 %v3146, %v3147
    %v3149 = vsub.s32 4294967266, %v3144
    %v3150 = vadd.s32 %v3149, 127
    %v3151 = vshll.u32 %v3150, 23
    %v3152 = vor.u32 4788187, %v3151
    %v3153 = vand.u32 2147483647, %v3152
    %v3155 = vcvt.s32.f32 %v3148
    %v3156 = vmul.f32 %v3155, %v3153
    %v3157 = vxor.u32 %v3156, 2147483648
    %v3158 = vsel %vm3075, %v3157, %v3156
    %v3159 = vsub.s32 4, %v3135
    %v3160 = vsel %vm3075, %v3159, %v3135
    %v3161 = vsel %vm3074, %v2969, %v3158
    %v3162 = vsel %vm3074, 0, %v3160
    %v3163 = vcosq.f32.pop %v3161
    %v3164 = vsinq.f32.pop %v3161
    %vm3165 = vweird.f32 %v2969
    %v3166 = vadd.s32 %v3162, 3
    %v3167 = vand.u32 %v3166, 3
    %vm3168 = vcmp.lt.s32.totalorder %v3167, 2
    %vm3169 = vcmp.eq.s32.totalorder %v3167, 0
    %v3170 = vxor.u32 %v3164, 2147483648
    %v3171 = vsel %vm3169, %v3163, %v3170
    %vm3172 = vcmp.eq.s32.totalorder %v3167, 2
    %v3173 = vxor.u32 %v3163, 2147483648
    %v3174 = vsel %vm3172, %v3173, %v3164
    %v3175 = vsel %vm3168, %v3171, %v3174
    %v3176 = vsel %vm3165, nan, %v3175
    %v3177 = vmul.f32 %v3072, 2.0
    %v3178 = vmul.f32 %v3177, %v3072
    %v3179 = vsub.f32 %v3178, 1.0
    %v3180 = vmul.f32 %v3176, 2.0
    %v3181 = vmul.f32 %v3180, %v3072
    %v3182 = vmul.f32 %v3072, %v20
    %v3183 = vadd.f32 %v18, %v3182
    %v3184 = vmul.f32 %v3179, %v22
    %v3185 = vadd.f32 %v3183, %v3184
    %v3186 = vmul.f32 %v3176, %v24
    %v3187 = vadd.f32 %v3185, %v3186
    %v3188 = vmul.f32 %v3181, %v26
    %v3189 = vadd.f32 %v3187, %v3188
    %v3190 = vmul.f32 %v3072, %v30
    %v3191 = vadd.f32 %v28, %v3190
    %v3192 = vmul.f32 %v3179, %v32
    %v3193 = vadd.f32 %v3191, %v3192
    %v3194 = vmul.f32 %v3176, %v34
    %v3195 = vadd.f32 %v3193, %v3194
    %v3196 = vmul.f32 %v3181, %v36
    %v3197 = vadd.f32 %v3195, %v3196
    %v3198 = vmul.f32 %v38, %v2695
    %v3199 = vmul.f32 %v2959, %v3198
    %v3200 = vadd.f32 %v2959, %v3199
    %v3201 = vmul.f32 %v38, %v2703
    %v3202 = vmul.f32 %v2959, %v3201
    %v3203 = vadd.f32 %v3202, %v2967
    %v3204 = vmul.f32 %v38, %v3200
    %v3205 = vmul.f32 %v2959, %v3204
    %v3206 = vadd.f32 %v2959, %v3205
    %v3207 = vmul.f32 %v38, %v3203
    %v3208 = vmul.f32 %v2959, %v3207
    %v3209 = vadd.f32 %v3208, %v2967
    %v3210 = vmul.f32 %v37, %v3206
    %v3211 = vmul.f32 %v3189, %v3210
    %v3212 = vadd.f32 %v3189, %v3211
    %v3213 = vmul.f32 %v37, %v3209
    %v3214 = vmul.f32 %v3189, %v3213
    %v3215 = vadd.f32 %v3214, %v3197
    %v3216 = vmul.f32 %v3200, 2.0
    %v3217 = vadd.f32 %v2695, %v3216
    %v3218 = vmul.f32 %v3206, 2.0
    %v3219 = vadd.f32 %v3217, %v3218
    %v3220 = vadd.f32 %v3219, %v3212
    %v3221 = vmul.f32 %v39, %v3220
    %v3222 = vadd.f32 %v3221, 1.0
    %v3223 = vmul.f32 %v3203, 2.0
    %v3224 = vadd.f32 %v2703, %v3223
    %v3225 = vmul.f32 %v3209, 2.0
    %v3226 = vadd.f32 %v3224, %v3225
    %v3227 = vadd.f32 %v3226, %v3215
    %v3228 = vmul.f32 %v39, %v3227
    %v3229 = vmul.f32 %v3222, %v2735
    %v3230 = vmul.f32 %v3222, %v2737
    %v3231 = vadd.f32 %v3230, %v3228
    %s3232 = scalar_lea.vmem %s0, 104
    %v3233 = vld [vmem:[%s3232] sm:$0x7f]
    %v3234 = vand.u32 2147483647, %v3233
    %vm3235 = vcmp.le.f32.partialorder %v3234, 0.7853982
    %vm3236 = vcmp.lt.s32.totalorder %v3233, 0
    %v3237 = vand.u32 %v3233, 2139095040
    %v3238 = vshrl.u32 %v3237, 23
    %v3239 = vsub.s32 %v3238, 127
    %v3240 = vand.u32 2147483647, %v3233
    %v3241 = vand.u32 %v3240, 8388607
    %v3242 = vor.u32 %v3241, 8388608
    %v3243 = vsub.s32 0, %v3242
    %v3244 = vadd.s32 %v3239, 1
    %vm3245 = vcmp.gt.s32.totalorder %v3244, 0
    %v3246 = vsel %vm3245, %v3244, 0
    %v3247 = vshrl.u32 %v3246, 5
    %v3248 = vand.u32 %v3246, 31
    %v3249 = vsub.s32 32, %v3248
    %v3250 = vshrl.u32 683565275, %v3249
    %v3251 = vshll.u32 683565275, %v3248
    %v3252 = vshrl.u32 2475754826, %v3249
    %v3253 = vor.u32 %v3251, %v3252
    %v3254 = vshll.u32 2475754826, %v3248
    %v3255 = vshrl.u32 2131351028, %v3249
    %v3256 = vor.u32 %v3254, %v3255
    %v3257 = vshll.u32 2131351028, %v3248
    %v3258 = vshrl.u32 2102212464, %v3249
    %v3259 = vor.u32 %v3257, %v3258
    %v3260 = vshll.u32 2102212464, %v3248
    %v3261 = vshrl.u32 920167782, %v3249
    %v3262 = vor.u32 %v3260, %v3261
    %v3263 = vshll.u32 920167782, %v3248
    %v3264 = vshrl.u32 1326507024, %v3249
    %v3265 = vor.u32 %v3263, %v3264
    %vm3266 = vcmp.lt.s32.totalorder %v3247, 1
    %vm3267 = vcmp.lt.s32.totalorder %v3247, 2
    %vm3268 = vcmp.lt.s32.totalorder %v3247, 3
    %vm3269 = vcmp.lt.s32.totalorder %v3247, 4
    %v3270 = vsel %vm3266, %v3250, %v3253
    %v3271 = vsel %vm3269, %v3259, 2102212464
    %v3272 = vsel %vm3268, %v3256, %v3271
    %v3273 = vsel %vm3267, %v3270, %v3272
    %v3274 = vsel %vm3266, %v3253, %v3256
    %v3275 = vsel %vm3269, %v3262, 920167782
    %v3276 = vsel %vm3268, %v3259, %v3275
    %v3277 = vsel %vm3267, %v3274, %v3276
    %v3278 = vsel %vm3266, %v3256, %v3259
    %v3279 = vsel %vm3269, %v3265, 1326507024
    %v3280 = vsel %vm3268, %v3262, %v3279
    %v3281 = vsel %vm3267, %v3278, %v3280
    %v3282 = vshll.u32 %v3242, 8
    %v3283 = vmul.u32.u64.compose %v3282, %v3281
    %v3284 = vextract.low.u32 %v3283
    %v3285 = vextract.high.u32 %v3283
    %v3286 = vmul.u32.u64.compose %v3282, %v3277
    %v3287 = vextract.low.u32 %v3286
    %v3288 = vextract.high.u32 %v3286
    %v3289 = vmul.u32 %v3282, %v3273
    %v3290 = vadd.s32 %v3285, %v3287
    %vm3291 = vc.u32 %v3285, %v3287
    %v3292 = vadd.s32 %v3288, 1
    %v3293 = vsel %vm3291, %v3292, %v3288
    %v3294 = vadd.s32 %v3289, %v3293
    %v3295 = vadd.s32 %v3294, 536870912
    %v3296 = vshrl.u32 %v3295, 30
    %v3297 = vshll.u32 %v3296, 30
    %v3298 = vsub.s32 %v3294, %v3297
    %vm3299 = vcmp.lt.s32.totalorder %v3298, 0
    %v3300 = vsub.s32 0, %v3298
    %v3301 = vsel %vm3299, %v3300, %v3298
    %v3302 = vclz %v3301
    %v3303 = vsub.s32 %v3302, 2
    %vm3304 = vcmp.gt.s32.totalorder 0, %v3303
    %v3305 = vsel %vm3304, 0, %v3303
    %v3306 = vsub.s32 32, %v3305
    %v3307 = vshll.u32 %v3298, %v3305
    %v3308 = vshrl.u32 %v3290, %v3306
    %v3309 = vor.u32 %v3307, %v3308
    %v3310 = vsub.s32 4294967266, %v3305
    %v3311 = vadd.s32 %v3310, 127
    %v3312 = vshll.u32 %v3311, 23
    %v3313 = vor.u32 4788187, %v3312
    %v3314 = vand.u32 2147483647, %v3313
    %v3316 = vcvt.s32.f32 %v3309
    %v3317 = vmul.f32 %v3316, %v3314
    %v3318 = vxor.u32 %v3317, 2147483648
    %v3319 = vsel %vm3236, %v3318, %v3317
    %v3320 = vsub.s32 4, %v3296
    %v3321 = vsel %vm3236, %v3320, %v3296
    %v3322 = vsel %vm3235, %v3233, %v3319
    %v3323 = vsel %vm3235, 0, %v3321
    %v3324 = vcosq.f32.pop %v3322
    %v3325 = vsinq.f32.pop %v3322
    %vm3326 = vweird.f32 %v3233
    %v3327 = vand.u32 %v3323, 3
    %vm3328 = vcmp.lt.s32.totalorder %v3327, 2
    %vm3329 = vcmp.eq.s32.totalorder %v3327, 0
    %v3330 = vxor.u32 %v3325, 2147483648
    %v3331 = vsel %vm3329, %v3324, %v3330
    %vm3332 = vcmp.eq.s32.totalorder %v3327, 2
    %v3333 = vxor.u32 %v3324, 2147483648
    %v3334 = vsel %vm3332, %v3333, %v3325
    %v3335 = vsel %vm3328, %v3331, %v3334
    %v3336 = vsel %vm3326, nan, %v3335
    %v3337 = vand.u32 2147483647, %v3233
    %vm3338 = vcmp.le.f32.partialorder %v3337, 0.7853982
    %vm3339 = vcmp.lt.s32.totalorder %v3233, 0
    %v3340 = vand.u32 %v3233, 2139095040
    %v3341 = vshrl.u32 %v3340, 23
    %v3342 = vsub.s32 %v3341, 127
    %v3343 = vand.u32 2147483647, %v3233
    %v3344 = vand.u32 %v3343, 8388607
    %v3345 = vor.u32 %v3344, 8388608
    %v3346 = vsub.s32 0, %v3345
    %v3347 = vadd.s32 %v3342, 1
    %vm3348 = vcmp.gt.s32.totalorder %v3347, 0
    %v3349 = vsel %vm3348, %v3347, 0
    %v3350 = vshrl.u32 %v3349, 5
    %v3351 = vand.u32 %v3349, 31
    %v3352 = vsub.s32 32, %v3351
    %v3353 = vshrl.u32 683565275, %v3352
    %v3354 = vshll.u32 683565275, %v3351
    %v3355 = vshrl.u32 2475754826, %v3352
    %v3356 = vor.u32 %v3354, %v3355
    %v3357 = vshll.u32 2475754826, %v3351
    %v3358 = vshrl.u32 2131351028, %v3352
    %v3359 = vor.u32 %v3357, %v3358
    %v3360 = vshll.u32 2131351028, %v3351
    %v3361 = vshrl.u32 2102212464, %v3352
    %v3362 = vor.u32 %v3360, %v3361
    %v3363 = vshll.u32 2102212464, %v3351
    %v3364 = vshrl.u32 920167782, %v3352
    %v3365 = vor.u32 %v3363, %v3364
    %v3366 = vshll.u32 920167782, %v3351
    %v3367 = vshrl.u32 1326507024, %v3352
    %v3368 = vor.u32 %v3366, %v3367
    %vm3369 = vcmp.lt.s32.totalorder %v3350, 1
    %vm3370 = vcmp.lt.s32.totalorder %v3350, 2
    %vm3371 = vcmp.lt.s32.totalorder %v3350, 3
    %vm3372 = vcmp.lt.s32.totalorder %v3350, 4
    %v3373 = vsel %vm3369, %v3353, %v3356
    %v3374 = vsel %vm3372, %v3362, 2102212464
    %v3375 = vsel %vm3371, %v3359, %v3374
    %v3376 = vsel %vm3370, %v3373, %v3375
    %v3377 = vsel %vm3369, %v3356, %v3359
    %v3378 = vsel %vm3372, %v3365, 920167782
    %v3379 = vsel %vm3371, %v3362, %v3378
    %v3380 = vsel %vm3370, %v3377, %v3379
    %v3381 = vsel %vm3369, %v3359, %v3362
    %v3382 = vsel %vm3372, %v3368, 1326507024
    %v3383 = vsel %vm3371, %v3365, %v3382
    %v3384 = vsel %vm3370, %v3381, %v3383
    %v3385 = vshll.u32 %v3345, 8
    %v3386 = vmul.u32.u64.compose %v3385, %v3384
    %v3387 = vextract.low.u32 %v3386
    %v3388 = vextract.high.u32 %v3386
    %v3389 = vmul.u32.u64.compose %v3385, %v3380
    %v3390 = vextract.low.u32 %v3389
    %v3391 = vextract.high.u32 %v3389
    %v3392 = vmul.u32 %v3385, %v3376
    %v3393 = vadd.s32 %v3388, %v3390
    %vm3394 = vc.u32 %v3388, %v3390
    %v3395 = vadd.s32 %v3391, 1
    %v3396 = vsel %vm3394, %v3395, %v3391
    %v3397 = vadd.s32 %v3392, %v3396
    %v3398 = vadd.s32 %v3397, 536870912
    %v3399 = vshrl.u32 %v3398, 30
    %v3400 = vshll.u32 %v3399, 30
    %v3401 = vsub.s32 %v3397, %v3400
    %vm3402 = vcmp.lt.s32.totalorder %v3401, 0
    %v3403 = vsub.s32 0, %v3401
    %v3404 = vsel %vm3402, %v3403, %v3401
    %v3405 = vclz %v3404
    %v3406 = vsub.s32 %v3405, 2
    %vm3407 = vcmp.gt.s32.totalorder 0, %v3406
    %v3408 = vsel %vm3407, 0, %v3406
    %v3409 = vsub.s32 32, %v3408
    %v3410 = vshll.u32 %v3401, %v3408
    %v3411 = vshrl.u32 %v3393, %v3409
    %v3412 = vor.u32 %v3410, %v3411
    %v3413 = vsub.s32 4294967266, %v3408
    %v3414 = vadd.s32 %v3413, 127
    %v3415 = vshll.u32 %v3414, 23
    %v3416 = vor.u32 4788187, %v3415
    %v3417 = vand.u32 2147483647, %v3416
    %v3419 = vcvt.s32.f32 %v3412
    %v3420 = vmul.f32 %v3419, %v3417
    %v3421 = vxor.u32 %v3420, 2147483648
    %v3422 = vsel %vm3339, %v3421, %v3420
    %v3423 = vsub.s32 4, %v3399
    %v3424 = vsel %vm3339, %v3423, %v3399
    %v3425 = vsel %vm3338, %v3233, %v3422
    %v3426 = vsel %vm3338, 0, %v3424
    %v3427 = vcosq.f32.pop %v3425
    %v3428 = vsinq.f32.pop %v3425
    %vm3429 = vweird.f32 %v3233
    %v3430 = vadd.s32 %v3426, 3
    %v3431 = vand.u32 %v3430, 3
    %vm3432 = vcmp.lt.s32.totalorder %v3431, 2
    %vm3433 = vcmp.eq.s32.totalorder %v3431, 0
    %v3434 = vxor.u32 %v3428, 2147483648
    %v3435 = vsel %vm3433, %v3427, %v3434
    %vm3436 = vcmp.eq.s32.totalorder %v3431, 2
    %v3437 = vxor.u32 %v3427, 2147483648
    %v3438 = vsel %vm3436, %v3437, %v3428
    %v3439 = vsel %vm3432, %v3435, %v3438
    %v3440 = vsel %vm3429, nan, %v3439
    %v3441 = vmul.f32 %v3336, 2.0
    %v3442 = vmul.f32 %v3441, %v3336
    %v3443 = vsub.f32 %v3442, 1.0
    %v3444 = vmul.f32 %v3440, 2.0
    %v3445 = vmul.f32 %v3444, %v3336
    %v3446 = vmul.f32 %v3336, %v20
    %v3447 = vadd.f32 %v18, %v3446
    %v3448 = vmul.f32 %v3443, %v22
    %v3449 = vadd.f32 %v3447, %v3448
    %v3450 = vmul.f32 %v3440, %v24
    %v3451 = vadd.f32 %v3449, %v3450
    %v3452 = vmul.f32 %v3445, %v26
    %v3453 = vadd.f32 %v3451, %v3452
    %v3454 = vmul.f32 %v3336, %v30
    %v3455 = vadd.f32 %v28, %v3454
    %v3456 = vmul.f32 %v3443, %v32
    %v3457 = vadd.f32 %v3455, %v3456
    %v3458 = vmul.f32 %v3440, %v34
    %v3459 = vadd.f32 %v3457, %v3458
    %v3460 = vmul.f32 %v3445, %v36
    %v3461 = vadd.f32 %v3459, %v3460
    %s3462 = scalar_lea.vmem %s0, 112
    %v3463 = vld [vmem:[%s3462] sm:$0x7f]
    %v3464 = vand.u32 2147483647, %v3463
    %vm3465 = vcmp.le.f32.partialorder %v3464, 0.7853982
    %vm3466 = vcmp.lt.s32.totalorder %v3463, 0
    %v3467 = vand.u32 %v3463, 2139095040
    %v3468 = vshrl.u32 %v3467, 23
    %v3469 = vsub.s32 %v3468, 127
    %v3470 = vand.u32 2147483647, %v3463
    %v3471 = vand.u32 %v3470, 8388607
    %v3472 = vor.u32 %v3471, 8388608
    %v3473 = vsub.s32 0, %v3472
    %v3474 = vadd.s32 %v3469, 1
    %vm3475 = vcmp.gt.s32.totalorder %v3474, 0
    %v3476 = vsel %vm3475, %v3474, 0
    %v3477 = vshrl.u32 %v3476, 5
    %v3478 = vand.u32 %v3476, 31
    %v3479 = vsub.s32 32, %v3478
    %v3480 = vshrl.u32 683565275, %v3479
    %v3481 = vshll.u32 683565275, %v3478
    %v3482 = vshrl.u32 2475754826, %v3479
    %v3483 = vor.u32 %v3481, %v3482
    %v3484 = vshll.u32 2475754826, %v3478
    %v3485 = vshrl.u32 2131351028, %v3479
    %v3486 = vor.u32 %v3484, %v3485
    %v3487 = vshll.u32 2131351028, %v3478
    %v3488 = vshrl.u32 2102212464, %v3479
    %v3489 = vor.u32 %v3487, %v3488
    %v3490 = vshll.u32 2102212464, %v3478
    %v3491 = vshrl.u32 920167782, %v3479
    %v3492 = vor.u32 %v3490, %v3491
    %v3493 = vshll.u32 920167782, %v3478
    %v3494 = vshrl.u32 1326507024, %v3479
    %v3495 = vor.u32 %v3493, %v3494
    %vm3496 = vcmp.lt.s32.totalorder %v3477, 1
    %vm3497 = vcmp.lt.s32.totalorder %v3477, 2
    %vm3498 = vcmp.lt.s32.totalorder %v3477, 3
    %vm3499 = vcmp.lt.s32.totalorder %v3477, 4
    %v3500 = vsel %vm3496, %v3480, %v3483
    %v3501 = vsel %vm3499, %v3489, 2102212464
    %v3502 = vsel %vm3498, %v3486, %v3501
    %v3503 = vsel %vm3497, %v3500, %v3502
    %v3504 = vsel %vm3496, %v3483, %v3486
    %v3505 = vsel %vm3499, %v3492, 920167782
    %v3506 = vsel %vm3498, %v3489, %v3505
    %v3507 = vsel %vm3497, %v3504, %v3506
    %v3508 = vsel %vm3496, %v3486, %v3489
    %v3509 = vsel %vm3499, %v3495, 1326507024
    %v3510 = vsel %vm3498, %v3492, %v3509
    %v3511 = vsel %vm3497, %v3508, %v3510
    %v3512 = vshll.u32 %v3472, 8
    %v3513 = vmul.u32.u64.compose %v3512, %v3511
    %v3514 = vextract.low.u32 %v3513
    %v3515 = vextract.high.u32 %v3513
    %v3516 = vmul.u32.u64.compose %v3512, %v3507
    %v3517 = vextract.low.u32 %v3516
    %v3518 = vextract.high.u32 %v3516
    %v3519 = vmul.u32 %v3512, %v3503
    %v3520 = vadd.s32 %v3515, %v3517
    %vm3521 = vc.u32 %v3515, %v3517
    %v3522 = vadd.s32 %v3518, 1
    %v3523 = vsel %vm3521, %v3522, %v3518
    %v3524 = vadd.s32 %v3519, %v3523
    %v3525 = vadd.s32 %v3524, 536870912
    %v3526 = vshrl.u32 %v3525, 30
    %v3527 = vshll.u32 %v3526, 30
    %v3528 = vsub.s32 %v3524, %v3527
    %vm3529 = vcmp.lt.s32.totalorder %v3528, 0
    %v3530 = vsub.s32 0, %v3528
    %v3531 = vsel %vm3529, %v3530, %v3528
    %v3532 = vclz %v3531
    %v3533 = vsub.s32 %v3532, 2
    %vm3534 = vcmp.gt.s32.totalorder 0, %v3533
    %v3535 = vsel %vm3534, 0, %v3533
    %v3536 = vsub.s32 32, %v3535
    %v3537 = vshll.u32 %v3528, %v3535
    %v3538 = vshrl.u32 %v3520, %v3536
    %v3539 = vor.u32 %v3537, %v3538
    %v3540 = vsub.s32 4294967266, %v3535
    %v3541 = vadd.s32 %v3540, 127
    %v3542 = vshll.u32 %v3541, 23
    %v3543 = vor.u32 4788187, %v3542
    %v3544 = vand.u32 2147483647, %v3543
    %v3546 = vcvt.s32.f32 %v3539
    %v3547 = vmul.f32 %v3546, %v3544
    %v3548 = vxor.u32 %v3547, 2147483648
    %v3549 = vsel %vm3466, %v3548, %v3547
    %v3550 = vsub.s32 4, %v3526
    %v3551 = vsel %vm3466, %v3550, %v3526
    %v3552 = vsel %vm3465, %v3463, %v3549
    %v3553 = vsel %vm3465, 0, %v3551
    %v3554 = vcosq.f32.pop %v3552
    %v3555 = vsinq.f32.pop %v3552
    %vm3556 = vweird.f32 %v3463
    %v3557 = vand.u32 %v3553, 3
    %vm3558 = vcmp.lt.s32.totalorder %v3557, 2
    %vm3559 = vcmp.eq.s32.totalorder %v3557, 0
    %v3560 = vxor.u32 %v3555, 2147483648
    %v3561 = vsel %vm3559, %v3554, %v3560
    %vm3562 = vcmp.eq.s32.totalorder %v3557, 2
    %v3563 = vxor.u32 %v3554, 2147483648
    %v3564 = vsel %vm3562, %v3563, %v3555
    %v3565 = vsel %vm3558, %v3561, %v3564
    %v3566 = vsel %vm3556, nan, %v3565
    %v3567 = vand.u32 2147483647, %v3463
    %vm3568 = vcmp.le.f32.partialorder %v3567, 0.7853982
    %vm3569 = vcmp.lt.s32.totalorder %v3463, 0
    %v3570 = vand.u32 %v3463, 2139095040
    %v3571 = vshrl.u32 %v3570, 23
    %v3572 = vsub.s32 %v3571, 127
    %v3573 = vand.u32 2147483647, %v3463
    %v3574 = vand.u32 %v3573, 8388607
    %v3575 = vor.u32 %v3574, 8388608
    %v3576 = vsub.s32 0, %v3575
    %v3577 = vadd.s32 %v3572, 1
    %vm3578 = vcmp.gt.s32.totalorder %v3577, 0
    %v3579 = vsel %vm3578, %v3577, 0
    %v3580 = vshrl.u32 %v3579, 5
    %v3581 = vand.u32 %v3579, 31
    %v3582 = vsub.s32 32, %v3581
    %v3583 = vshrl.u32 683565275, %v3582
    %v3584 = vshll.u32 683565275, %v3581
    %v3585 = vshrl.u32 2475754826, %v3582
    %v3586 = vor.u32 %v3584, %v3585
    %v3587 = vshll.u32 2475754826, %v3581
    %v3588 = vshrl.u32 2131351028, %v3582
    %v3589 = vor.u32 %v3587, %v3588
    %v3590 = vshll.u32 2131351028, %v3581
    %v3591 = vshrl.u32 2102212464, %v3582
    %v3592 = vor.u32 %v3590, %v3591
    %v3593 = vshll.u32 2102212464, %v3581
    %v3594 = vshrl.u32 920167782, %v3582
    %v3595 = vor.u32 %v3593, %v3594
    %v3596 = vshll.u32 920167782, %v3581
    %v3597 = vshrl.u32 1326507024, %v3582
    %v3598 = vor.u32 %v3596, %v3597
    %vm3599 = vcmp.lt.s32.totalorder %v3580, 1
    %vm3600 = vcmp.lt.s32.totalorder %v3580, 2
    %vm3601 = vcmp.lt.s32.totalorder %v3580, 3
    %vm3602 = vcmp.lt.s32.totalorder %v3580, 4
    %v3603 = vsel %vm3599, %v3583, %v3586
    %v3604 = vsel %vm3602, %v3592, 2102212464
    %v3605 = vsel %vm3601, %v3589, %v3604
    %v3606 = vsel %vm3600, %v3603, %v3605
    %v3607 = vsel %vm3599, %v3586, %v3589
    %v3608 = vsel %vm3602, %v3595, 920167782
    %v3609 = vsel %vm3601, %v3592, %v3608
    %v3610 = vsel %vm3600, %v3607, %v3609
    %v3611 = vsel %vm3599, %v3589, %v3592
    %v3612 = vsel %vm3602, %v3598, 1326507024
    %v3613 = vsel %vm3601, %v3595, %v3612
    %v3614 = vsel %vm3600, %v3611, %v3613
    %v3615 = vshll.u32 %v3575, 8
    %v3616 = vmul.u32.u64.compose %v3615, %v3614
    %v3617 = vextract.low.u32 %v3616
    %v3618 = vextract.high.u32 %v3616
    %v3619 = vmul.u32.u64.compose %v3615, %v3610
    %v3620 = vextract.low.u32 %v3619
    %v3621 = vextract.high.u32 %v3619
    %v3622 = vmul.u32 %v3615, %v3606
    %v3623 = vadd.s32 %v3618, %v3620
    %vm3624 = vc.u32 %v3618, %v3620
    %v3625 = vadd.s32 %v3621, 1
    %v3626 = vsel %vm3624, %v3625, %v3621
    %v3627 = vadd.s32 %v3622, %v3626
    %v3628 = vadd.s32 %v3627, 536870912
    %v3629 = vshrl.u32 %v3628, 30
    %v3630 = vshll.u32 %v3629, 30
    %v3631 = vsub.s32 %v3627, %v3630
    %vm3632 = vcmp.lt.s32.totalorder %v3631, 0
    %v3633 = vsub.s32 0, %v3631
    %v3634 = vsel %vm3632, %v3633, %v3631
    %v3635 = vclz %v3634
    %v3636 = vsub.s32 %v3635, 2
    %vm3637 = vcmp.gt.s32.totalorder 0, %v3636
    %v3638 = vsel %vm3637, 0, %v3636
    %v3639 = vsub.s32 32, %v3638
    %v3640 = vshll.u32 %v3631, %v3638
    %v3641 = vshrl.u32 %v3623, %v3639
    %v3642 = vor.u32 %v3640, %v3641
    %v3643 = vsub.s32 4294967266, %v3638
    %v3644 = vadd.s32 %v3643, 127
    %v3645 = vshll.u32 %v3644, 23
    %v3646 = vor.u32 4788187, %v3645
    %v3647 = vand.u32 2147483647, %v3646
    %v3649 = vcvt.s32.f32 %v3642
    %v3650 = vmul.f32 %v3649, %v3647
    %v3651 = vxor.u32 %v3650, 2147483648
    %v3652 = vsel %vm3569, %v3651, %v3650
    %v3653 = vsub.s32 4, %v3629
    %v3654 = vsel %vm3569, %v3653, %v3629
    %v3655 = vsel %vm3568, %v3463, %v3652
    %v3656 = vsel %vm3568, 0, %v3654
    %v3657 = vcosq.f32.pop %v3655
    %v3658 = vsinq.f32.pop %v3655
    %vm3659 = vweird.f32 %v3463
    %v3660 = vadd.s32 %v3656, 3
    %v3661 = vand.u32 %v3660, 3
    %vm3662 = vcmp.lt.s32.totalorder %v3661, 2
    %vm3663 = vcmp.eq.s32.totalorder %v3661, 0
    %v3664 = vxor.u32 %v3658, 2147483648
    %v3665 = vsel %vm3663, %v3657, %v3664
    %vm3666 = vcmp.eq.s32.totalorder %v3661, 2
    %v3667 = vxor.u32 %v3657, 2147483648
    %v3668 = vsel %vm3666, %v3667, %v3658
    %v3669 = vsel %vm3662, %v3665, %v3668
    %v3670 = vsel %vm3659, nan, %v3669
    %v3671 = vmul.f32 %v3566, 2.0
    %v3672 = vmul.f32 %v3671, %v3566
    %v3673 = vsub.f32 %v3672, 1.0
    %v3674 = vmul.f32 %v3670, 2.0
    %v3675 = vmul.f32 %v3674, %v3566
    %v3676 = vmul.f32 %v3566, %v20
    %v3677 = vadd.f32 %v18, %v3676
    %v3678 = vmul.f32 %v3673, %v22
    %v3679 = vadd.f32 %v3677, %v3678
    %v3680 = vmul.f32 %v3670, %v24
    %v3681 = vadd.f32 %v3679, %v3680
    %v3682 = vmul.f32 %v3675, %v26
    %v3683 = vadd.f32 %v3681, %v3682
    %v3684 = vmul.f32 %v3566, %v30
    %v3685 = vadd.f32 %v28, %v3684
    %v3686 = vmul.f32 %v3673, %v32
    %v3687 = vadd.f32 %v3685, %v3686
    %v3688 = vmul.f32 %v3670, %v34
    %v3689 = vadd.f32 %v3687, %v3688
    %v3690 = vmul.f32 %v3675, %v36
    %v3691 = vadd.f32 %v3689, %v3690
    %v3692 = vmul.f32 %v38, %v3189
    %v3693 = vmul.f32 %v3453, %v3692
    %v3694 = vadd.f32 %v3453, %v3693
    %v3695 = vmul.f32 %v38, %v3197
    %v3696 = vmul.f32 %v3453, %v3695
    %v3697 = vadd.f32 %v3696, %v3461
    %v3698 = vmul.f32 %v38, %v3694
    %v3699 = vmul.f32 %v3453, %v3698
    %v3700 = vadd.f32 %v3453, %v3699
    %v3701 = vmul.f32 %v38, %v3697
    %v3702 = vmul.f32 %v3453, %v3701
    %v3703 = vadd.f32 %v3702, %v3461
    %v3704 = vmul.f32 %v37, %v3700
    %v3705 = vmul.f32 %v3683, %v3704
    %v3706 = vadd.f32 %v3683, %v3705
    %v3707 = vmul.f32 %v37, %v3703
    %v3708 = vmul.f32 %v3683, %v3707
    %v3709 = vadd.f32 %v3708, %v3691
    %v3710 = vmul.f32 %v3694, 2.0
    %v3711 = vadd.f32 %v3189, %v3710
    %v3712 = vmul.f32 %v3700, 2.0
    %v3713 = vadd.f32 %v3711, %v3712
    %v3714 = vadd.f32 %v3713, %v3706
    %v3715 = vmul.f32 %v39, %v3714
    %v3716 = vadd.f32 %v3715, 1.0
    %v3717 = vmul.f32 %v3697, 2.0
    %v3718 = vadd.f32 %v3197, %v3717
    %v3719 = vmul.f32 %v3703, 2.0
    %v3720 = vadd.f32 %v3718, %v3719
    %v3721 = vadd.f32 %v3720, %v3709
    %v3722 = vmul.f32 %v39, %v3721
    %v3723 = vmul.f32 %v3716, %v3229
    %v3724 = vmul.f32 %v3716, %v3231
    %v3725 = vadd.f32 %v3724, %v3722
    %s3726 = scalar_lea.vmem %s0, 120
    %v3727 = vld [vmem:[%s3726] sm:$0x7f]
    %v3728 = vand.u32 2147483647, %v3727
    %vm3729 = vcmp.le.f32.partialorder %v3728, 0.7853982
    %vm3730 = vcmp.lt.s32.totalorder %v3727, 0
    %v3731 = vand.u32 %v3727, 2139095040
    %v3732 = vshrl.u32 %v3731, 23
    %v3733 = vsub.s32 %v3732, 127
    %v3734 = vand.u32 2147483647, %v3727
    %v3735 = vand.u32 %v3734, 8388607
    %v3736 = vor.u32 %v3735, 8388608
    %v3737 = vsub.s32 0, %v3736
    %v3738 = vadd.s32 %v3733, 1
    %vm3739 = vcmp.gt.s32.totalorder %v3738, 0
    %v3740 = vsel %vm3739, %v3738, 0
    %v3741 = vshrl.u32 %v3740, 5
    %v3742 = vand.u32 %v3740, 31
    %v3743 = vsub.s32 32, %v3742
    %v3744 = vshrl.u32 683565275, %v3743
    %v3745 = vshll.u32 683565275, %v3742
    %v3746 = vshrl.u32 2475754826, %v3743
    %v3747 = vor.u32 %v3745, %v3746
    %v3748 = vshll.u32 2475754826, %v3742
    %v3749 = vshrl.u32 2131351028, %v3743
    %v3750 = vor.u32 %v3748, %v3749
    %v3751 = vshll.u32 2131351028, %v3742
    %v3752 = vshrl.u32 2102212464, %v3743
    %v3753 = vor.u32 %v3751, %v3752
    %v3754 = vshll.u32 2102212464, %v3742
    %v3755 = vshrl.u32 920167782, %v3743
    %v3756 = vor.u32 %v3754, %v3755
    %v3757 = vshll.u32 920167782, %v3742
    %v3758 = vshrl.u32 1326507024, %v3743
    %v3759 = vor.u32 %v3757, %v3758
    %vm3760 = vcmp.lt.s32.totalorder %v3741, 1
    %vm3761 = vcmp.lt.s32.totalorder %v3741, 2
    %vm3762 = vcmp.lt.s32.totalorder %v3741, 3
    %vm3763 = vcmp.lt.s32.totalorder %v3741, 4
    %v3764 = vsel %vm3760, %v3744, %v3747
    %v3765 = vsel %vm3763, %v3753, 2102212464
    %v3766 = vsel %vm3762, %v3750, %v3765
    %v3767 = vsel %vm3761, %v3764, %v3766
    %v3768 = vsel %vm3760, %v3747, %v3750
    %v3769 = vsel %vm3763, %v3756, 920167782
    %v3770 = vsel %vm3762, %v3753, %v3769
    %v3771 = vsel %vm3761, %v3768, %v3770
    %v3772 = vsel %vm3760, %v3750, %v3753
    %v3773 = vsel %vm3763, %v3759, 1326507024
    %v3774 = vsel %vm3762, %v3756, %v3773
    %v3775 = vsel %vm3761, %v3772, %v3774
    %v3776 = vshll.u32 %v3736, 8
    %v3777 = vmul.u32.u64.compose %v3776, %v3775
    %v3778 = vextract.low.u32 %v3777
    %v3779 = vextract.high.u32 %v3777
    %v3780 = vmul.u32.u64.compose %v3776, %v3771
    %v3781 = vextract.low.u32 %v3780
    %v3782 = vextract.high.u32 %v3780
    %v3783 = vmul.u32 %v3776, %v3767
    %v3784 = vadd.s32 %v3779, %v3781
    %vm3785 = vc.u32 %v3779, %v3781
    %v3786 = vadd.s32 %v3782, 1
    %v3787 = vsel %vm3785, %v3786, %v3782
    %v3788 = vadd.s32 %v3783, %v3787
    %v3789 = vadd.s32 %v3788, 536870912
    %v3790 = vshrl.u32 %v3789, 30
    %v3791 = vshll.u32 %v3790, 30
    %v3792 = vsub.s32 %v3788, %v3791
    %vm3793 = vcmp.lt.s32.totalorder %v3792, 0
    %v3794 = vsub.s32 0, %v3792
    %v3795 = vsel %vm3793, %v3794, %v3792
    %v3796 = vclz %v3795
    %v3797 = vsub.s32 %v3796, 2
    %vm3798 = vcmp.gt.s32.totalorder 0, %v3797
    %v3799 = vsel %vm3798, 0, %v3797
    %v3800 = vsub.s32 32, %v3799
    %v3801 = vshll.u32 %v3792, %v3799
    %v3802 = vshrl.u32 %v3784, %v3800
    %v3803 = vor.u32 %v3801, %v3802
    %v3804 = vsub.s32 4294967266, %v3799
    %v3805 = vadd.s32 %v3804, 127
    %v3806 = vshll.u32 %v3805, 23
    %v3807 = vor.u32 4788187, %v3806
    %v3808 = vand.u32 2147483647, %v3807
    %v3810 = vcvt.s32.f32 %v3803
    %v3811 = vmul.f32 %v3810, %v3808
    %v3812 = vxor.u32 %v3811, 2147483648
    %v3813 = vsel %vm3730, %v3812, %v3811
    %v3814 = vsub.s32 4, %v3790
    %v3815 = vsel %vm3730, %v3814, %v3790
    %v3816 = vsel %vm3729, %v3727, %v3813
    %v3817 = vsel %vm3729, 0, %v3815
    %v3818 = vcosq.f32.pop %v3816
    %v3819 = vsinq.f32.pop %v3816
    %vm3820 = vweird.f32 %v3727
    %v3821 = vand.u32 %v3817, 3
    %vm3822 = vcmp.lt.s32.totalorder %v3821, 2
    %vm3823 = vcmp.eq.s32.totalorder %v3821, 0
    %v3824 = vxor.u32 %v3819, 2147483648
    %v3825 = vsel %vm3823, %v3818, %v3824
    %vm3826 = vcmp.eq.s32.totalorder %v3821, 2
    %v3827 = vxor.u32 %v3818, 2147483648
    %v3828 = vsel %vm3826, %v3827, %v3819
    %v3829 = vsel %vm3822, %v3825, %v3828
    %v3830 = vsel %vm3820, nan, %v3829
    %v3831 = vand.u32 2147483647, %v3727
    %vm3832 = vcmp.le.f32.partialorder %v3831, 0.7853982
    %vm3833 = vcmp.lt.s32.totalorder %v3727, 0
    %v3834 = vand.u32 %v3727, 2139095040
    %v3835 = vshrl.u32 %v3834, 23
    %v3836 = vsub.s32 %v3835, 127
    %v3837 = vand.u32 2147483647, %v3727
    %v3838 = vand.u32 %v3837, 8388607
    %v3839 = vor.u32 %v3838, 8388608
    %v3840 = vsub.s32 0, %v3839
    %v3841 = vadd.s32 %v3836, 1
    %vm3842 = vcmp.gt.s32.totalorder %v3841, 0
    %v3843 = vsel %vm3842, %v3841, 0
    %v3844 = vshrl.u32 %v3843, 5
    %v3845 = vand.u32 %v3843, 31
    %v3846 = vsub.s32 32, %v3845
    %v3847 = vshrl.u32 683565275, %v3846
    %v3848 = vshll.u32 683565275, %v3845
    %v3849 = vshrl.u32 2475754826, %v3846
    %v3850 = vor.u32 %v3848, %v3849
    %v3851 = vshll.u32 2475754826, %v3845
    %v3852 = vshrl.u32 2131351028, %v3846
    %v3853 = vor.u32 %v3851, %v3852
    %v3854 = vshll.u32 2131351028, %v3845
    %v3855 = vshrl.u32 2102212464, %v3846
    %v3856 = vor.u32 %v3854, %v3855
    %v3857 = vshll.u32 2102212464, %v3845
    %v3858 = vshrl.u32 920167782, %v3846
    %v3859 = vor.u32 %v3857, %v3858
    %v3860 = vshll.u32 920167782, %v3845
    %v3861 = vshrl.u32 1326507024, %v3846
    %v3862 = vor.u32 %v3860, %v3861
    %vm3863 = vcmp.lt.s32.totalorder %v3844, 1
    %vm3864 = vcmp.lt.s32.totalorder %v3844, 2
    %vm3865 = vcmp.lt.s32.totalorder %v3844, 3
    %vm3866 = vcmp.lt.s32.totalorder %v3844, 4
    %v3867 = vsel %vm3863, %v3847, %v3850
    %v3868 = vsel %vm3866, %v3856, 2102212464
    %v3869 = vsel %vm3865, %v3853, %v3868
    %v3870 = vsel %vm3864, %v3867, %v3869
    %v3871 = vsel %vm3863, %v3850, %v3853
    %v3872 = vsel %vm3866, %v3859, 920167782
    %v3873 = vsel %vm3865, %v3856, %v3872
    %v3874 = vsel %vm3864, %v3871, %v3873
    %v3875 = vsel %vm3863, %v3853, %v3856
    %v3876 = vsel %vm3866, %v3862, 1326507024
    %v3877 = vsel %vm3865, %v3859, %v3876
    %v3878 = vsel %vm3864, %v3875, %v3877
    %v3879 = vshll.u32 %v3839, 8
    %v3880 = vmul.u32.u64.compose %v3879, %v3878
    %v3881 = vextract.low.u32 %v3880
    %v3882 = vextract.high.u32 %v3880
    %v3883 = vmul.u32.u64.compose %v3879, %v3874
    %v3884 = vextract.low.u32 %v3883
    %v3885 = vextract.high.u32 %v3883
    %v3886 = vmul.u32 %v3879, %v3870
    %v3887 = vadd.s32 %v3882, %v3884
    %vm3888 = vc.u32 %v3882, %v3884
    %v3889 = vadd.s32 %v3885, 1
    %v3890 = vsel %vm3888, %v3889, %v3885
    %v3891 = vadd.s32 %v3886, %v3890
    %v3892 = vadd.s32 %v3891, 536870912
    %v3893 = vshrl.u32 %v3892, 30
    %v3894 = vshll.u32 %v3893, 30
    %v3895 = vsub.s32 %v3891, %v3894
    %vm3896 = vcmp.lt.s32.totalorder %v3895, 0
    %v3897 = vsub.s32 0, %v3895
    %v3898 = vsel %vm3896, %v3897, %v3895
    %v3899 = vclz %v3898
    %v3900 = vsub.s32 %v3899, 2
    %vm3901 = vcmp.gt.s32.totalorder 0, %v3900
    %v3902 = vsel %vm3901, 0, %v3900
    %v3903 = vsub.s32 32, %v3902
    %v3904 = vshll.u32 %v3895, %v3902
    %v3905 = vshrl.u32 %v3887, %v3903
    %v3906 = vor.u32 %v3904, %v3905
    %v3907 = vsub.s32 4294967266, %v3902
    %v3908 = vadd.s32 %v3907, 127
    %v3909 = vshll.u32 %v3908, 23
    %v3910 = vor.u32 4788187, %v3909
    %v3911 = vand.u32 2147483647, %v3910
    %v3913 = vcvt.s32.f32 %v3906
    %v3914 = vmul.f32 %v3913, %v3911
    %v3915 = vxor.u32 %v3914, 2147483648
    %v3916 = vsel %vm3833, %v3915, %v3914
    %v3917 = vsub.s32 4, %v3893
    %v3918 = vsel %vm3833, %v3917, %v3893
    %v3919 = vsel %vm3832, %v3727, %v3916
    %v3920 = vsel %vm3832, 0, %v3918
    %v3921 = vcosq.f32.pop %v3919
    %v3922 = vsinq.f32.pop %v3919
    %vm3923 = vweird.f32 %v3727
    %v3924 = vadd.s32 %v3920, 3
    %v3925 = vand.u32 %v3924, 3
    %vm3926 = vcmp.lt.s32.totalorder %v3925, 2
    %vm3927 = vcmp.eq.s32.totalorder %v3925, 0
    %v3928 = vxor.u32 %v3922, 2147483648
    %v3929 = vsel %vm3927, %v3921, %v3928
    %vm3930 = vcmp.eq.s32.totalorder %v3925, 2
    %v3931 = vxor.u32 %v3921, 2147483648
    %v3932 = vsel %vm3930, %v3931, %v3922
    %v3933 = vsel %vm3926, %v3929, %v3932
    %v3934 = vsel %vm3923, nan, %v3933
    %v3935 = vmul.f32 %v3830, 2.0
    %v3936 = vmul.f32 %v3935, %v3830
    %v3937 = vsub.f32 %v3936, 1.0
    %v3938 = vmul.f32 %v3934, 2.0
    %v3939 = vmul.f32 %v3938, %v3830
    %v3940 = vmul.f32 %v3830, %v20
    %v3941 = vadd.f32 %v18, %v3940
    %v3942 = vmul.f32 %v3937, %v22
    %v3943 = vadd.f32 %v3941, %v3942
    %v3944 = vmul.f32 %v3934, %v24
    %v3945 = vadd.f32 %v3943, %v3944
    %v3946 = vmul.f32 %v3939, %v26
    %v3947 = vadd.f32 %v3945, %v3946
    %v3948 = vmul.f32 %v3830, %v30
    %v3949 = vadd.f32 %v28, %v3948
    %v3950 = vmul.f32 %v3937, %v32
    %v3951 = vadd.f32 %v3949, %v3950
    %v3952 = vmul.f32 %v3934, %v34
    %v3953 = vadd.f32 %v3951, %v3952
    %v3954 = vmul.f32 %v3939, %v36
    %v3955 = vadd.f32 %v3953, %v3954
    %s3956 = scalar_lea.vmem %s0, 128
    %v3957 = vld [vmem:[%s3956] sm:$0x7f]
    %v3958 = vand.u32 2147483647, %v3957
    %vm3959 = vcmp.le.f32.partialorder %v3958, 0.7853982
    %vm3960 = vcmp.lt.s32.totalorder %v3957, 0
    %v3961 = vand.u32 %v3957, 2139095040
    %v3962 = vshrl.u32 %v3961, 23
    %v3963 = vsub.s32 %v3962, 127
    %v3964 = vand.u32 2147483647, %v3957
    %v3965 = vand.u32 %v3964, 8388607
    %v3966 = vor.u32 %v3965, 8388608
    %v3967 = vsub.s32 0, %v3966
    %v3968 = vadd.s32 %v3963, 1
    %vm3969 = vcmp.gt.s32.totalorder %v3968, 0
    %v3970 = vsel %vm3969, %v3968, 0
    %v3971 = vshrl.u32 %v3970, 5
    %v3972 = vand.u32 %v3970, 31
    %v3973 = vsub.s32 32, %v3972
    %v3974 = vshrl.u32 683565275, %v3973
    %v3975 = vshll.u32 683565275, %v3972
    %v3976 = vshrl.u32 2475754826, %v3973
    %v3977 = vor.u32 %v3975, %v3976
    %v3978 = vshll.u32 2475754826, %v3972
    %v3979 = vshrl.u32 2131351028, %v3973
    %v3980 = vor.u32 %v3978, %v3979
    %v3981 = vshll.u32 2131351028, %v3972
    %v3982 = vshrl.u32 2102212464, %v3973
    %v3983 = vor.u32 %v3981, %v3982
    %v3984 = vshll.u32 2102212464, %v3972
    %v3985 = vshrl.u32 920167782, %v3973
    %v3986 = vor.u32 %v3984, %v3985
    %v3987 = vshll.u32 920167782, %v3972
    %v3988 = vshrl.u32 1326507024, %v3973
    %v3989 = vor.u32 %v3987, %v3988
    %vm3990 = vcmp.lt.s32.totalorder %v3971, 1
    %vm3991 = vcmp.lt.s32.totalorder %v3971, 2
    %vm3992 = vcmp.lt.s32.totalorder %v3971, 3
    %vm3993 = vcmp.lt.s32.totalorder %v3971, 4
    %v3994 = vsel %vm3990, %v3974, %v3977
    %v3995 = vsel %vm3993, %v3983, 2102212464
    %v3996 = vsel %vm3992, %v3980, %v3995
    %v3997 = vsel %vm3991, %v3994, %v3996
    %v3998 = vsel %vm3990, %v3977, %v3980
    %v3999 = vsel %vm3993, %v3986, 920167782
    %v4000 = vsel %vm3992, %v3983, %v3999
    %v4001 = vsel %vm3991, %v3998, %v4000
    %v4002 = vsel %vm3990, %v3980, %v3983
    %v4003 = vsel %vm3993, %v3989, 1326507024
    %v4004 = vsel %vm3992, %v3986, %v4003
    %v4005 = vsel %vm3991, %v4002, %v4004
    %v4006 = vshll.u32 %v3966, 8
    %v4007 = vmul.u32.u64.compose %v4006, %v4005
    %v4008 = vextract.low.u32 %v4007
    %v4009 = vextract.high.u32 %v4007
    %v4010 = vmul.u32.u64.compose %v4006, %v4001
    %v4011 = vextract.low.u32 %v4010
    %v4012 = vextract.high.u32 %v4010
    %v4013 = vmul.u32 %v4006, %v3997
    %v4014 = vadd.s32 %v4009, %v4011
    %vm4015 = vc.u32 %v4009, %v4011
    %v4016 = vadd.s32 %v4012, 1
    %v4017 = vsel %vm4015, %v4016, %v4012
    %v4018 = vadd.s32 %v4013, %v4017
    %v4019 = vadd.s32 %v4018, 536870912
    %v4020 = vshrl.u32 %v4019, 30
    %v4021 = vshll.u32 %v4020, 30
    %v4022 = vsub.s32 %v4018, %v4021
    %vm4023 = vcmp.lt.s32.totalorder %v4022, 0
    %v4024 = vsub.s32 0, %v4022
    %v4025 = vsel %vm4023, %v4024, %v4022
    %v4026 = vclz %v4025
    %v4027 = vsub.s32 %v4026, 2
    %vm4028 = vcmp.gt.s32.totalorder 0, %v4027
    %v4029 = vsel %vm4028, 0, %v4027
    %v4030 = vsub.s32 32, %v4029
    %v4031 = vshll.u32 %v4022, %v4029
    %v4032 = vshrl.u32 %v4014, %v4030
    %v4033 = vor.u32 %v4031, %v4032
    %v4034 = vsub.s32 4294967266, %v4029
    %v4035 = vadd.s32 %v4034, 127
    %v4036 = vshll.u32 %v4035, 23
    %v4037 = vor.u32 4788187, %v4036
    %v4038 = vand.u32 2147483647, %v4037
    %v4040 = vcvt.s32.f32 %v4033
    %v4041 = vmul.f32 %v4040, %v4038
    %v4042 = vxor.u32 %v4041, 2147483648
    %v4043 = vsel %vm3960, %v4042, %v4041
    %v4044 = vsub.s32 4, %v4020
    %v4045 = vsel %vm3960, %v4044, %v4020
    %v4046 = vsel %vm3959, %v3957, %v4043
    %v4047 = vsel %vm3959, 0, %v4045
    %v4048 = vcosq.f32.pop %v4046
    %v4049 = vsinq.f32.pop %v4046
    %vm4050 = vweird.f32 %v3957
    %v4051 = vand.u32 %v4047, 3
    %vm4052 = vcmp.lt.s32.totalorder %v4051, 2
    %vm4053 = vcmp.eq.s32.totalorder %v4051, 0
    %v4054 = vxor.u32 %v4049, 2147483648
    %v4055 = vsel %vm4053, %v4048, %v4054
    %vm4056 = vcmp.eq.s32.totalorder %v4051, 2
    %v4057 = vxor.u32 %v4048, 2147483648
    %v4058 = vsel %vm4056, %v4057, %v4049
    %v4059 = vsel %vm4052, %v4055, %v4058
    %v4060 = vsel %vm4050, nan, %v4059
    %v4061 = vand.u32 2147483647, %v3957
    %vm4062 = vcmp.le.f32.partialorder %v4061, 0.7853982
    %vm4063 = vcmp.lt.s32.totalorder %v3957, 0
    %v4064 = vand.u32 %v3957, 2139095040
    %v4065 = vshrl.u32 %v4064, 23
    %v4066 = vsub.s32 %v4065, 127
    %v4067 = vand.u32 2147483647, %v3957
    %v4068 = vand.u32 %v4067, 8388607
    %v4069 = vor.u32 %v4068, 8388608
    %v4070 = vsub.s32 0, %v4069
    %v4071 = vadd.s32 %v4066, 1
    %vm4072 = vcmp.gt.s32.totalorder %v4071, 0
    %v4073 = vsel %vm4072, %v4071, 0
    %v4074 = vshrl.u32 %v4073, 5
    %v4075 = vand.u32 %v4073, 31
    %v4076 = vsub.s32 32, %v4075
    %v4077 = vshrl.u32 683565275, %v4076
    %v4078 = vshll.u32 683565275, %v4075
    %v4079 = vshrl.u32 2475754826, %v4076
    %v4080 = vor.u32 %v4078, %v4079
    %v4081 = vshll.u32 2475754826, %v4075
    %v4082 = vshrl.u32 2131351028, %v4076
    %v4083 = vor.u32 %v4081, %v4082
    %v4084 = vshll.u32 2131351028, %v4075
    %v4085 = vshrl.u32 2102212464, %v4076
    %v4086 = vor.u32 %v4084, %v4085
    %v4087 = vshll.u32 2102212464, %v4075
    %v4088 = vshrl.u32 920167782, %v4076
    %v4089 = vor.u32 %v4087, %v4088
    %v4090 = vshll.u32 920167782, %v4075
    %v4091 = vshrl.u32 1326507024, %v4076
    %v4092 = vor.u32 %v4090, %v4091
    %vm4093 = vcmp.lt.s32.totalorder %v4074, 1
    %vm4094 = vcmp.lt.s32.totalorder %v4074, 2
    %vm4095 = vcmp.lt.s32.totalorder %v4074, 3
    %vm4096 = vcmp.lt.s32.totalorder %v4074, 4
    %v4097 = vsel %vm4093, %v4077, %v4080
    %v4098 = vsel %vm4096, %v4086, 2102212464
    %v4099 = vsel %vm4095, %v4083, %v4098
    %v4100 = vsel %vm4094, %v4097, %v4099
    %v4101 = vsel %vm4093, %v4080, %v4083
    %v4102 = vsel %vm4096, %v4089, 920167782
    %v4103 = vsel %vm4095, %v4086, %v4102
    %v4104 = vsel %vm4094, %v4101, %v4103
    %v4105 = vsel %vm4093, %v4083, %v4086
    %v4106 = vsel %vm4096, %v4092, 1326507024
    %v4107 = vsel %vm4095, %v4089, %v4106
    %v4108 = vsel %vm4094, %v4105, %v4107
    %v4109 = vshll.u32 %v4069, 8
    %v4110 = vmul.u32.u64.compose %v4109, %v4108
    %v4111 = vextract.low.u32 %v4110
    %v4112 = vextract.high.u32 %v4110
    %v4113 = vmul.u32.u64.compose %v4109, %v4104
    %v4114 = vextract.low.u32 %v4113
    %v4115 = vextract.high.u32 %v4113
    %v4116 = vmul.u32 %v4109, %v4100
    %v4117 = vadd.s32 %v4112, %v4114
    %vm4118 = vc.u32 %v4112, %v4114
    %v4119 = vadd.s32 %v4115, 1
    %v4120 = vsel %vm4118, %v4119, %v4115
    %v4121 = vadd.s32 %v4116, %v4120
    %v4122 = vadd.s32 %v4121, 536870912
    %v4123 = vshrl.u32 %v4122, 30
    %v4124 = vshll.u32 %v4123, 30
    %v4125 = vsub.s32 %v4121, %v4124
    %vm4126 = vcmp.lt.s32.totalorder %v4125, 0
    %v4127 = vsub.s32 0, %v4125
    %v4128 = vsel %vm4126, %v4127, %v4125
    %v4129 = vclz %v4128
    %v4130 = vsub.s32 %v4129, 2
    %vm4131 = vcmp.gt.s32.totalorder 0, %v4130
    %v4132 = vsel %vm4131, 0, %v4130
    %v4133 = vsub.s32 32, %v4132
    %v4134 = vshll.u32 %v4125, %v4132
    %v4135 = vshrl.u32 %v4117, %v4133
    %v4136 = vor.u32 %v4134, %v4135
    %v4137 = vsub.s32 4294967266, %v4132
    %v4138 = vadd.s32 %v4137, 127
    %v4139 = vshll.u32 %v4138, 23
    %v4140 = vor.u32 4788187, %v4139
    %v4141 = vand.u32 2147483647, %v4140
    %v4143 = vcvt.s32.f32 %v4136
    %v4144 = vmul.f32 %v4143, %v4141
    %v4145 = vxor.u32 %v4144, 2147483648
    %v4146 = vsel %vm4063, %v4145, %v4144
    %v4147 = vsub.s32 4, %v4123
    %v4148 = vsel %vm4063, %v4147, %v4123
    %v4149 = vsel %vm4062, %v3957, %v4146
    %v4150 = vsel %vm4062, 0, %v4148
    %v4151 = vcosq.f32.pop %v4149
    %v4152 = vsinq.f32.pop %v4149
    %vm4153 = vweird.f32 %v3957
    %v4154 = vadd.s32 %v4150, 3
    %v4155 = vand.u32 %v4154, 3
    %vm4156 = vcmp.lt.s32.totalorder %v4155, 2
    %vm4157 = vcmp.eq.s32.totalorder %v4155, 0
    %v4158 = vxor.u32 %v4152, 2147483648
    %v4159 = vsel %vm4157, %v4151, %v4158
    %vm4160 = vcmp.eq.s32.totalorder %v4155, 2
    %v4161 = vxor.u32 %v4151, 2147483648
    %v4162 = vsel %vm4160, %v4161, %v4152
    %v4163 = vsel %vm4156, %v4159, %v4162
    %v4164 = vsel %vm4153, nan, %v4163
    %v4165 = vmul.f32 %v4060, 2.0
    %v4166 = vmul.f32 %v4165, %v4060
    %v4167 = vsub.f32 %v4166, 1.0
    %v4168 = vmul.f32 %v4164, 2.0
    %v4169 = vmul.f32 %v4168, %v4060
    %v4170 = vmul.f32 %v4060, %v20
    %v4171 = vadd.f32 %v18, %v4170
    %v4172 = vmul.f32 %v4167, %v22
    %v4173 = vadd.f32 %v4171, %v4172
    %v4174 = vmul.f32 %v4164, %v24
    %v4175 = vadd.f32 %v4173, %v4174
    %v4176 = vmul.f32 %v4169, %v26
    %v4177 = vadd.f32 %v4175, %v4176
    %v4178 = vmul.f32 %v4060, %v30
    %v4179 = vadd.f32 %v28, %v4178
    %v4180 = vmul.f32 %v4167, %v32
    %v4181 = vadd.f32 %v4179, %v4180
    %v4182 = vmul.f32 %v4164, %v34
    %v4183 = vadd.f32 %v4181, %v4182
    %v4184 = vmul.f32 %v4169, %v36
    %v4185 = vadd.f32 %v4183, %v4184
    %v4186 = vmul.f32 %v38, %v3683
    %v4187 = vmul.f32 %v3947, %v4186
    %v4188 = vadd.f32 %v3947, %v4187
    %v4189 = vmul.f32 %v38, %v3691
    %v4190 = vmul.f32 %v3947, %v4189
    %v4191 = vadd.f32 %v4190, %v3955
    %v4192 = vmul.f32 %v38, %v4188
    %v4193 = vmul.f32 %v3947, %v4192
    %v4194 = vadd.f32 %v3947, %v4193
    %v4195 = vmul.f32 %v38, %v4191
    %v4196 = vmul.f32 %v3947, %v4195
    %v4197 = vadd.f32 %v4196, %v3955
    %v4198 = vmul.f32 %v37, %v4194
    %v4199 = vmul.f32 %v4177, %v4198
    %v4200 = vadd.f32 %v4177, %v4199
    %v4201 = vmul.f32 %v37, %v4197
    %v4202 = vmul.f32 %v4177, %v4201
    %v4203 = vadd.f32 %v4202, %v4185
    %v4204 = vmul.f32 %v4188, 2.0
    %v4205 = vadd.f32 %v3683, %v4204
    %v4206 = vmul.f32 %v4194, 2.0
    %v4207 = vadd.f32 %v4205, %v4206
    %v4208 = vadd.f32 %v4207, %v4200
    %v4209 = vmul.f32 %v39, %v4208
    %v4210 = vadd.f32 %v4209, 1.0
    %v4211 = vmul.f32 %v4191, 2.0
    %v4212 = vadd.f32 %v3691, %v4211
    %v4213 = vmul.f32 %v4197, 2.0
    %v4214 = vadd.f32 %v4212, %v4213
    %v4215 = vadd.f32 %v4214, %v4203
    %v4216 = vmul.f32 %v39, %v4215
    %v4217 = vmul.f32 %v4210, %v3723
    %v4218 = vmul.f32 %v4210, %v3725
    %v4219 = vadd.f32 %v4218, %v4216
    %vm4220 = vcmask 63488
    %4221 = vst.msk [vmem:[#allocation2] sm:$0x7f] %vm4220, %v4217
    %4222 = vst.msk [vmem:[#allocation3] sm:$0x7f] %vm4220, %v4219
    %v4223 = vld [vmem:[%s3] sm:$0x1]
    %v4224 = vld [vmem:[#allocation2] sm:$0x1]
    %v4225 = vmul.f32 %v4224, %v4223
    %v4226 = vld [vmem:[#allocation3] sm:$0x1]
    %v4227 = vadd.f32 %v4225, %v4226
    %v4228 = vld [vmem:[#allocation2 + $0x1] sm:$0x1]
    %v4229 = vmul.f32 %v4228, %v4227
    %v4230 = vld [vmem:[#allocation3 + $0x1] sm:$0x1]
    %v4231 = vadd.f32 %v4229, %v4230
    %v4232 = vld [vmem:[#allocation2 + $0x2] sm:$0x1]
    %v4233 = vmul.f32 %v4232, %v4231
    %v4234 = vld [vmem:[#allocation3 + $0x2] sm:$0x1]
    %v4235 = vadd.f32 %v4233, %v4234
    %v4236 = vld [vmem:[#allocation2 + $0x3] sm:$0x1]
    %v4237 = vmul.f32 %v4236, %v4235
    %v4238 = vld [vmem:[#allocation3 + $0x3] sm:$0x1]
    %v4239 = vadd.f32 %v4237, %v4238
    %v4240 = vld [vmem:[#allocation2 + $0x4] sm:$0x1]
    %v4241 = vmul.f32 %v4240, %v4239
    %v4242 = vld [vmem:[#allocation3 + $0x4] sm:$0x1]
    %v4243 = vadd.f32 %v4241, %v4242
    %v4244 = vld [vmem:[#allocation2 + $0x5] sm:$0x1]
    %v4245 = vmul.f32 %v4244, %v4243
    %v4246 = vld [vmem:[#allocation3 + $0x5] sm:$0x1]
    %v4247 = vadd.f32 %v4245, %v4246
    %v4248 = vld [vmem:[#allocation2 + $0x6] sm:$0x1]
    %v4249 = vmul.f32 %v4248, %v4247
    %v4250 = vld [vmem:[#allocation3 + $0x6] sm:$0x1]
    %v4251 = vadd.f32 %v4249, %v4250
    %v4253 = vrot.slane %v4227, 7
    %v4256 = vrot.slane %v4231, 6
    %v4259 = vrot.slane %v4235, 5
    %v4262 = vrot.slane %v4239, 4
    %v4265 = vrot.slane %v4243, 3
    %v4268 = vrot.slane %v4247, 2
    %v4271 = vrot.slane %v4251, 1
    %vm4273 = vcmask 1040384
    %v4274 = vsel %vm4273, %v4223, %v4253
    %vm4275 = vcmask 1041408
    %v4276 = vsel %vm4275, %v4274, %v4256
    %vm4277 = vcmask 1042432
    %v4278 = vsel %vm4277, %v4276, %v4259
    %vm4279 = vcmask 1043456
    %v4280 = vsel %vm4279, %v4278, %v4262
    %vm4281 = vcmask 1044480
    %v4282 = vsel %vm4281, %v4280, %v4265
    %vm4283 = vcmask 1045504
    %v4284 = vsel %vm4283, %v4282, %v4268
    %vm4285 = vcmask 1046528
    %v4286 = vsel %vm4285, %v4284, %v4271
    %vm4287 = vcmask 64512
    %4288 = vst.msk [vmem:[#allocation4] sm:$0xff] %vm4287, %v4286
    // Predicated region
    $region18: #{tpu_custom_call.1} parent=1 // pred_check
      _
    $region19: #{tpu_custom_call.1} parent=1 // pred_check_branch
      %4290 = sbr.rel (0) target = $region21
    $region20: #{tpu_custom_call.1} parent=1 // pred_region
      %s4292 = ssub.s32 128, 128
      %4293 = vsyncadd [#allocation5], %s4292
      %s4295 = sshll.u32 [#allocation4], 4
      %s4296 = int_to_ptr.vmem [resolvable:$true] %s4295
      %4298 = dma.vmem_to_hbm [thread:$0]  %s4296, 128, %s4, [#allocation5]
    $region21: #{tpu_custom_call.1} parent=1 // pred_fallthru
      _
    // Predicated region
    $region22: #{tpu_custom_call.1} parent=1 // pred_check
      _
    $region23: #{tpu_custom_call.1} parent=1 // pred_check_branch
      %4300 = sbr.rel (0) target = $region25
    $region24: #{tpu_custom_call.1} parent=1 // pred_region
      %4301 = dma.done [#allocation5], 128
    $region25: #{tpu_custom_call.1} parent=1 // pred_fallthru
      _
    %4302 = vsyncpa [#allocation5], 1

</llo_original>
